<compile_context>
chip_gen: v6e
topology: v6e:2x2x1
jax: 0.10.0
libtpu: 0.0.40
codegen_flags: <defaults>
</compile_context>

<pallas_src>
import functools

import jax
import jax.numpy as jnp
from jax import lax
from jax.experimental import pallas as pl
from jax.experimental.pallas import tpu as pltpu

EPS = 1e-5        # PyTorch BatchNorm default eps
FC_H = 100        # real fc1 width
FC_PAD = 128      # lane-padded fc1 width


# ---------------------------------------------------------------------------
# Quantization helpers
# ---------------------------------------------------------------------------

def _quant_from_minmax(x, mn, mx, levels):
    """Uniform min-max quantization given (broadcastable) min/max.

    The divide happens only on the tiny min/max tensor; the large activation tensor
    sees a single broadcast multiply.
    """
    scale = (mx - mn) * (1.0 / levels)
    safe = jnp.where(scale == 0.0, 1.0, scale)
    inv = 1.0 / safe
    return jnp.round((x - mn) * inv) * scale + mn


def _quant_per_tensor(w, levels):
    """quantize(w, bit, batch=False): per-tensor min-max quantization (host-side prep)."""
    mn = jnp.min(w)
    mx = jnp.max(w)
    return _quant_from_minmax(w, mn, mx, levels)


def _per_sample_minmax_3d(x):
    """min/max per sample over the last two dims of (n, H, W) -> (n,1,1)."""
    mn = jnp.min(jnp.min(x, axis=2, keepdims=True), axis=1, keepdims=True)
    mx = jnp.max(jnp.max(x, axis=2, keepdims=True), axis=1, keepdims=True)
    return mn, mx


def _full_mean_var_3d(y):
    """Mean/variance (biased) over ALL elements of a 3-D array -> (1,1,1) each."""
    cnt = float(y.shape[0] * y.shape[1] * y.shape[2])
    s = jnp.sum(jnp.sum(jnp.sum(y, axis=2, keepdims=True), axis=1, keepdims=True),
                axis=0, keepdims=True)
    mu = s * (1.0 / cnt)
    d = y - mu
    s2 = jnp.sum(jnp.sum(jnp.sum(d * d, axis=2, keepdims=True), axis=1, keepdims=True),
                 axis=0, keepdims=True)
    return mu, s2 * (1.0 / cnt)


# ---------------------------------------------------------------------------
# The single fused forward kernel
# ---------------------------------------------------------------------------

def _fused_forward_kernel(x_ref, w1_ref, b1_ref, w2_ref, b2_ref,
                          wl1_ref, bl1_ref, wl2_ref, bl2_ref, o_ref,
                          *, la, lb, lc):
    n = x_ref.shape[0]
    K = 3
    H1 = W1 = 28
    HO1 = WO1 = H1 - K + 1          # 26
    HO2 = WO2 = HO1 - K + 1         # 24
    C1 = 3                          # conv1 output channels

    # ---- conv block 1: quantize(x, a, batch=True) -> conv(1->3, 3x3) -> BN2d -> ReLU ----
    x = x_ref[...]                                              # (n, 28, 28)
    mn, mx = _per_sample_minmax_3d(x)
    xq = _quant_from_minmax(x, mn, mx, la)

    w1q = w1_ref[...]                                           # (9, 3) pre-quantized [tap, cout]
    b1 = b1_ref[...]                                            # (1, 3)

    # VPU shifted-slice multiply-accumulate (no im2col materialization, no MXU).
    y1 = [jnp.zeros((n, HO1, WO1), jnp.float32) for _ in range(C1)]
    for kh in range(K):
        for kw in range(K):
            t = kh * K + kw
            xs = xq[:, kh:kh + HO1, kw:kw + WO1]                # (n, 26, 26)
            for co in range(C1):
                y1[co] = y1[co] + xs * w1q[t:t + 1, co:co + 1]
    for co in range(C1):
        yc = y1[co] + b1[0:1, co:co + 1]
        mu, var = _full_mean_var_3d(yc)                         # per-channel batch stats
        y1[co] = jnp.maximum((yc - mu) * lax.rsqrt(var + EPS), 0.0)

    # ---- conv block 2: quantize(y1, b, batch=True over C,H,W) -> conv(3->1) -> BN2d -> ReLU ----
    mns = [_per_sample_minmax_3d(c)[0] for c in y1]
    mxs = [_per_sample_minmax_3d(c)[1] for c in y1]
    mn2 = jnp.minimum(jnp.minimum(mns[0], mns[1]), mns[2])      # (n,1,1)
    mx2 = jnp.maximum(jnp.maximum(mxs[0], mxs[1]), mxs[2])
    y1q = [_quant_from_minmax(c, mn2, mx2, lb) for c in y1]

    w2q = w2_ref[...]                                           # (9, 3) pre-quantized [tap, cin]
    acc2 = jnp.zeros((n, HO2, WO2), jnp.float32)
    for kh in range(K):
        for kw in range(K):
            t = kh * K + kw
            for ci in range(C1):
                acc2 = acc2 + y1q[ci][:, kh:kh + HO2, kw:kw + WO2] * w2q[t:t + 1, ci:ci + 1]
    y2 = acc2 + b2_ref[...]                                     # (1,1) broadcast
    mu2, var2 = _full_mean_var_3d(y2)                           # single channel
    y2 = jnp.maximum((y2 - mu2) * lax.rsqrt(var2 + EPS), 0.0)

    # ---- fc block: quantize -> Linear(576, 128pad) -> BN1d -> ReLU -> Linear(128pad, 10) ----
    flat = y2.reshape(n, HO2 * WO2)                             # (n, 576) == PyTorch .view()
    mnf = jnp.min(flat, axis=1, keepdims=True)
    mxf = jnp.max(flat, axis=1, keepdims=True)
    fq = _quant_from_minmax(flat, mnf, mxf, lc)

    # bf16 operands into the MXU, f32 accumulation (elementwise math stays f32).
    h = jnp.dot(fq.astype(jnp.bfloat16), wl1_ref[...].astype(jnp.bfloat16),
                preferred_element_type=jnp.float32) + bl1_ref[...]
    muh = jnp.mean(h, axis=0, keepdims=True)                    # BN1d batch stats
    varh = jnp.mean((h - muh) ** 2, axis=0, keepdims=True)
    h = jnp.maximum((h - muh) * lax.rsqrt(varh + EPS), 0.0)

    # Final (unquantized) Linear(100 -> 10); padded rows of wl2 are zero, so the 28
    # padding columns of h contribute nothing.
    o_ref[...] = jnp.dot(h, wl2_ref[...], preferred_element_type=jnp.float32) + bl2_ref[...]


# ---------------------------------------------------------------------------
# One-time parameter layout prep + weight quantization (hoisted out of the hot path)
# ---------------------------------------------------------------------------

def prepare_params(params, hyperparam):
    a, b, c = hyperparam
    la, lb, lc = float(2 ** a - 1), float(2 ** b - 1), float(2 ** c - 1)

    # Per-tensor weight quantization (input-independent; weights are constant per call).
    w1q = _quant_per_tensor(params["conv1_w"], la)              # (3,1,3,3)
    w2q = _quant_per_tensor(params["conv2_w"], lb)              # (1,3,3,3)
    wl1q = _quant_per_tensor(params["fc1_w"], lc)               # (100, 576)

    # conv weights -> (kh*3+kw, channel) matrices
    w1 = jnp.transpose(w1q, (2, 3, 1, 0)).reshape(9, 3)         # [tap, cout]
    w2 = jnp.transpose(w2q, (2, 3, 1, 0)).reshape(9, 3)         # [tap, cin]

    # fc1: transpose to (576, 100), zero-pad to 128 lanes (quantization already done, so
    # padding cannot perturb the quantization grid; padded h columns stay exactly zero).
    wl1 = jnp.pad(jnp.transpose(wl1q), ((0, 0), (0, FC_PAD - FC_H)))       # (576, 128)
    bl1 = jnp.pad(params["fc1_b"], (0, FC_PAD - FC_H)).reshape(1, FC_PAD)
    # fc2: transpose to (100, 10), zero-pad rows to 128 (kills the padded h columns).
    wl2 = jnp.pad(jnp.transpose(params["fc2_w"]), ((0, FC_PAD - FC_H), (0, 0)))  # (128, 10)

    return {
        "w1": w1, "b1": params["conv1_b"].reshape(1, 3),
        "w2": w2, "b2": params["conv2_b"].reshape(1, 1),
        "wl1": wl1, "bl1": bl1,
        "wl2": wl2, "bl2": params["fc2_b"].reshape(1, 10),
    }


# ---------------------------------------------------------------------------
# Forward pass wrapper: single pallas_call, everything resident in VMEM
# ---------------------------------------------------------------------------

@functools.partial(jax.jit, static_argnums=(2,))
def mytemplate_forward(x_nchw, prep, hyperparam):
    a, b, c = hyperparam
    la, lb, lc = float(2 ** a - 1), float(2 ** b - 1), float(2 ** c - 1)
    n = x_nchw.shape[0]
    x = x_nchw.reshape(n, 28, 28).astype(jnp.float32)   # NCHW with C=1 -> (N, H, W)

    kernel = functools.partial(_fused_forward_kernel, la=la, lb=lb, lc=lc)
    vmem = pl.BlockSpec(memory_space=pltpu.MemorySpace.VMEM)
    return pl.pallas_call(
        kernel,
        out_shape=jax.ShapeDtypeStruct((n, 10), jnp.float32),
        in_specs=[vmem] * 9,
        out_specs=vmem,
        compiler_params=pltpu.CompilerParams(vmem_limit_bytes=32 * 1024 * 1024),
    )(x, prep["w1"], prep["b1"], prep["w2"], prep["b2"],
      prep["wl1"], prep["bl1"], prep["wl2"], prep["bl2"])


# ---------------------------------------------------------------------------
# Pure-JAX reference (mirrors the kernel's bf16-into-MXU mixed precision for the
# quantized fc1 matmul so the tolerance stays tight; everything else is f32).
# ---------------------------------------------------------------------------

def _ref_quant(x, bit, batch):
    levels = float(2 ** bit - 1)
    if batch:
        axes = tuple(range(1, x.ndim))
        mn = jnp.min(x, axis=axes, keepdims=True)
        mx = jnp.max(x, axis=axes, keepdims=True)
    else:
        mn, mx = jnp.min(x), jnp.max(x)
    s = (mx - mn) / levels
    ss = jnp.where(s == 0.0, 1.0, s)
    return jnp.round((x - mn) / ss) * s + mn


def _ref_bn(y, axes):
    mu = jnp.mean(y, axis=axes, keepdims=True)
    var = jnp.mean((y - mu) ** 2, axis=axes, keepdims=True)
    return (y - mu) * lax.rsqrt(var + EPS)


def reference_forward(x, params, hyperparam):
    a, b, c = hyperparam
    dn = ("NCHW", "OIHW", "NCHW")
    y = lax.conv_general_dilated(_ref_quant(x, a, True), _ref_quant(params["conv1_w"], a, False),
                                 (1, 1), "VALID", dimension_numbers=dn)
    y = y + params["conv1_b"][None, :, None, None]
    y = jnp.maximum(_ref_bn(y, (0, 2, 3)), 0.0)
    y = lax.conv_general_dilated(_ref_quant(y, b, True), _ref_quant(params["conv2_w"], b, False),
                                 (1, 1), "VALID", dimension_numbers=dn)
    y = y + params["conv2_b"][None, :, None, None]
    y = jnp.maximum(_ref_bn(y, (0, 2, 3)), 0.0)
    f = y.reshape(y.shape[0], -1)
    fq = _ref_quant(f, c, True).astype(jnp.bfloat16)
    wq = _ref_quant(params["fc1_w"], c, False).astype(jnp.bfloat16)
    h = jnp.dot(fq, wq.T, preferred_element_type=jnp.float32) + params["fc1_b"]
    h = jnp.maximum(_ref_bn(h, (0,)), 0.0)
    return jnp.dot(h, jnp.transpose(params["fc2_w"]),
                   preferred_element_type=jnp.float32) + params["fc2_b"]


# ---------------------------------------------------------------------------
# Main
# ---------------------------------------------------------------------------

if __name__ == "__main__":
    hyperparam = (2, 3, 4)  # (a, b, c) bit widths
    key = jax.random.PRNGKey(0)
    ks = jax.random.split(key, 9)

    params = {
        "conv1_w": jax.random.normal(ks[0], (3, 1, 3, 3), jnp.float32) * 0.5,
        "conv1_b": jax.random.normal(ks[1], (3,), jnp.float32) * 0.1,
        "conv2_w": jax.random.normal(ks[2], (1, 3, 3, 3), jnp.float32) * 0.5,
        "conv2_b": jax.random.normal(ks[3], (1,), jnp.float32) * 0.1,
        "fc1_w": jax.random.normal(ks[4], (100, 24 * 24), jnp.float32) * 0.05,
        "fc1_b": jax.random.normal(ks[5], (100,), jnp.float32) * 0.1,
        "fc2_w": jax.random.normal(ks[6], (10, 100), jnp.float32) * 0.1,
        "fc2_b": jax.random.normal(ks[7], (10,), jnp.float32) * 0.1,
    }
    x = jax.random.normal(ks[8], (2, 1, 28, 28), jnp.float32)

    prep = prepare_params(params, hyperparam)   # one-time layout + weight-quant prep
    out = mytemplate_forward(x, prep, hyperparam)
    out = jax.block_until_ready(out)
    assert out.shape == (2, 10) and out.dtype == jnp.float32

    ref = jax.block_until_ready(reference_forward(x, params, hyperparam))
    assert jnp.allclose(out, ref, atol=2e-2, rtol=2e-2), (out, ref)

    print("KERNEL_OK")
</pallas_src>

<mosaic_0001>
module attributes {stable_mosaic.version = 11 : i64} {
  func.func @_fused_forward_kernel(%arg0: memref<2x28x28xf32, #tpu.memory_space<vmem>>, %arg1: memref<9x3xf32, #tpu.memory_space<vmem>>, %arg2: memref<1x3xf32, #tpu.memory_space<vmem>>, %arg3: memref<9x3xf32, #tpu.memory_space<vmem>>, %arg4: memref<1x1xf32, #tpu.memory_space<vmem>>, %arg5: memref<576x128xf32, #tpu.memory_space<vmem>>, %arg6: memref<1x128xf32, #tpu.memory_space<vmem>>, %arg7: memref<128x10xf32, #tpu.memory_space<vmem>>, %arg8: memref<1x10xf32, #tpu.memory_space<vmem>>, %arg9: memref<2x10xf32, #tpu.memory_space<vmem>>) attributes {dimension_semantics = [], scalar_prefetch = 0 : i64, scratch_operands = 0 : i64, tpu.core_type = #tpu.core_type<tc>} {
    %c0 = arith.constant 0 : index
    %c0_0 = arith.constant 0 : index
    %c0_1 = arith.constant 0 : index
    %0 = vector.load %arg0[%c0, %c0_0, %c0_1] : memref<2x28x28xf32, #tpu.memory_space<vmem>>, vector<2x28x28xf32>
    %cst = arith.constant dense<0x7F800000> : vector<2x28xf32>
    %1 = vector.multi_reduction <minimumf>, %0, %cst [2] : vector<2x28x28xf32> to vector<2x28xf32>
    %2 = vector.shape_cast %1 : vector<2x28xf32> to vector<2x28x1xf32>
    %cst_2 = arith.constant dense<0x7F800000> : vector<2x1xf32>
    %3 = vector.multi_reduction <minimumf>, %2, %cst_2 [1] : vector<2x28x1xf32> to vector<2x1xf32>
    %4 = vector.shape_cast %3 : vector<2x1xf32> to vector<2x1x1xf32>
    %cst_3 = arith.constant dense<0xFF800000> : vector<2x28xf32>
    %5 = vector.multi_reduction <maximumf>, %0, %cst_3 [2] : vector<2x28x28xf32> to vector<2x28xf32>
    %6 = vector.shape_cast %5 : vector<2x28xf32> to vector<2x28x1xf32>
    %cst_4 = arith.constant dense<0xFF800000> : vector<2x1xf32>
    %7 = vector.multi_reduction <maximumf>, %6, %cst_4 [1] : vector<2x28x1xf32> to vector<2x1xf32>
    %8 = vector.shape_cast %7 : vector<2x1xf32> to vector<2x1x1xf32>
    %9 = arith.subf %8, %4 : vector<2x1x1xf32>
    %cst_5 = arith.constant 0.333333343 : f32
    %10 = vector.broadcast %cst_5 : f32 to vector<2x1x1xf32>
    %11 = arith.mulf %9, %10 : vector<2x1x1xf32>
    %cst_6 = arith.constant 0.000000e+00 : f32
    %12 = vector.broadcast %cst_6 : f32 to vector<2x1x1xf32>
    %13 = arith.cmpf oeq, %11, %12 : vector<2x1x1xf32>
    %cst_7 = arith.constant 1.000000e+00 : f32
    %14 = vector.broadcast %cst_7 : f32 to vector<2x1x1xf32>
    %15 = arith.select %13, %14, %11 : vector<2x1x1xi1>, vector<2x1x1xf32>
    %cst_8 = arith.constant 1.000000e+00 : f32
    %16 = vector.broadcast %cst_8 : f32 to vector<2x1x1xf32>
    %17 = arith.divf %16, %15 : vector<2x1x1xf32>
    %18 = vector.broadcast %4 : vector<2x1x1xf32> to vector<2x28x28xf32>
    %19 = arith.subf %0, %18 : vector<2x28x28xf32>
    %20 = vector.broadcast %17 : vector<2x1x1xf32> to vector<2x28x28xf32>
    %21 = arith.mulf %19, %20 : vector<2x28x28xf32>
    %22 = math.roundeven %21 : vector<2x28x28xf32>
    %23 = vector.broadcast %11 : vector<2x1x1xf32> to vector<2x28x28xf32>
    %24 = arith.mulf %22, %23 : vector<2x28x28xf32>
    %25 = vector.broadcast %4 : vector<2x1x1xf32> to vector<2x28x28xf32>
    %26 = arith.addf %24, %25 : vector<2x28x28xf32>
    %c0_9 = arith.constant 0 : index
    %c0_10 = arith.constant 0 : index
    %27 = vector.load %arg1[%c0_9, %c0_10] : memref<9x3xf32, #tpu.memory_space<vmem>>, vector<9x3xf32>
    %c0_11 = arith.constant 0 : index
    %c0_12 = arith.constant 0 : index
    %28 = vector.load %arg2[%c0_11, %c0_12] : memref<1x3xf32, #tpu.memory_space<vmem>>, vector<1x3xf32>
    %cst_13 = arith.constant 0.000000e+00 : f32
    %29 = vector.broadcast %cst_13 : f32 to vector<2x26x26xf32>
    %cst_14 = arith.constant 0.000000e+00 : f32
    %30 = vector.broadcast %cst_14 : f32 to vector<2x26x26xf32>
    %cst_15 = arith.constant 0.000000e+00 : f32
    %31 = vector.broadcast %cst_15 : f32 to vector<2x26x26xf32>
    %32 = vector.extract_strided_slice %26 {offsets = [0, 0, 0], sizes = [2, 26, 26], strides = [1, 1, 1]} : vector<2x28x28xf32> to vector<2x26x26xf32>
    %33 = vector.extract_strided_slice %27 {offsets = [0, 0], sizes = [1, 1], strides = [1, 1]} : vector<9x3xf32> to vector<1x1xf32>
    %34 = vector.shape_cast %33 : vector<1x1xf32> to vector<1x1x1xf32>
    %35 = vector.broadcast %34 : vector<1x1x1xf32> to vector<2x26x26xf32>
    %36 = arith.mulf %32, %35 : vector<2x26x26xf32>
    %37 = arith.addf %29, %36 : vector<2x26x26xf32>
    %38 = vector.extract_strided_slice %27 {offsets = [0, 1], sizes = [1, 1], strides = [1, 1]} : vector<9x3xf32> to vector<1x1xf32>
    %39 = vector.shape_cast %38 : vector<1x1xf32> to vector<1x1x1xf32>
    %40 = vector.broadcast %39 : vector<1x1x1xf32> to vector<2x26x26xf32>
    %41 = arith.mulf %32, %40 : vector<2x26x26xf32>
    %42 = arith.addf %30, %41 : vector<2x26x26xf32>
    %43 = vector.extract_strided_slice %27 {offsets = [0, 2], sizes = [1, 1], strides = [1, 1]} : vector<9x3xf32> to vector<1x1xf32>
    %44 = vector.shape_cast %43 : vector<1x1xf32> to vector<1x1x1xf32>
    %45 = vector.broadcast %44 : vector<1x1x1xf32> to vector<2x26x26xf32>
    %46 = arith.mulf %32, %45 : vector<2x26x26xf32>
    %47 = arith.addf %31, %46 : vector<2x26x26xf32>
    %48 = vector.extract_strided_slice %26 {offsets = [0, 0, 1], sizes = [2, 26, 26], strides = [1, 1, 1]} : vector<2x28x28xf32> to vector<2x26x26xf32>
    %49 = vector.extract_strided_slice %27 {offsets = [1, 0], sizes = [1, 1], strides = [1, 1]} : vector<9x3xf32> to vector<1x1xf32>
    %50 = vector.shape_cast %49 : vector<1x1xf32> to vector<1x1x1xf32>
    %51 = vector.broadcast %50 : vector<1x1x1xf32> to vector<2x26x26xf32>
    %52 = arith.mulf %48, %51 : vector<2x26x26xf32>
    %53 = arith.addf %37, %52 : vector<2x26x26xf32>
    %54 = vector.extract_strided_slice %27 {offsets = [1, 1], sizes = [1, 1], strides = [1, 1]} : vector<9x3xf32> to vector<1x1xf32>
    %55 = vector.shape_cast %54 : vector<1x1xf32> to vector<1x1x1xf32>
    %56 = vector.broadcast %55 : vector<1x1x1xf32> to vector<2x26x26xf32>
    %57 = arith.mulf %48, %56 : vector<2x26x26xf32>
    %58 = arith.addf %42, %57 : vector<2x26x26xf32>
    %59 = vector.extract_strided_slice %27 {offsets = [1, 2], sizes = [1, 1], strides = [1, 1]} : vector<9x3xf32> to vector<1x1xf32>
    %60 = vector.shape_cast %59 : vector<1x1xf32> to vector<1x1x1xf32>
    %61 = vector.broadcast %60 : vector<1x1x1xf32> to vector<2x26x26xf32>
    %62 = arith.mulf %48, %61 : vector<2x26x26xf32>
    %63 = arith.addf %47, %62 : vector<2x26x26xf32>
    %64 = vector.extract_strided_slice %26 {offsets = [0, 0, 2], sizes = [2, 26, 26], strides = [1, 1, 1]} : vector<2x28x28xf32> to vector<2x26x26xf32>
    %65 = vector.extract_strided_slice %27 {offsets = [2, 0], sizes = [1, 1], strides = [1, 1]} : vector<9x3xf32> to vector<1x1xf32>
    %66 = vector.shape_cast %65 : vector<1x1xf32> to vector<1x1x1xf32>
    %67 = vector.broadcast %66 : vector<1x1x1xf32> to vector<2x26x26xf32>
    %68 = arith.mulf %64, %67 : vector<2x26x26xf32>
    %69 = arith.addf %53, %68 : vector<2x26x26xf32>
    %70 = vector.extract_strided_slice %27 {offsets = [2, 1], sizes = [1, 1], strides = [1, 1]} : vector<9x3xf32> to vector<1x1xf32>
    %71 = vector.shape_cast %70 : vector<1x1xf32> to vector<1x1x1xf32>
    %72 = vector.broadcast %71 : vector<1x1x1xf32> to vector<2x26x26xf32>
    %73 = arith.mulf %64, %72 : vector<2x26x26xf32>
    %74 = arith.addf %58, %73 : vector<2x26x26xf32>
    %75 = vector.extract_strided_slice %27 {offsets = [2, 2], sizes = [1, 1], strides = [1, 1]} : vector<9x3xf32> to vector<1x1xf32>
    %76 = vector.shape_cast %75 : vector<1x1xf32> to vector<1x1x1xf32>
    %77 = vector.broadcast %76 : vector<1x1x1xf32> to vector<2x26x26xf32>
    %78 = arith.mulf %64, %77 : vector<2x26x26xf32>
    %79 = arith.addf %63, %78 : vector<2x26x26xf32>
    %80 = vector.extract_strided_slice %26 {offsets = [0, 1, 0], sizes = [2, 26, 26], strides = [1, 1, 1]} : vector<2x28x28xf32> to vector<2x26x26xf32>
    %81 = vector.extract_strided_slice %27 {offsets = [3, 0], sizes = [1, 1], strides = [1, 1]} : vector<9x3xf32> to vector<1x1xf32>
    %82 = vector.shape_cast %81 : vector<1x1xf32> to vector<1x1x1xf32>
    %83 = vector.broadcast %82 : vector<1x1x1xf32> to vector<2x26x26xf32>
    %84 = arith.mulf %80, %83 : vector<2x26x26xf32>
    %85 = arith.addf %69, %84 : vector<2x26x26xf32>
    %86 = vector.extract_strided_slice %27 {offsets = [3, 1], sizes = [1, 1], strides = [1, 1]} : vector<9x3xf32> to vector<1x1xf32>
    %87 = vector.shape_cast %86 : vector<1x1xf32> to vector<1x1x1xf32>
    %88 = vector.broadcast %87 : vector<1x1x1xf32> to vector<2x26x26xf32>
    %89 = arith.mulf %80, %88 : vector<2x26x26xf32>
    %90 = arith.addf %74, %89 : vector<2x26x26xf32>
    %91 = vector.extract_strided_slice %27 {offsets = [3, 2], sizes = [1, 1], strides = [1, 1]} : vector<9x3xf32> to vector<1x1xf32>
    %92 = vector.shape_cast %91 : vector<1x1xf32> to vector<1x1x1xf32>
    %93 = vector.broadcast %92 : vector<1x1x1xf32> to vector<2x26x26xf32>
    %94 = arith.mulf %80, %93 : vector<2x26x26xf32>
    %95 = arith.addf %79, %94 : vector<2x26x26xf32>
    %96 = vector.extract_strided_slice %26 {offsets = [0, 1, 1], sizes = [2, 26, 26], strides = [1, 1, 1]} : vector<2x28x28xf32> to vector<2x26x26xf32>
    %97 = vector.extract_strided_slice %27 {offsets = [4, 0], sizes = [1, 1], strides = [1, 1]} : vector<9x3xf32> to vector<1x1xf32>
    %98 = vector.shape_cast %97 : vector<1x1xf32> to vector<1x1x1xf32>
    %99 = vector.broadcast %98 : vector<1x1x1xf32> to vector<2x26x26xf32>
    %100 = arith.mulf %96, %99 : vector<2x26x26xf32>
    %101 = arith.addf %85, %100 : vector<2x26x26xf32>
    %102 = vector.extract_strided_slice %27 {offsets = [4, 1], sizes = [1, 1], strides = [1, 1]} : vector<9x3xf32> to vector<1x1xf32>
    %103 = vector.shape_cast %102 : vector<1x1xf32> to vector<1x1x1xf32>
    %104 = vector.broadcast %103 : vector<1x1x1xf32> to vector<2x26x26xf32>
    %105 = arith.mulf %96, %104 : vector<2x26x26xf32>
    %106 = arith.addf %90, %105 : vector<2x26x26xf32>
    %107 = vector.extract_strided_slice %27 {offsets = [4, 2], sizes = [1, 1], strides = [1, 1]} : vector<9x3xf32> to vector<1x1xf32>
    %108 = vector.shape_cast %107 : vector<1x1xf32> to vector<1x1x1xf32>
    %109 = vector.broadcast %108 : vector<1x1x1xf32> to vector<2x26x26xf32>
    %110 = arith.mulf %96, %109 : vector<2x26x26xf32>
    %111 = arith.addf %95, %110 : vector<2x26x26xf32>
    %112 = vector.extract_strided_slice %26 {offsets = [0, 1, 2], sizes = [2, 26, 26], strides = [1, 1, 1]} : vector<2x28x28xf32> to vector<2x26x26xf32>
    %113 = vector.extract_strided_slice %27 {offsets = [5, 0], sizes = [1, 1], strides = [1, 1]} : vector<9x3xf32> to vector<1x1xf32>
    %114 = vector.shape_cast %113 : vector<1x1xf32> to vector<1x1x1xf32>
    %115 = vector.broadcast %114 : vector<1x1x1xf32> to vector<2x26x26xf32>
    %116 = arith.mulf %112, %115 : vector<2x26x26xf32>
    %117 = arith.addf %101, %116 : vector<2x26x26xf32>
    %118 = vector.extract_strided_slice %27 {offsets = [5, 1], sizes = [1, 1], strides = [1, 1]} : vector<9x3xf32> to vector<1x1xf32>
    %119 = vector.shape_cast %118 : vector<1x1xf32> to vector<1x1x1xf32>
    %120 = vector.broadcast %119 : vector<1x1x1xf32> to vector<2x26x26xf32>
    %121 = arith.mulf %112, %120 : vector<2x26x26xf32>
    %122 = arith.addf %106, %121 : vector<2x26x26xf32>
    %123 = vector.extract_strided_slice %27 {offsets = [5, 2], sizes = [1, 1], strides = [1, 1]} : vector<9x3xf32> to vector<1x1xf32>
    %124 = vector.shape_cast %123 : vector<1x1xf32> to vector<1x1x1xf32>
    %125 = vector.broadcast %124 : vector<1x1x1xf32> to vector<2x26x26xf32>
    %126 = arith.mulf %112, %125 : vector<2x26x26xf32>
    %127 = arith.addf %111, %126 : vector<2x26x26xf32>
    %128 = vector.extract_strided_slice %26 {offsets = [0, 2, 0], sizes = [2, 26, 26], strides = [1, 1, 1]} : vector<2x28x28xf32> to vector<2x26x26xf32>
    %129 = vector.extract_strided_slice %27 {offsets = [6, 0], sizes = [1, 1], strides = [1, 1]} : vector<9x3xf32> to vector<1x1xf32>
    %130 = vector.shape_cast %129 : vector<1x1xf32> to vector<1x1x1xf32>
    %131 = vector.broadcast %130 : vector<1x1x1xf32> to vector<2x26x26xf32>
    %132 = arith.mulf %128, %131 : vector<2x26x26xf32>
    %133 = arith.addf %117, %132 : vector<2x26x26xf32>
    %134 = vector.extract_strided_slice %27 {offsets = [6, 1], sizes = [1, 1], strides = [1, 1]} : vector<9x3xf32> to vector<1x1xf32>
    %135 = vector.shape_cast %134 : vector<1x1xf32> to vector<1x1x1xf32>
    %136 = vector.broadcast %135 : vector<1x1x1xf32> to vector<2x26x26xf32>
    %137 = arith.mulf %128, %136 : vector<2x26x26xf32>
    %138 = arith.addf %122, %137 : vector<2x26x26xf32>
    %139 = vector.extract_strided_slice %27 {offsets = [6, 2], sizes = [1, 1], strides = [1, 1]} : vector<9x3xf32> to vector<1x1xf32>
    %140 = vector.shape_cast %139 : vector<1x1xf32> to vector<1x1x1xf32>
    %141 = vector.broadcast %140 : vector<1x1x1xf32> to vector<2x26x26xf32>
    %142 = arith.mulf %128, %141 : vector<2x26x26xf32>
    %143 = arith.addf %127, %142 : vector<2x26x26xf32>
    %144 = vector.extract_strided_slice %26 {offsets = [0, 2, 1], sizes = [2, 26, 26], strides = [1, 1, 1]} : vector<2x28x28xf32> to vector<2x26x26xf32>
    %145 = vector.extract_strided_slice %27 {offsets = [7, 0], sizes = [1, 1], strides = [1, 1]} : vector<9x3xf32> to vector<1x1xf32>
    %146 = vector.shape_cast %145 : vector<1x1xf32> to vector<1x1x1xf32>
    %147 = vector.broadcast %146 : vector<1x1x1xf32> to vector<2x26x26xf32>
    %148 = arith.mulf %144, %147 : vector<2x26x26xf32>
    %149 = arith.addf %133, %148 : vector<2x26x26xf32>
    %150 = vector.extract_strided_slice %27 {offsets = [7, 1], sizes = [1, 1], strides = [1, 1]} : vector<9x3xf32> to vector<1x1xf32>
    %151 = vector.shape_cast %150 : vector<1x1xf32> to vector<1x1x1xf32>
    %152 = vector.broadcast %151 : vector<1x1x1xf32> to vector<2x26x26xf32>
    %153 = arith.mulf %144, %152 : vector<2x26x26xf32>
    %154 = arith.addf %138, %153 : vector<2x26x26xf32>
    %155 = vector.extract_strided_slice %27 {offsets = [7, 2], sizes = [1, 1], strides = [1, 1]} : vector<9x3xf32> to vector<1x1xf32>
    %156 = vector.shape_cast %155 : vector<1x1xf32> to vector<1x1x1xf32>
    %157 = vector.broadcast %156 : vector<1x1x1xf32> to vector<2x26x26xf32>
    %158 = arith.mulf %144, %157 : vector<2x26x26xf32>
    %159 = arith.addf %143, %158 : vector<2x26x26xf32>
    %160 = vector.extract_strided_slice %26 {offsets = [0, 2, 2], sizes = [2, 26, 26], strides = [1, 1, 1]} : vector<2x28x28xf32> to vector<2x26x26xf32>
    %161 = vector.extract_strided_slice %27 {offsets = [8, 0], sizes = [1, 1], strides = [1, 1]} : vector<9x3xf32> to vector<1x1xf32>
    %162 = vector.shape_cast %161 : vector<1x1xf32> to vector<1x1x1xf32>
    %163 = vector.broadcast %162 : vector<1x1x1xf32> to vector<2x26x26xf32>
    %164 = arith.mulf %160, %163 : vector<2x26x26xf32>
    %165 = arith.addf %149, %164 : vector<2x26x26xf32>
    %166 = vector.extract_strided_slice %27 {offsets = [8, 1], sizes = [1, 1], strides = [1, 1]} : vector<9x3xf32> to vector<1x1xf32>
    %167 = vector.shape_cast %166 : vector<1x1xf32> to vector<1x1x1xf32>
    %168 = vector.broadcast %167 : vector<1x1x1xf32> to vector<2x26x26xf32>
    %169 = arith.mulf %160, %168 : vector<2x26x26xf32>
    %170 = arith.addf %154, %169 : vector<2x26x26xf32>
    %171 = vector.extract_strided_slice %27 {offsets = [8, 2], sizes = [1, 1], strides = [1, 1]} : vector<9x3xf32> to vector<1x1xf32>
    %172 = vector.shape_cast %171 : vector<1x1xf32> to vector<1x1x1xf32>
    %173 = vector.broadcast %172 : vector<1x1x1xf32> to vector<2x26x26xf32>
    %174 = arith.mulf %160, %173 : vector<2x26x26xf32>
    %175 = arith.addf %159, %174 : vector<2x26x26xf32>
    %176 = vector.extract_strided_slice %28 {offsets = [0, 0], sizes = [1, 1], strides = [1, 1]} : vector<1x3xf32> to vector<1x1xf32>
    %177 = vector.shape_cast %176 : vector<1x1xf32> to vector<1x1x1xf32>
    %178 = vector.broadcast %177 : vector<1x1x1xf32> to vector<2x26x26xf32>
    %179 = arith.addf %165, %178 : vector<2x26x26xf32>
    %cst_16 = arith.constant dense<0.000000e+00> : vector<2x26xf32>
    %180 = vector.multi_reduction <add>, %179, %cst_16 [2] : vector<2x26x26xf32> to vector<2x26xf32>
    %181 = vector.shape_cast %180 : vector<2x26xf32> to vector<2x26x1xf32>
    %cst_17 = arith.constant dense<0.000000e+00> : vector<2x1xf32>
    %182 = vector.multi_reduction <add>, %181, %cst_17 [1] : vector<2x26x1xf32> to vector<2x1xf32>
    %183 = vector.shape_cast %182 : vector<2x1xf32> to vector<2x1x1xf32>
    %cst_18 = arith.constant dense<0.000000e+00> : vector<1x1xf32>
    %184 = vector.multi_reduction <add>, %183, %cst_18 [0] : vector<2x1x1xf32> to vector<1x1xf32>
    %185 = vector.shape_cast %184 : vector<1x1xf32> to vector<1x1x1xf32>
    %cst_19 = arith.constant 7.396450e-04 : f32
    %186 = vector.broadcast %cst_19 : f32 to vector<1x1x1xf32>
    %187 = arith.mulf %185, %186 : vector<1x1x1xf32>
    %188 = vector.broadcast %187 : vector<1x1x1xf32> to vector<2x26x26xf32>
    %189 = arith.subf %179, %188 : vector<2x26x26xf32>
    %190 = arith.mulf %189, %189 : vector<2x26x26xf32>
    %cst_20 = arith.constant dense<0.000000e+00> : vector<2x26xf32>
    %191 = vector.multi_reduction <add>, %190, %cst_20 [2] : vector<2x26x26xf32> to vector<2x26xf32>
    %192 = vector.shape_cast %191 : vector<2x26xf32> to vector<2x26x1xf32>
    %cst_21 = arith.constant dense<0.000000e+00> : vector<2x1xf32>
    %193 = vector.multi_reduction <add>, %192, %cst_21 [1] : vector<2x26x1xf32> to vector<2x1xf32>
    %194 = vector.shape_cast %193 : vector<2x1xf32> to vector<2x1x1xf32>
    %cst_22 = arith.constant dense<0.000000e+00> : vector<1x1xf32>
    %195 = vector.multi_reduction <add>, %194, %cst_22 [0] : vector<2x1x1xf32> to vector<1x1xf32>
    %196 = vector.shape_cast %195 : vector<1x1xf32> to vector<1x1x1xf32>
    %cst_23 = arith.constant 7.396450e-04 : f32
    %197 = vector.broadcast %cst_23 : f32 to vector<1x1x1xf32>
    %198 = arith.mulf %196, %197 : vector<1x1x1xf32>
    %199 = vector.broadcast %187 : vector<1x1x1xf32> to vector<2x26x26xf32>
    %200 = arith.subf %179, %199 : vector<2x26x26xf32>
    %cst_24 = arith.constant 9.99999974E-6 : f32
    %201 = vector.broadcast %cst_24 : f32 to vector<1x1x1xf32>
    %202 = arith.addf %198, %201 : vector<1x1x1xf32>
    %203 = math.rsqrt %202 : vector<1x1x1xf32>
    %204 = vector.broadcast %203 : vector<1x1x1xf32> to vector<2x26x26xf32>
    %205 = arith.mulf %200, %204 : vector<2x26x26xf32>
    %cst_25 = arith.constant 0.000000e+00 : f32
    %206 = vector.broadcast %cst_25 : f32 to vector<2x26x26xf32>
    %207 = arith.maximumf %205, %206 : vector<2x26x26xf32>
    %208 = vector.extract_strided_slice %28 {offsets = [0, 1], sizes = [1, 1], strides = [1, 1]} : vector<1x3xf32> to vector<1x1xf32>
    %209 = vector.shape_cast %208 : vector<1x1xf32> to vector<1x1x1xf32>
    %210 = vector.broadcast %209 : vector<1x1x1xf32> to vector<2x26x26xf32>
    %211 = arith.addf %170, %210 : vector<2x26x26xf32>
    %cst_26 = arith.constant dense<0.000000e+00> : vector<2x26xf32>
    %212 = vector.multi_reduction <add>, %211, %cst_26 [2] : vector<2x26x26xf32> to vector<2x26xf32>
    %213 = vector.shape_cast %212 : vector<2x26xf32> to vector<2x26x1xf32>
    %cst_27 = arith.constant dense<0.000000e+00> : vector<2x1xf32>
    %214 = vector.multi_reduction <add>, %213, %cst_27 [1] : vector<2x26x1xf32> to vector<2x1xf32>
    %215 = vector.shape_cast %214 : vector<2x1xf32> to vector<2x1x1xf32>
    %cst_28 = arith.constant dense<0.000000e+00> : vector<1x1xf32>
    %216 = vector.multi_reduction <add>, %215, %cst_28 [0] : vector<2x1x1xf32> to vector<1x1xf32>
    %217 = vector.shape_cast %216 : vector<1x1xf32> to vector<1x1x1xf32>
    %cst_29 = arith.constant 7.396450e-04 : f32
    %218 = vector.broadcast %cst_29 : f32 to vector<1x1x1xf32>
    %219 = arith.mulf %217, %218 : vector<1x1x1xf32>
    %220 = vector.broadcast %219 : vector<1x1x1xf32> to vector<2x26x26xf32>
    %221 = arith.subf %211, %220 : vector<2x26x26xf32>
    %222 = arith.mulf %221, %221 : vector<2x26x26xf32>
    %cst_30 = arith.constant dense<0.000000e+00> : vector<2x26xf32>
    %223 = vector.multi_reduction <add>, %222, %cst_30 [2] : vector<2x26x26xf32> to vector<2x26xf32>
    %224 = vector.shape_cast %223 : vector<2x26xf32> to vector<2x26x1xf32>
    %cst_31 = arith.constant dense<0.000000e+00> : vector<2x1xf32>
    %225 = vector.multi_reduction <add>, %224, %cst_31 [1] : vector<2x26x1xf32> to vector<2x1xf32>
    %226 = vector.shape_cast %225 : vector<2x1xf32> to vector<2x1x1xf32>
    %cst_32 = arith.constant dense<0.000000e+00> : vector<1x1xf32>
    %227 = vector.multi_reduction <add>, %226, %cst_32 [0] : vector<2x1x1xf32> to vector<1x1xf32>
    %228 = vector.shape_cast %227 : vector<1x1xf32> to vector<1x1x1xf32>
    %cst_33 = arith.constant 7.396450e-04 : f32
    %229 = vector.broadcast %cst_33 : f32 to vector<1x1x1xf32>
    %230 = arith.mulf %228, %229 : vector<1x1x1xf32>
    %231 = vector.broadcast %219 : vector<1x1x1xf32> to vector<2x26x26xf32>
    %232 = arith.subf %211, %231 : vector<2x26x26xf32>
    %cst_34 = arith.constant 9.99999974E-6 : f32
    %233 = vector.broadcast %cst_34 : f32 to vector<1x1x1xf32>
    %234 = arith.addf %230, %233 : vector<1x1x1xf32>
    %235 = math.rsqrt %234 : vector<1x1x1xf32>
    %236 = vector.broadcast %235 : vector<1x1x1xf32> to vector<2x26x26xf32>
    %237 = arith.mulf %232, %236 : vector<2x26x26xf32>
    %cst_35 = arith.constant 0.000000e+00 : f32
    %238 = vector.broadcast %cst_35 : f32 to vector<2x26x26xf32>
    %239 = arith.maximumf %237, %238 : vector<2x26x26xf32>
    %240 = vector.extract_strided_slice %28 {offsets = [0, 2], sizes = [1, 1], strides = [1, 1]} : vector<1x3xf32> to vector<1x1xf32>
    %241 = vector.shape_cast %240 : vector<1x1xf32> to vector<1x1x1xf32>
    %242 = vector.broadcast %241 : vector<1x1x1xf32> to vector<2x26x26xf32>
    %243 = arith.addf %175, %242 : vector<2x26x26xf32>
    %cst_36 = arith.constant dense<0.000000e+00> : vector<2x26xf32>
    %244 = vector.multi_reduction <add>, %243, %cst_36 [2] : vector<2x26x26xf32> to vector<2x26xf32>
    %245 = vector.shape_cast %244 : vector<2x26xf32> to vector<2x26x1xf32>
    %cst_37 = arith.constant dense<0.000000e+00> : vector<2x1xf32>
    %246 = vector.multi_reduction <add>, %245, %cst_37 [1] : vector<2x26x1xf32> to vector<2x1xf32>
    %247 = vector.shape_cast %246 : vector<2x1xf32> to vector<2x1x1xf32>
    %cst_38 = arith.constant dense<0.000000e+00> : vector<1x1xf32>
    %248 = vector.multi_reduction <add>, %247, %cst_38 [0] : vector<2x1x1xf32> to vector<1x1xf32>
    %249 = vector.shape_cast %248 : vector<1x1xf32> to vector<1x1x1xf32>
    %cst_39 = arith.constant 7.396450e-04 : f32
    %250 = vector.broadcast %cst_39 : f32 to vector<1x1x1xf32>
    %251 = arith.mulf %249, %250 : vector<1x1x1xf32>
    %252 = vector.broadcast %251 : vector<1x1x1xf32> to vector<2x26x26xf32>
    %253 = arith.subf %243, %252 : vector<2x26x26xf32>
    %254 = arith.mulf %253, %253 : vector<2x26x26xf32>
    %cst_40 = arith.constant dense<0.000000e+00> : vector<2x26xf32>
    %255 = vector.multi_reduction <add>, %254, %cst_40 [2] : vector<2x26x26xf32> to vector<2x26xf32>
    %256 = vector.shape_cast %255 : vector<2x26xf32> to vector<2x26x1xf32>
    %cst_41 = arith.constant dense<0.000000e+00> : vector<2x1xf32>
    %257 = vector.multi_reduction <add>, %256, %cst_41 [1] : vector<2x26x1xf32> to vector<2x1xf32>
    %258 = vector.shape_cast %257 : vector<2x1xf32> to vector<2x1x1xf32>
    %cst_42 = arith.constant dense<0.000000e+00> : vector<1x1xf32>
    %259 = vector.multi_reduction <add>, %258, %cst_42 [0] : vector<2x1x1xf32> to vector<1x1xf32>
    %260 = vector.shape_cast %259 : vector<1x1xf32> to vector<1x1x1xf32>
    %cst_43 = arith.constant 7.396450e-04 : f32
    %261 = vector.broadcast %cst_43 : f32 to vector<1x1x1xf32>
    %262 = arith.mulf %260, %261 : vector<1x1x1xf32>
    %263 = vector.broadcast %251 : vector<1x1x1xf32> to vector<2x26x26xf32>
    %264 = arith.subf %243, %263 : vector<2x26x26xf32>
    %cst_44 = arith.constant 9.99999974E-6 : f32
    %265 = vector.broadcast %cst_44 : f32 to vector<1x1x1xf32>
    %266 = arith.addf %262, %265 : vector<1x1x1xf32>
    %267 = math.rsqrt %266 : vector<1x1x1xf32>
    %268 = vector.broadcast %267 : vector<1x1x1xf32> to vector<2x26x26xf32>
    %269 = arith.mulf %264, %268 : vector<2x26x26xf32>
    %cst_45 = arith.constant 0.000000e+00 : f32
    %270 = vector.broadcast %cst_45 : f32 to vector<2x26x26xf32>
    %271 = arith.maximumf %269, %270 : vector<2x26x26xf32>
    %cst_46 = arith.constant dense<0x7F800000> : vector<2x26xf32>
    %272 = vector.multi_reduction <minimumf>, %207, %cst_46 [2] : vector<2x26x26xf32> to vector<2x26xf32>
    %273 = vector.shape_cast %272 : vector<2x26xf32> to vector<2x26x1xf32>
    %cst_47 = arith.constant dense<0x7F800000> : vector<2x1xf32>
    %274 = vector.multi_reduction <minimumf>, %273, %cst_47 [1] : vector<2x26x1xf32> to vector<2x1xf32>
    %275 = vector.shape_cast %274 : vector<2x1xf32> to vector<2x1x1xf32>
    %cst_48 = arith.constant dense<0x7F800000> : vector<2x26xf32>
    %276 = vector.multi_reduction <minimumf>, %239, %cst_48 [2] : vector<2x26x26xf32> to vector<2x26xf32>
    %277 = vector.shape_cast %276 : vector<2x26xf32> to vector<2x26x1xf32>
    %cst_49 = arith.constant dense<0x7F800000> : vector<2x1xf32>
    %278 = vector.multi_reduction <minimumf>, %277, %cst_49 [1] : vector<2x26x1xf32> to vector<2x1xf32>
    %279 = vector.shape_cast %278 : vector<2x1xf32> to vector<2x1x1xf32>
    %cst_50 = arith.constant dense<0x7F800000> : vector<2x26xf32>
    %280 = vector.multi_reduction <minimumf>, %271, %cst_50 [2] : vector<2x26x26xf32> to vector<2x26xf32>
    %281 = vector.shape_cast %280 : vector<2x26xf32> to vector<2x26x1xf32>
    %cst_51 = arith.constant dense<0x7F800000> : vector<2x1xf32>
    %282 = vector.multi_reduction <minimumf>, %281, %cst_51 [1] : vector<2x26x1xf32> to vector<2x1xf32>
    %283 = vector.shape_cast %282 : vector<2x1xf32> to vector<2x1x1xf32>
    %cst_52 = arith.constant dense<0xFF800000> : vector<2x26xf32>
    %284 = vector.multi_reduction <maximumf>, %207, %cst_52 [2] : vector<2x26x26xf32> to vector<2x26xf32>
    %285 = vector.shape_cast %284 : vector<2x26xf32> to vector<2x26x1xf32>
    %cst_53 = arith.constant dense<0xFF800000> : vector<2x1xf32>
    %286 = vector.multi_reduction <maximumf>, %285, %cst_53 [1] : vector<2x26x1xf32> to vector<2x1xf32>
    %287 = vector.shape_cast %286 : vector<2x1xf32> to vector<2x1x1xf32>
    %cst_54 = arith.constant dense<0xFF800000> : vector<2x26xf32>
    %288 = vector.multi_reduction <maximumf>, %239, %cst_54 [2] : vector<2x26x26xf32> to vector<2x26xf32>
    %289 = vector.shape_cast %288 : vector<2x26xf32> to vector<2x26x1xf32>
    %cst_55 = arith.constant dense<0xFF800000> : vector<2x1xf32>
    %290 = vector.multi_reduction <maximumf>, %289, %cst_55 [1] : vector<2x26x1xf32> to vector<2x1xf32>
    %291 = vector.shape_cast %290 : vector<2x1xf32> to vector<2x1x1xf32>
    %cst_56 = arith.constant dense<0xFF800000> : vector<2x26xf32>
    %292 = vector.multi_reduction <maximumf>, %271, %cst_56 [2] : vector<2x26x26xf32> to vector<2x26xf32>
    %293 = vector.shape_cast %292 : vector<2x26xf32> to vector<2x26x1xf32>
    %cst_57 = arith.constant dense<0xFF800000> : vector<2x1xf32>
    %294 = vector.multi_reduction <maximumf>, %293, %cst_57 [1] : vector<2x26x1xf32> to vector<2x1xf32>
    %295 = vector.shape_cast %294 : vector<2x1xf32> to vector<2x1x1xf32>
    %296 = arith.minimumf %275, %279 : vector<2x1x1xf32>
    %297 = arith.minimumf %296, %283 : vector<2x1x1xf32>
    %298 = arith.maximumf %287, %291 : vector<2x1x1xf32>
    %299 = arith.maximumf %298, %295 : vector<2x1x1xf32>
    %300 = arith.subf %299, %297 : vector<2x1x1xf32>
    %cst_58 = arith.constant 0.142857149 : f32
    %301 = vector.broadcast %cst_58 : f32 to vector<2x1x1xf32>
    %302 = arith.mulf %300, %301 : vector<2x1x1xf32>
    %cst_59 = arith.constant 0.000000e+00 : f32
    %303 = vector.broadcast %cst_59 : f32 to vector<2x1x1xf32>
    %304 = arith.cmpf oeq, %302, %303 : vector<2x1x1xf32>
    %cst_60 = arith.constant 1.000000e+00 : f32
    %305 = vector.broadcast %cst_60 : f32 to vector<2x1x1xf32>
    %306 = arith.select %304, %305, %302 : vector<2x1x1xi1>, vector<2x1x1xf32>
    %cst_61 = arith.constant 1.000000e+00 : f32
    %307 = vector.broadcast %cst_61 : f32 to vector<2x1x1xf32>
    %308 = arith.divf %307, %306 : vector<2x1x1xf32>
    %309 = vector.broadcast %297 : vector<2x1x1xf32> to vector<2x26x26xf32>
    %310 = arith.subf %207, %309 : vector<2x26x26xf32>
    %311 = vector.broadcast %308 : vector<2x1x1xf32> to vector<2x26x26xf32>
    %312 = arith.mulf %310, %311 : vector<2x26x26xf32>
    %313 = math.roundeven %312 : vector<2x26x26xf32>
    %314 = vector.broadcast %302 : vector<2x1x1xf32> to vector<2x26x26xf32>
    %315 = arith.mulf %313, %314 : vector<2x26x26xf32>
    %316 = vector.broadcast %297 : vector<2x1x1xf32> to vector<2x26x26xf32>
    %317 = arith.addf %315, %316 : vector<2x26x26xf32>
    %318 = arith.subf %299, %297 : vector<2x1x1xf32>
    %cst_62 = arith.constant 0.142857149 : f32
    %319 = vector.broadcast %cst_62 : f32 to vector<2x1x1xf32>
    %320 = arith.mulf %318, %319 : vector<2x1x1xf32>
    %cst_63 = arith.constant 0.000000e+00 : f32
    %321 = vector.broadcast %cst_63 : f32 to vector<2x1x1xf32>
    %322 = arith.cmpf oeq, %320, %321 : vector<2x1x1xf32>
    %cst_64 = arith.constant 1.000000e+00 : f32
    %323 = vector.broadcast %cst_64 : f32 to vector<2x1x1xf32>
    %324 = arith.select %322, %323, %320 : vector<2x1x1xi1>, vector<2x1x1xf32>
    %cst_65 = arith.constant 1.000000e+00 : f32
    %325 = vector.broadcast %cst_65 : f32 to vector<2x1x1xf32>
    %326 = arith.divf %325, %324 : vector<2x1x1xf32>
    %327 = vector.broadcast %297 : vector<2x1x1xf32> to vector<2x26x26xf32>
    %328 = arith.subf %239, %327 : vector<2x26x26xf32>
    %329 = vector.broadcast %326 : vector<2x1x1xf32> to vector<2x26x26xf32>
    %330 = arith.mulf %328, %329 : vector<2x26x26xf32>
    %331 = math.roundeven %330 : vector<2x26x26xf32>
    %332 = vector.broadcast %320 : vector<2x1x1xf32> to vector<2x26x26xf32>
    %333 = arith.mulf %331, %332 : vector<2x26x26xf32>
    %334 = vector.broadcast %297 : vector<2x1x1xf32> to vector<2x26x26xf32>
    %335 = arith.addf %333, %334 : vector<2x26x26xf32>
    %336 = arith.subf %299, %297 : vector<2x1x1xf32>
    %cst_66 = arith.constant 0.142857149 : f32
    %337 = vector.broadcast %cst_66 : f32 to vector<2x1x1xf32>
    %338 = arith.mulf %336, %337 : vector<2x1x1xf32>
    %cst_67 = arith.constant 0.000000e+00 : f32
    %339 = vector.broadcast %cst_67 : f32 to vector<2x1x1xf32>
    %340 = arith.cmpf oeq, %338, %339 : vector<2x1x1xf32>
    %cst_68 = arith.constant 1.000000e+00 : f32
    %341 = vector.broadcast %cst_68 : f32 to vector<2x1x1xf32>
    %342 = arith.select %340, %341, %338 : vector<2x1x1xi1>, vector<2x1x1xf32>
    %cst_69 = arith.constant 1.000000e+00 : f32
    %343 = vector.broadcast %cst_69 : f32 to vector<2x1x1xf32>
    %344 = arith.divf %343, %342 : vector<2x1x1xf32>
    %345 = vector.broadcast %297 : vector<2x1x1xf32> to vector<2x26x26xf32>
    %346 = arith.subf %271, %345 : vector<2x26x26xf32>
    %347 = vector.broadcast %344 : vector<2x1x1xf32> to vector<2x26x26xf32>
    %348 = arith.mulf %346, %347 : vector<2x26x26xf32>
    %349 = math.roundeven %348 : vector<2x26x26xf32>
    %350 = vector.broadcast %338 : vector<2x1x1xf32> to vector<2x26x26xf32>
    %351 = arith.mulf %349, %350 : vector<2x26x26xf32>
    %352 = vector.broadcast %297 : vector<2x1x1xf32> to vector<2x26x26xf32>
    %353 = arith.addf %351, %352 : vector<2x26x26xf32>
    %c0_70 = arith.constant 0 : index
    %c0_71 = arith.constant 0 : index
    %354 = vector.load %arg3[%c0_70, %c0_71] : memref<9x3xf32, #tpu.memory_space<vmem>>, vector<9x3xf32>
    %cst_72 = arith.constant 0.000000e+00 : f32
    %355 = vector.broadcast %cst_72 : f32 to vector<2x24x24xf32>
    %356 = vector.extract_strided_slice %317 {offsets = [0, 0, 0], sizes = [2, 24, 24], strides = [1, 1, 1]} : vector<2x26x26xf32> to vector<2x24x24xf32>
    %357 = vector.extract_strided_slice %354 {offsets = [0, 0], sizes = [1, 1], strides = [1, 1]} : vector<9x3xf32> to vector<1x1xf32>
    %358 = vector.shape_cast %357 : vector<1x1xf32> to vector<1x1x1xf32>
    %359 = vector.broadcast %358 : vector<1x1x1xf32> to vector<2x24x24xf32>
    %360 = arith.mulf %356, %359 : vector<2x24x24xf32>
    %361 = arith.addf %355, %360 : vector<2x24x24xf32>
    %362 = vector.extract_strided_slice %335 {offsets = [0, 0, 0], sizes = [2, 24, 24], strides = [1, 1, 1]} : vector<2x26x26xf32> to vector<2x24x24xf32>
    %363 = vector.extract_strided_slice %354 {offsets = [0, 1], sizes = [1, 1], strides = [1, 1]} : vector<9x3xf32> to vector<1x1xf32>
    %364 = vector.shape_cast %363 : vector<1x1xf32> to vector<1x1x1xf32>
    %365 = vector.broadcast %364 : vector<1x1x1xf32> to vector<2x24x24xf32>
    %366 = arith.mulf %362, %365 : vector<2x24x24xf32>
    %367 = arith.addf %361, %366 : vector<2x24x24xf32>
    %368 = vector.extract_strided_slice %353 {offsets = [0, 0, 0], sizes = [2, 24, 24], strides = [1, 1, 1]} : vector<2x26x26xf32> to vector<2x24x24xf32>
    %369 = vector.extract_strided_slice %354 {offsets = [0, 2], sizes = [1, 1], strides = [1, 1]} : vector<9x3xf32> to vector<1x1xf32>
    %370 = vector.shape_cast %369 : vector<1x1xf32> to vector<1x1x1xf32>
    %371 = vector.broadcast %370 : vector<1x1x1xf32> to vector<2x24x24xf32>
    %372 = arith.mulf %368, %371 : vector<2x24x24xf32>
    %373 = arith.addf %367, %372 : vector<2x24x24xf32>
    %374 = vector.extract_strided_slice %317 {offsets = [0, 0, 1], sizes = [2, 24, 24], strides = [1, 1, 1]} : vector<2x26x26xf32> to vector<2x24x24xf32>
    %375 = vector.extract_strided_slice %354 {offsets = [1, 0], sizes = [1, 1], strides = [1, 1]} : vector<9x3xf32> to vector<1x1xf32>
    %376 = vector.shape_cast %375 : vector<1x1xf32> to vector<1x1x1xf32>
    %377 = vector.broadcast %376 : vector<1x1x1xf32> to vector<2x24x24xf32>
    %378 = arith.mulf %374, %377 : vector<2x24x24xf32>
    %379 = arith.addf %373, %378 : vector<2x24x24xf32>
    %380 = vector.extract_strided_slice %335 {offsets = [0, 0, 1], sizes = [2, 24, 24], strides = [1, 1, 1]} : vector<2x26x26xf32> to vector<2x24x24xf32>
    %381 = vector.extract_strided_slice %354 {offsets = [1, 1], sizes = [1, 1], strides = [1, 1]} : vector<9x3xf32> to vector<1x1xf32>
    %382 = vector.shape_cast %381 : vector<1x1xf32> to vector<1x1x1xf32>
    %383 = vector.broadcast %382 : vector<1x1x1xf32> to vector<2x24x24xf32>
    %384 = arith.mulf %380, %383 : vector<2x24x24xf32>
    %385 = arith.addf %379, %384 : vector<2x24x24xf32>
    %386 = vector.extract_strided_slice %353 {offsets = [0, 0, 1], sizes = [2, 24, 24], strides = [1, 1, 1]} : vector<2x26x26xf32> to vector<2x24x24xf32>
    %387 = vector.extract_strided_slice %354 {offsets = [1, 2], sizes = [1, 1], strides = [1, 1]} : vector<9x3xf32> to vector<1x1xf32>
    %388 = vector.shape_cast %387 : vector<1x1xf32> to vector<1x1x1xf32>
    %389 = vector.broadcast %388 : vector<1x1x1xf32> to vector<2x24x24xf32>
    %390 = arith.mulf %386, %389 : vector<2x24x24xf32>
    %391 = arith.addf %385, %390 : vector<2x24x24xf32>
    %392 = vector.extract_strided_slice %317 {offsets = [0, 0, 2], sizes = [2, 24, 24], strides = [1, 1, 1]} : vector<2x26x26xf32> to vector<2x24x24xf32>
    %393 = vector.extract_strided_slice %354 {offsets = [2, 0], sizes = [1, 1], strides = [1, 1]} : vector<9x3xf32> to vector<1x1xf32>
    %394 = vector.shape_cast %393 : vector<1x1xf32> to vector<1x1x1xf32>
    %395 = vector.broadcast %394 : vector<1x1x1xf32> to vector<2x24x24xf32>
    %396 = arith.mulf %392, %395 : vector<2x24x24xf32>
    %397 = arith.addf %391, %396 : vector<2x24x24xf32>
    %398 = vector.extract_strided_slice %335 {offsets = [0, 0, 2], sizes = [2, 24, 24], strides = [1, 1, 1]} : vector<2x26x26xf32> to vector<2x24x24xf32>
    %399 = vector.extract_strided_slice %354 {offsets = [2, 1], sizes = [1, 1], strides = [1, 1]} : vector<9x3xf32> to vector<1x1xf32>
    %400 = vector.shape_cast %399 : vector<1x1xf32> to vector<1x1x1xf32>
    %401 = vector.broadcast %400 : vector<1x1x1xf32> to vector<2x24x24xf32>
    %402 = arith.mulf %398, %401 : vector<2x24x24xf32>
    %403 = arith.addf %397, %402 : vector<2x24x24xf32>
    %404 = vector.extract_strided_slice %353 {offsets = [0, 0, 2], sizes = [2, 24, 24], strides = [1, 1, 1]} : vector<2x26x26xf32> to vector<2x24x24xf32>
    %405 = vector.extract_strided_slice %354 {offsets = [2, 2], sizes = [1, 1], strides = [1, 1]} : vector<9x3xf32> to vector<1x1xf32>
    %406 = vector.shape_cast %405 : vector<1x1xf32> to vector<1x1x1xf32>
    %407 = vector.broadcast %406 : vector<1x1x1xf32> to vector<2x24x24xf32>
    %408 = arith.mulf %404, %407 : vector<2x24x24xf32>
    %409 = arith.addf %403, %408 : vector<2x24x24xf32>
    %410 = vector.extract_strided_slice %317 {offsets = [0, 1, 0], sizes = [2, 24, 24], strides = [1, 1, 1]} : vector<2x26x26xf32> to vector<2x24x24xf32>
    %411 = vector.extract_strided_slice %354 {offsets = [3, 0], sizes = [1, 1], strides = [1, 1]} : vector<9x3xf32> to vector<1x1xf32>
    %412 = vector.shape_cast %411 : vector<1x1xf32> to vector<1x1x1xf32>
    %413 = vector.broadcast %412 : vector<1x1x1xf32> to vector<2x24x24xf32>
    %414 = arith.mulf %410, %413 : vector<2x24x24xf32>
    %415 = arith.addf %409, %414 : vector<2x24x24xf32>
    %416 = vector.extract_strided_slice %335 {offsets = [0, 1, 0], sizes = [2, 24, 24], strides = [1, 1, 1]} : vector<2x26x26xf32> to vector<2x24x24xf32>
    %417 = vector.extract_strided_slice %354 {offsets = [3, 1], sizes = [1, 1], strides = [1, 1]} : vector<9x3xf32> to vector<1x1xf32>
    %418 = vector.shape_cast %417 : vector<1x1xf32> to vector<1x1x1xf32>
    %419 = vector.broadcast %418 : vector<1x1x1xf32> to vector<2x24x24xf32>
    %420 = arith.mulf %416, %419 : vector<2x24x24xf32>
    %421 = arith.addf %415, %420 : vector<2x24x24xf32>
    %422 = vector.extract_strided_slice %353 {offsets = [0, 1, 0], sizes = [2, 24, 24], strides = [1, 1, 1]} : vector<2x26x26xf32> to vector<2x24x24xf32>
    %423 = vector.extract_strided_slice %354 {offsets = [3, 2], sizes = [1, 1], strides = [1, 1]} : vector<9x3xf32> to vector<1x1xf32>
    %424 = vector.shape_cast %423 : vector<1x1xf32> to vector<1x1x1xf32>
    %425 = vector.broadcast %424 : vector<1x1x1xf32> to vector<2x24x24xf32>
    %426 = arith.mulf %422, %425 : vector<2x24x24xf32>
    %427 = arith.addf %421, %426 : vector<2x24x24xf32>
    %428 = vector.extract_strided_slice %317 {offsets = [0, 1, 1], sizes = [2, 24, 24], strides = [1, 1, 1]} : vector<2x26x26xf32> to vector<2x24x24xf32>
    %429 = vector.extract_strided_slice %354 {offsets = [4, 0], sizes = [1, 1], strides = [1, 1]} : vector<9x3xf32> to vector<1x1xf32>
    %430 = vector.shape_cast %429 : vector<1x1xf32> to vector<1x1x1xf32>
    %431 = vector.broadcast %430 : vector<1x1x1xf32> to vector<2x24x24xf32>
    %432 = arith.mulf %428, %431 : vector<2x24x24xf32>
    %433 = arith.addf %427, %432 : vector<2x24x24xf32>
    %434 = vector.extract_strided_slice %335 {offsets = [0, 1, 1], sizes = [2, 24, 24], strides = [1, 1, 1]} : vector<2x26x26xf32> to vector<2x24x24xf32>
    %435 = vector.extract_strided_slice %354 {offsets = [4, 1], sizes = [1, 1], strides = [1, 1]} : vector<9x3xf32> to vector<1x1xf32>
    %436 = vector.shape_cast %435 : vector<1x1xf32> to vector<1x1x1xf32>
    %437 = vector.broadcast %436 : vector<1x1x1xf32> to vector<2x24x24xf32>
    %438 = arith.mulf %434, %437 : vector<2x24x24xf32>
    %439 = arith.addf %433, %438 : vector<2x24x24xf32>
    %440 = vector.extract_strided_slice %353 {offsets = [0, 1, 1], sizes = [2, 24, 24], strides = [1, 1, 1]} : vector<2x26x26xf32> to vector<2x24x24xf32>
    %441 = vector.extract_strided_slice %354 {offsets = [4, 2], sizes = [1, 1], strides = [1, 1]} : vector<9x3xf32> to vector<1x1xf32>
    %442 = vector.shape_cast %441 : vector<1x1xf32> to vector<1x1x1xf32>
    %443 = vector.broadcast %442 : vector<1x1x1xf32> to vector<2x24x24xf32>
    %444 = arith.mulf %440, %443 : vector<2x24x24xf32>
    %445 = arith.addf %439, %444 : vector<2x24x24xf32>
    %446 = vector.extract_strided_slice %317 {offsets = [0, 1, 2], sizes = [2, 24, 24], strides = [1, 1, 1]} : vector<2x26x26xf32> to vector<2x24x24xf32>
    %447 = vector.extract_strided_slice %354 {offsets = [5, 0], sizes = [1, 1], strides = [1, 1]} : vector<9x3xf32> to vector<1x1xf32>
    %448 = vector.shape_cast %447 : vector<1x1xf32> to vector<1x1x1xf32>
    %449 = vector.broadcast %448 : vector<1x1x1xf32> to vector<2x24x24xf32>
    %450 = arith.mulf %446, %449 : vector<2x24x24xf32>
    %451 = arith.addf %445, %450 : vector<2x24x24xf32>
    %452 = vector.extract_strided_slice %335 {offsets = [0, 1, 2], sizes = [2, 24, 24], strides = [1, 1, 1]} : vector<2x26x26xf32> to vector<2x24x24xf32>
    %453 = vector.extract_strided_slice %354 {offsets = [5, 1], sizes = [1, 1], strides = [1, 1]} : vector<9x3xf32> to vector<1x1xf32>
    %454 = vector.shape_cast %453 : vector<1x1xf32> to vector<1x1x1xf32>
    %455 = vector.broadcast %454 : vector<1x1x1xf32> to vector<2x24x24xf32>
    %456 = arith.mulf %452, %455 : vector<2x24x24xf32>
    %457 = arith.addf %451, %456 : vector<2x24x24xf32>
    %458 = vector.extract_strided_slice %353 {offsets = [0, 1, 2], sizes = [2, 24, 24], strides = [1, 1, 1]} : vector<2x26x26xf32> to vector<2x24x24xf32>
    %459 = vector.extract_strided_slice %354 {offsets = [5, 2], sizes = [1, 1], strides = [1, 1]} : vector<9x3xf32> to vector<1x1xf32>
    %460 = vector.shape_cast %459 : vector<1x1xf32> to vector<1x1x1xf32>
    %461 = vector.broadcast %460 : vector<1x1x1xf32> to vector<2x24x24xf32>
    %462 = arith.mulf %458, %461 : vector<2x24x24xf32>
    %463 = arith.addf %457, %462 : vector<2x24x24xf32>
    %464 = vector.extract_strided_slice %317 {offsets = [0, 2, 0], sizes = [2, 24, 24], strides = [1, 1, 1]} : vector<2x26x26xf32> to vector<2x24x24xf32>
    %465 = vector.extract_strided_slice %354 {offsets = [6, 0], sizes = [1, 1], strides = [1, 1]} : vector<9x3xf32> to vector<1x1xf32>
    %466 = vector.shape_cast %465 : vector<1x1xf32> to vector<1x1x1xf32>
    %467 = vector.broadcast %466 : vector<1x1x1xf32> to vector<2x24x24xf32>
    %468 = arith.mulf %464, %467 : vector<2x24x24xf32>
    %469 = arith.addf %463, %468 : vector<2x24x24xf32>
    %470 = vector.extract_strided_slice %335 {offsets = [0, 2, 0], sizes = [2, 24, 24], strides = [1, 1, 1]} : vector<2x26x26xf32> to vector<2x24x24xf32>
    %471 = vector.extract_strided_slice %354 {offsets = [6, 1], sizes = [1, 1], strides = [1, 1]} : vector<9x3xf32> to vector<1x1xf32>
    %472 = vector.shape_cast %471 : vector<1x1xf32> to vector<1x1x1xf32>
    %473 = vector.broadcast %472 : vector<1x1x1xf32> to vector<2x24x24xf32>
    %474 = arith.mulf %470, %473 : vector<2x24x24xf32>
    %475 = arith.addf %469, %474 : vector<2x24x24xf32>
    %476 = vector.extract_strided_slice %353 {offsets = [0, 2, 0], sizes = [2, 24, 24], strides = [1, 1, 1]} : vector<2x26x26xf32> to vector<2x24x24xf32>
    %477 = vector.extract_strided_slice %354 {offsets = [6, 2], sizes = [1, 1], strides = [1, 1]} : vector<9x3xf32> to vector<1x1xf32>
    %478 = vector.shape_cast %477 : vector<1x1xf32> to vector<1x1x1xf32>
    %479 = vector.broadcast %478 : vector<1x1x1xf32> to vector<2x24x24xf32>
    %480 = arith.mulf %476, %479 : vector<2x24x24xf32>
    %481 = arith.addf %475, %480 : vector<2x24x24xf32>
    %482 = vector.extract_strided_slice %317 {offsets = [0, 2, 1], sizes = [2, 24, 24], strides = [1, 1, 1]} : vector<2x26x26xf32> to vector<2x24x24xf32>
    %483 = vector.extract_strided_slice %354 {offsets = [7, 0], sizes = [1, 1], strides = [1, 1]} : vector<9x3xf32> to vector<1x1xf32>
    %484 = vector.shape_cast %483 : vector<1x1xf32> to vector<1x1x1xf32>
    %485 = vector.broadcast %484 : vector<1x1x1xf32> to vector<2x24x24xf32>
    %486 = arith.mulf %482, %485 : vector<2x24x24xf32>
    %487 = arith.addf %481, %486 : vector<2x24x24xf32>
    %488 = vector.extract_strided_slice %335 {offsets = [0, 2, 1], sizes = [2, 24, 24], strides = [1, 1, 1]} : vector<2x26x26xf32> to vector<2x24x24xf32>
    %489 = vector.extract_strided_slice %354 {offsets = [7, 1], sizes = [1, 1], strides = [1, 1]} : vector<9x3xf32> to vector<1x1xf32>
    %490 = vector.shape_cast %489 : vector<1x1xf32> to vector<1x1x1xf32>
    %491 = vector.broadcast %490 : vector<1x1x1xf32> to vector<2x24x24xf32>
    %492 = arith.mulf %488, %491 : vector<2x24x24xf32>
    %493 = arith.addf %487, %492 : vector<2x24x24xf32>
    %494 = vector.extract_strided_slice %353 {offsets = [0, 2, 1], sizes = [2, 24, 24], strides = [1, 1, 1]} : vector<2x26x26xf32> to vector<2x24x24xf32>
    %495 = vector.extract_strided_slice %354 {offsets = [7, 2], sizes = [1, 1], strides = [1, 1]} : vector<9x3xf32> to vector<1x1xf32>
    %496 = vector.shape_cast %495 : vector<1x1xf32> to vector<1x1x1xf32>
    %497 = vector.broadcast %496 : vector<1x1x1xf32> to vector<2x24x24xf32>
    %498 = arith.mulf %494, %497 : vector<2x24x24xf32>
    %499 = arith.addf %493, %498 : vector<2x24x24xf32>
    %500 = vector.extract_strided_slice %317 {offsets = [0, 2, 2], sizes = [2, 24, 24], strides = [1, 1, 1]} : vector<2x26x26xf32> to vector<2x24x24xf32>
    %501 = vector.extract_strided_slice %354 {offsets = [8, 0], sizes = [1, 1], strides = [1, 1]} : vector<9x3xf32> to vector<1x1xf32>
    %502 = vector.shape_cast %501 : vector<1x1xf32> to vector<1x1x1xf32>
    %503 = vector.broadcast %502 : vector<1x1x1xf32> to vector<2x24x24xf32>
    %504 = arith.mulf %500, %503 : vector<2x24x24xf32>
    %505 = arith.addf %499, %504 : vector<2x24x24xf32>
    %506 = vector.extract_strided_slice %335 {offsets = [0, 2, 2], sizes = [2, 24, 24], strides = [1, 1, 1]} : vector<2x26x26xf32> to vector<2x24x24xf32>
    %507 = vector.extract_strided_slice %354 {offsets = [8, 1], sizes = [1, 1], strides = [1, 1]} : vector<9x3xf32> to vector<1x1xf32>
    %508 = vector.shape_cast %507 : vector<1x1xf32> to vector<1x1x1xf32>
    %509 = vector.broadcast %508 : vector<1x1x1xf32> to vector<2x24x24xf32>
    %510 = arith.mulf %506, %509 : vector<2x24x24xf32>
    %511 = arith.addf %505, %510 : vector<2x24x24xf32>
    %512 = vector.extract_strided_slice %353 {offsets = [0, 2, 2], sizes = [2, 24, 24], strides = [1, 1, 1]} : vector<2x26x26xf32> to vector<2x24x24xf32>
    %513 = vector.extract_strided_slice %354 {offsets = [8, 2], sizes = [1, 1], strides = [1, 1]} : vector<9x3xf32> to vector<1x1xf32>
    %514 = vector.shape_cast %513 : vector<1x1xf32> to vector<1x1x1xf32>
    %515 = vector.broadcast %514 : vector<1x1x1xf32> to vector<2x24x24xf32>
    %516 = arith.mulf %512, %515 : vector<2x24x24xf32>
    %517 = arith.addf %511, %516 : vector<2x24x24xf32>
    %c0_73 = arith.constant 0 : index
    %c0_74 = arith.constant 0 : index
    %518 = vector.load %arg4[%c0_73, %c0_74] : memref<1x1xf32, #tpu.memory_space<vmem>>, vector<1x1xf32>
    %519 = vector.shape_cast %518 : vector<1x1xf32> to vector<1x1x1xf32>
    %520 = vector.broadcast %519 : vector<1x1x1xf32> to vector<2x24x24xf32>
    %521 = arith.addf %517, %520 : vector<2x24x24xf32>
    %cst_75 = arith.constant dense<0.000000e+00> : vector<2x24xf32>
    %522 = vector.multi_reduction <add>, %521, %cst_75 [2] : vector<2x24x24xf32> to vector<2x24xf32>
    %523 = vector.shape_cast %522 : vector<2x24xf32> to vector<2x24x1xf32>
    %cst_76 = arith.constant dense<0.000000e+00> : vector<2x1xf32>
    %524 = vector.multi_reduction <add>, %523, %cst_76 [1] : vector<2x24x1xf32> to vector<2x1xf32>
    %525 = vector.shape_cast %524 : vector<2x1xf32> to vector<2x1x1xf32>
    %cst_77 = arith.constant dense<0.000000e+00> : vector<1x1xf32>
    %526 = vector.multi_reduction <add>, %525, %cst_77 [0] : vector<2x1x1xf32> to vector<1x1xf32>
    %527 = vector.shape_cast %526 : vector<1x1xf32> to vector<1x1x1xf32>
    %cst_78 = arith.constant 8.68055562E-4 : f32
    %528 = vector.broadcast %cst_78 : f32 to vector<1x1x1xf32>
    %529 = arith.mulf %527, %528 : vector<1x1x1xf32>
    %530 = vector.broadcast %529 : vector<1x1x1xf32> to vector<2x24x24xf32>
    %531 = arith.subf %521, %530 : vector<2x24x24xf32>
    %532 = arith.mulf %531, %531 : vector<2x24x24xf32>
    %cst_79 = arith.constant dense<0.000000e+00> : vector<2x24xf32>
    %533 = vector.multi_reduction <add>, %532, %cst_79 [2] : vector<2x24x24xf32> to vector<2x24xf32>
    %534 = vector.shape_cast %533 : vector<2x24xf32> to vector<2x24x1xf32>
    %cst_80 = arith.constant dense<0.000000e+00> : vector<2x1xf32>
    %535 = vector.multi_reduction <add>, %534, %cst_80 [1] : vector<2x24x1xf32> to vector<2x1xf32>
    %536 = vector.shape_cast %535 : vector<2x1xf32> to vector<2x1x1xf32>
    %cst_81 = arith.constant dense<0.000000e+00> : vector<1x1xf32>
    %537 = vector.multi_reduction <add>, %536, %cst_81 [0] : vector<2x1x1xf32> to vector<1x1xf32>
    %538 = vector.shape_cast %537 : vector<1x1xf32> to vector<1x1x1xf32>
    %cst_82 = arith.constant 8.68055562E-4 : f32
    %539 = vector.broadcast %cst_82 : f32 to vector<1x1x1xf32>
    %540 = arith.mulf %538, %539 : vector<1x1x1xf32>
    %541 = vector.broadcast %529 : vector<1x1x1xf32> to vector<2x24x24xf32>
    %542 = arith.subf %521, %541 : vector<2x24x24xf32>
    %cst_83 = arith.constant 9.99999974E-6 : f32
    %543 = vector.broadcast %cst_83 : f32 to vector<1x1x1xf32>
    %544 = arith.addf %540, %543 : vector<1x1x1xf32>
    %545 = math.rsqrt %544 : vector<1x1x1xf32>
    %546 = vector.broadcast %545 : vector<1x1x1xf32> to vector<2x24x24xf32>
    %547 = arith.mulf %542, %546 : vector<2x24x24xf32>
    %cst_84 = arith.constant 0.000000e+00 : f32
    %548 = vector.broadcast %cst_84 : f32 to vector<2x24x24xf32>
    %549 = arith.maximumf %547, %548 : vector<2x24x24xf32>
    %550 = vector.shape_cast %549 : vector<2x24x24xf32> to vector<2x576xf32>
    %cst_85 = arith.constant dense<0x7F800000> : vector<2xf32>
    %551 = vector.multi_reduction <minimumf>, %550, %cst_85 [1] : vector<2x576xf32> to vector<2xf32>
    %552 = vector.shape_cast %551 : vector<2xf32> to vector<2x1xf32>
    %cst_86 = arith.constant dense<0xFF800000> : vector<2xf32>
    %553 = vector.multi_reduction <maximumf>, %550, %cst_86 [1] : vector<2x576xf32> to vector<2xf32>
    %554 = vector.shape_cast %553 : vector<2xf32> to vector<2x1xf32>
    %555 = arith.subf %554, %552 : vector<2x1xf32>
    %cst_87 = arith.constant 0.0666666701 : f32
    %556 = vector.broadcast %cst_87 : f32 to vector<2x1xf32>
    %557 = arith.mulf %555, %556 : vector<2x1xf32>
    %cst_88 = arith.constant 0.000000e+00 : f32
    %558 = vector.broadcast %cst_88 : f32 to vector<2x1xf32>
    %559 = arith.cmpf oeq, %557, %558 : vector<2x1xf32>
    %cst_89 = arith.constant 1.000000e+00 : f32
    %560 = vector.broadcast %cst_89 : f32 to vector<2x1xf32>
    %561 = arith.select %559, %560, %557 : vector<2x1xi1>, vector<2x1xf32>
    %cst_90 = arith.constant 1.000000e+00 : f32
    %562 = vector.broadcast %cst_90 : f32 to vector<2x1xf32>
    %563 = arith.divf %562, %561 : vector<2x1xf32>
    %564 = vector.broadcast %552 : vector<2x1xf32> to vector<2x576xf32>
    %565 = arith.subf %550, %564 : vector<2x576xf32>
    %566 = vector.broadcast %563 : vector<2x1xf32> to vector<2x576xf32>
    %567 = arith.mulf %565, %566 : vector<2x576xf32>
    %568 = math.roundeven %567 : vector<2x576xf32>
    %569 = vector.broadcast %557 : vector<2x1xf32> to vector<2x576xf32>
    %570 = arith.mulf %568, %569 : vector<2x576xf32>
    %571 = vector.broadcast %552 : vector<2x1xf32> to vector<2x576xf32>
    %572 = arith.addf %570, %571 : vector<2x576xf32>
    %573 = arith.truncf %572 : vector<2x576xf32> to vector<2x576xbf16>
    %c0_91 = arith.constant 0 : index
    %c0_92 = arith.constant 0 : index
    %574 = vector.load %arg5[%c0_91, %c0_92] : memref<576x128xf32, #tpu.memory_space<vmem>>, vector<576x128xf32>
    %575 = arith.truncf %574 : vector<576x128xf32> to vector<576x128xbf16>
    %cst_93 = arith.constant dense<0.000000e+00> : vector<2x128xf32>
    %576 = tpu.matmul %573, %575, %cst_93 {dimension_numbers = #tpu.dot_dimension_numbers<[1], [0], [0], [1], [0, 0, 1, 1], [], []>} : vector<2x576xbf16>, vector<576x128xbf16>, vector<2x128xf32> -> vector<2x128xf32>
    %c0_94 = arith.constant 0 : index
    %c0_95 = arith.constant 0 : index
    %577 = vector.load %arg6[%c0_94, %c0_95] : memref<1x128xf32, #tpu.memory_space<vmem>>, vector<1x128xf32>
    %578 = vector.broadcast %577 : vector<1x128xf32> to vector<2x128xf32>
    %579 = arith.addf %576, %578 : vector<2x128xf32>
    %cst_96 = arith.constant dense<0.000000e+00> : vector<128xf32>
    %580 = vector.multi_reduction <add>, %579, %cst_96 [0] : vector<2x128xf32> to vector<128xf32>
    %581 = vector.shape_cast %580 : vector<128xf32> to vector<1x128xf32>
    %cst_97 = arith.constant 2.000000e+00 : f32
    %582 = vector.broadcast %cst_97 : f32 to vector<1x128xf32>
    %583 = arith.divf %581, %582 : vector<1x128xf32>
    %584 = vector.broadcast %583 : vector<1x128xf32> to vector<2x128xf32>
    %585 = arith.subf %579, %584 : vector<2x128xf32>
    %586 = arith.mulf %585, %585 : vector<2x128xf32>
    %cst_98 = arith.constant dense<0.000000e+00> : vector<128xf32>
    %587 = vector.multi_reduction <add>, %586, %cst_98 [0] : vector<2x128xf32> to vector<128xf32>
    %588 = vector.shape_cast %587 : vector<128xf32> to vector<1x128xf32>
    %cst_99 = arith.constant 2.000000e+00 : f32
    %589 = vector.broadcast %cst_99 : f32 to vector<1x128xf32>
    %590 = arith.divf %588, %589 : vector<1x128xf32>
    %591 = vector.broadcast %583 : vector<1x128xf32> to vector<2x128xf32>
    %592 = arith.subf %579, %591 : vector<2x128xf32>
    %cst_100 = arith.constant 9.99999974E-6 : f32
    %593 = vector.broadcast %cst_100 : f32 to vector<1x128xf32>
    %594 = arith.addf %590, %593 : vector<1x128xf32>
    %595 = math.rsqrt %594 : vector<1x128xf32>
    %596 = vector.broadcast %595 : vector<1x128xf32> to vector<2x128xf32>
    %597 = arith.mulf %592, %596 : vector<2x128xf32>
    %cst_101 = arith.constant 0.000000e+00 : f32
    %598 = vector.broadcast %cst_101 : f32 to vector<2x128xf32>
    %599 = arith.maximumf %597, %598 : vector<2x128xf32>
    %c0_102 = arith.constant 0 : index
    %c0_103 = arith.constant 0 : index
    %600 = vector.load %arg7[%c0_102, %c0_103] : memref<128x10xf32, #tpu.memory_space<vmem>>, vector<128x10xf32>
    %cst_104 = arith.constant dense<0.000000e+00> : vector<2x10xf32>
    %601 = tpu.matmul %599, %600, %cst_104 {dimension_numbers = #tpu.dot_dimension_numbers<[1], [0], [0], [1], [0, 0, 1, 1], [], []>} : vector<2x128xf32>, vector<128x10xf32>, vector<2x10xf32> -> vector<2x10xf32>
    %c0_105 = arith.constant 0 : index
    %c0_106 = arith.constant 0 : index
    %602 = vector.load %arg8[%c0_105, %c0_106] : memref<1x10xf32, #tpu.memory_space<vmem>>, vector<1x10xf32>
    %603 = vector.broadcast %602 : vector<1x10xf32> to vector<2x10xf32>
    %604 = arith.addf %601, %603 : vector<2x10xf32>
    %c0_107 = arith.constant 0 : index
    %c0_108 = arith.constant 0 : index
    %605 = vector.load %arg9[%c0_107, %c0_108] : memref<2x10xf32, #tpu.memory_space<vmem>>, vector<2x10xf32>
    tpu.vector_store %arg9[%c0_107, %c0_108], %604 {strides = array<i32>} : memref<2x10xf32, #tpu.memory_space<vmem>>, vector<2x10xf32>,
    return
  }
}

</mosaic_0001>

<llo_original>
// kernel: mytemplate_forward.1
$region0: #{mytemplate_forward.1}
  #allocation0 [shape = 'u32[]', space=smem, size = 0x4, offset = 0x4, fixed_abs, tag = 'smem constant byte address 0x4 - core index']
  #allocation1 [shape = 'u32[144,128]{1,0:T(1,128)}', space=vmem, size = 0x12000, scoped, tag = 'internal scratch']
  #allocation2 [shape = 'f32[1,1]{1,0:T(1,128)S(1)}', space=vmem, size = 0x200, scoped, tag = 'scoped memory for mytemplate_forward.1']
  %s0 = inlined_call_operand.vmem [shape: f32[2,28,28], index: 0, kind: input, shape index: {}]
  %s1 = inlined_call_operand.vmem [shape: f32[9,3], index: 1, kind: input, shape index: {}]
  %s2 = inlined_call_operand.vmem [shape: f32[1,3], index: 2, kind: input, shape index: {}]
  %s3 = inlined_call_operand.vmem [shape: f32[9,3], index: 3, kind: input, shape index: {}]
  %s4 = inlined_call_operand.<no memory space> [shape: f32[1,1], index: 4, kind: input, shape index: {}]
  %s5 = inlined_call_operand.hbm [shape: f32[576,128], index: 5, kind: input, shape index: {}]
  %s6 = inlined_call_operand.vmem [shape: f32[1,128], index: 6, kind: input, shape index: {}]
  %s7 = inlined_call_operand.vmem [shape: f32[128,10], index: 7, kind: input, shape index: {}]
  %s8 = inlined_call_operand.vmem [shape: f32[1,10], index: 8, kind: input, shape index: {}]
  %s9 = inlined_call_operand.hbm [shape: f32[2,10], index: 9, kind: output, shape index: {}]
  %s10 = sld [smem:[#allocation0]]
  $region50: #{mytemplate_forward.1} parent=0
    _
  %s12 = ssub.s32 1, %s10
  %s13 = scalar_select 0, %s12, %s10
  %v14 = vstv %s4
  %15 = vst [vmem:[#allocation2] sm:$0x1] %v14
  $region1: #{mytemplate_forward.1} parent=0
    #allocation3 [shape = 'u8[294912]{0}', space=vmem, size = 0x48000, scoped, tag = 'input window, operand 5, single buffered']
    #allocation4 [shape = 's32[1]{0}', space=sflag, size = 0x4, scoped, tag = 'scoped memory for mytemplate_forward.1']
    #allocation5 [shape = 's32[1]{0}', space=sflag, size = 0x4, scoped, tag = 'scoped memory for mytemplate_forward.1']
    #allocation6 [shape = 'u8[1024]{0}', space=vmem, size = 0x400, scoped, tag = 'output window, operand 0, single buffered']
    %16 = vsyncpa [#allocation4], 0
    %17 = vsyncpa [#allocation5], 0
    // Predicated region
    $region2: #{mytemplate_forward.1} parent=1 // pred_check
      _
    $region3: #{mytemplate_forward.1} parent=1 // pred_check_branch
      %19 = sbr.rel (0) target = $region5
    $region4: #{mytemplate_forward.1} parent=1 // pred_region
      _
    $region5: #{mytemplate_forward.1} parent=1 // pred_fallthru
      _
    // Predicated region
    $region6: #{mytemplate_forward.1} parent=1 // pred_check
      _
    $region7: #{mytemplate_forward.1} parent=1 // pred_check_branch
      %21 = sbr.rel (0) target = $region9
    $region8: #{mytemplate_forward.1} parent=1 // pred_region
      _
    $region9: #{mytemplate_forward.1} parent=1 // pred_fallthru
      _
    // Predicated region
    $region10: #{mytemplate_forward.1} parent=1 // pred_check
      _
    $region11: #{mytemplate_forward.1} parent=1 // pred_check_branch
      %23 = sbr.rel (0) target = $region13
    $region12: #{mytemplate_forward.1} parent=1 // pred_region
      _
    $region13: #{mytemplate_forward.1} parent=1 // pred_fallthru
      _
    // Predicated region
    $region14: #{mytemplate_forward.1} parent=1 // pred_check
      _
    $region15: #{mytemplate_forward.1} parent=1 // pred_check_branch
      %25 = sbr.rel (0) target = $region17
    $region16: #{mytemplate_forward.1} parent=1 // pred_region
      _
    $region17: #{mytemplate_forward.1} parent=1 // pred_fallthru
      _
    // Predicated region
    $region18: #{mytemplate_forward.1} parent=1 // pred_check
      _
    $region19: #{mytemplate_forward.1} parent=1 // pred_check_branch
      %27 = sbr.rel (0) target = $region21
    $region20: #{mytemplate_forward.1} parent=1 // pred_region
      _
    $region21: #{mytemplate_forward.1} parent=1 // pred_fallthru
      _
    // Predicated region
    $region22: #{mytemplate_forward.1} parent=1 // pred_check
      _
    $region23: #{mytemplate_forward.1} parent=1 // pred_check_branch
      %29 = sbr.rel (0) target = $region25
    $region24: #{mytemplate_forward.1} parent=1 // pred_region
      %s31 = ssub.s32 9216, 9216
      %32 = vsyncadd [#allocation4], %s31
      %s33 = sshll.u32 [#allocation3], 4
      %s34 = int_to_ptr.vmem [resolvable:$true] %s33
      %39 = dma.hbm_to_vmem [thread:$0]  %s5, 9216, %s34, [#allocation4], 128, 128, 8
    $region25: #{mytemplate_forward.1} parent=1 // pred_fallthru
      _
    // Predicated region
    $region26: #{mytemplate_forward.1} parent=1 // pred_check
      _
    $region27: #{mytemplate_forward.1} parent=1 // pred_check_branch
      %41 = sbr.rel (0) target = $region29
    $region28: #{mytemplate_forward.1} parent=1 // pred_region
      _
    $region29: #{mytemplate_forward.1} parent=1 // pred_fallthru
      _
    // Predicated region
    $region30: #{mytemplate_forward.1} parent=1 // pred_check
      _
    $region31: #{mytemplate_forward.1} parent=1 // pred_check_branch
      %43 = sbr.rel (0) target = $region33
    $region32: #{mytemplate_forward.1} parent=1 // pred_region
      _
    $region33: #{mytemplate_forward.1} parent=1 // pred_fallthru
      _
    // Predicated region
    $region34: #{mytemplate_forward.1} parent=1 // pred_check
      _
    $region35: #{mytemplate_forward.1} parent=1 // pred_check_branch
      %45 = sbr.rel (0) target = $region37
    $region36: #{mytemplate_forward.1} parent=1 // pred_region
      _
    $region37: #{mytemplate_forward.1} parent=1 // pred_fallthru
      _
    // Predicated region
    $region38: #{mytemplate_forward.1} parent=1 // pred_check
      _
    $region39: #{mytemplate_forward.1} parent=1 // pred_check_branch
      %47 = sbr.rel (0) target = $region41
    $region40: #{mytemplate_forward.1} parent=1 // pred_region
      %48 = dma.done [#allocation4], 9216
    $region41: #{mytemplate_forward.1} parent=1 // pred_fallthru
      _
    %v50 = vld [vmem:[%s0] sm:$0xff]
    %v51 = vld [vmem:[%s0 + $0x8] sm:$0xff]
    %v52 = vld [vmem:[%s0 + $0x10] sm:$0xff]
    %v53 = vld [vmem:[%s0 + $0x18] sm:$0xf]
    %v54 = vld [vmem:[%s0 + $0x20] sm:$0xff]
    %v55 = vld [vmem:[%s0 + $0x28] sm:$0xff]
    %v56 = vld [vmem:[%s0 + $0x30] sm:$0xff]
    %v57 = vld [vmem:[%s0 + $0x38] sm:$0xf]
    %vm58 = vcmask 228352
    %v59 = vsel %vm58, %v50, inf
    %60 = vmin.xlane.f32.xlu0 %v59
    %v61 = vpop.xlane.xlu0 %60
    %v62 = vsel %vm58, %v51, inf
    %63 = vmin.xlane.f32.xlu0 %v62
    %v64 = vpop.xlane.xlu0 %63
    %v65 = vsel %vm58, %v52, inf
    %66 = vmin.xlane.f32.xlu0 %v65
    %v67 = vpop.xlane.xlu0 %66
    %vm68 = vcmask 224256
    %v69 = vsel %vm68, %v53, inf
    %70 = vmin.xlane.f32.xlu0 %v69
    %v71 = vpop.xlane.xlu0 %70
    %v72 = vsel %vm58, %v54, inf
    %73 = vmin.xlane.f32.xlu0 %v72
    %v74 = vpop.xlane.xlu0 %73
    %v75 = vsel %vm58, %v55, inf
    %76 = vmin.xlane.f32.xlu0 %v75
    %v77 = vpop.xlane.xlu0 %76
    %v78 = vsel %vm58, %v56, inf
    %79 = vmin.xlane.f32.xlu0 %v78
    %v80 = vpop.xlane.xlu0 %79
    %v81 = vsel %vm68, %v57, inf
    %82 = vmin.xlane.f32.xlu0 %v81
    %v83 = vpop.xlane.xlu0 %82
    %v84 = vmin.f32 %v61, %v67
    %vm85 = vcmask 1043456
    %v86 = vsel %vm85, %v71, inf
    %v87 = vmin.f32 %v64, %v86
    %v88 = vmin.f32 %v84, %v87
    %v89 = vrot.slane %v88, 4
    %v90 = vmin.f32 %v88, %v89
    %v91 = vrot.slane %v90, 2
    %v92 = vmin.f32 %v90, %v91
    %v93 = vrot.slane %v92, 1
    %v94 = vmin.f32 %v92, %v93
    %v95 = vmin.f32 %v74, %v80
    %v96 = vsel %vm85, %v83, inf
    %v97 = vmin.f32 %v77, %v96
    %v98 = vmin.f32 %v95, %v97
    %v99 = vrot.slane %v98, 4
    %v100 = vmin.f32 %v98, %v99
    %v101 = vrot.slane %v100, 2
    %v102 = vmin.f32 %v100, %v101
    %v103 = vrot.slane %v102, 1
    %v104 = vmin.f32 %v102, %v103
    %v105 = vsel %vm58, %v50, -inf
    %106 = vmax.xlane.f32.xlu0 %v105
    %v107 = vpop.xlane.xlu0 %106
    %v108 = vsel %vm58, %v51, -inf
    %109 = vmax.xlane.f32.xlu0 %v108
    %v110 = vpop.xlane.xlu0 %109
    %v111 = vsel %vm58, %v52, -inf
    %112 = vmax.xlane.f32.xlu0 %v111
    %v113 = vpop.xlane.xlu0 %112
    %v114 = vsel %vm68, %v53, -inf
    %115 = vmax.xlane.f32.xlu0 %v114
    %v116 = vpop.xlane.xlu0 %115
    %v117 = vsel %vm58, %v54, -inf
    %118 = vmax.xlane.f32.xlu0 %v117
    %v119 = vpop.xlane.xlu0 %118
    %v120 = vsel %vm58, %v55, -inf
    %121 = vmax.xlane.f32.xlu0 %v120
    %v122 = vpop.xlane.xlu0 %121
    %v123 = vsel %vm58, %v56, -inf
    %124 = vmax.xlane.f32.xlu0 %v123
    %v125 = vpop.xlane.xlu0 %124
    %v126 = vsel %vm68, %v57, -inf
    %127 = vmax.xlane.f32.xlu0 %v126
    %v128 = vpop.xlane.xlu0 %127
    %v129 = vmax.f32 %v107, %v113
    %v130 = vsel %vm85, %v116, -inf
    %v131 = vmax.f32 %v110, %v130
    %v132 = vmax.f32 %v129, %v131
    %v133 = vrot.slane %v132, 4
    %v134 = vmax.f32 %v132, %v133
    %v135 = vrot.slane %v134, 2
    %v136 = vmax.f32 %v134, %v135
    %v137 = vrot.slane %v136, 1
    %v138 = vmax.f32 %v136, %v137
    %v139 = vmax.f32 %v119, %v125
    %v140 = vsel %vm85, %v128, -inf
    %v141 = vmax.f32 %v122, %v140
    %v142 = vmax.f32 %v139, %v141
    %v143 = vrot.slane %v142, 4
    %v144 = vmax.f32 %v142, %v143
    %v145 = vrot.slane %v144, 2
    %v146 = vmax.f32 %v144, %v145
    %v147 = vrot.slane %v146, 1
    %v148 = vmax.f32 %v146, %v147
    %v149 = vsub.f32 %v138, %v94
    %v150 = vsub.f32 %v148, %v104
    %v151 = vmul.f32 %v149, 0.33333334
    %v152 = vmul.f32 %v150, 0.33333334
    %vm153 = vcmp.eq.f32.partialorder %v151, 0.0
    %vm154 = vcmp.eq.f32.partialorder %v152, 0.0
    %v155 = vsel %vm153, 1.0, %v151
    %v156 = vsel %vm154, 1.0, %v152
    %v157 = vrcp.pop %v155
    %v158 = vmul.f32 1.0, %v157
    %v159 = vrcp.pop %v156
    %v160 = vmul.f32 1.0, %v159
    %v161 = vsub.f32 %v50, %v94
    %v162 = vsub.f32 %v51, %v94
    %v163 = vsub.f32 %v52, %v94
    %v164 = vsub.f32 %v53, %v94
    %v165 = vsub.f32 %v54, %v104
    %v166 = vsub.f32 %v55, %v104
    %v167 = vsub.f32 %v56, %v104
    %v168 = vsub.f32 %v57, %v104
    %v169 = vmul.f32 %v161, %v158
    %v170 = vmul.f32 %v162, %v158
    %v171 = vmul.f32 %v163, %v158
    %v172 = vmul.f32 %v164, %v158
    %v173 = vmul.f32 %v165, %v160
    %v174 = vmul.f32 %v166, %v160
    %v175 = vmul.f32 %v167, %v160
    %v176 = vmul.f32 %v168, %v160
    %v177 = vround.ne.pseudo %v169
    %v178 = vround.ne.pseudo %v170
    %v179 = vround.ne.pseudo %v171
    %v180 = vround.ne.pseudo %v172
    %v181 = vround.ne.pseudo %v173
    %v182 = vround.ne.pseudo %v174
    %v183 = vround.ne.pseudo %v175
    %v184 = vround.ne.pseudo %v176
    %v185 = vmul.f32 %v177, %v151
    %v186 = vmul.f32 %v178, %v151
    %v187 = vmul.f32 %v179, %v151
    %v188 = vmul.f32 %v180, %v151
    %v189 = vmul.f32 %v181, %v152
    %v190 = vmul.f32 %v182, %v152
    %v191 = vmul.f32 %v183, %v152
    %v192 = vmul.f32 %v184, %v152
    %v193 = vadd.f32 %v185, %v94
    %v194 = vadd.f32 %v186, %v94
    %v195 = vadd.f32 %v187, %v94
    %v196 = vadd.f32 %v188, %v94
    %v197 = vadd.f32 %v189, %v104
    %v198 = vadd.f32 %v190, %v104
    %v199 = vadd.f32 %v191, %v104
    %v200 = vadd.f32 %v192, %v104
    %v201 = vld [vmem:[%s1] sm:$0xff]
    %v202 = vld [vmem:[%s1 + $0x8] sm:$0x1]
    %v203 = vld [vmem:[%s2] sm:$0x1]
    %s205 = vtos %v201
    %v206 = vstv %s205
    %v208 = vmul.f32 %v193, %v206
    %v209 = vmul.f32 %v194, %v206
    %v210 = vmul.f32 %v195, %v206
    %v211 = vmul.f32 %v196, %v206
    %v212 = vmul.f32 %v197, %v206
    %v213 = vmul.f32 %v198, %v206
    %v214 = vmul.f32 %v199, %v206
    %v215 = vmul.f32 %v200, %v206
    %v216 = vadd.f32 %v208, 0.0
    %v217 = vadd.f32 %v209, 0.0
    %v218 = vadd.f32 %v210, 0.0
    %v219 = vadd.f32 %v211, 0.0
    %v220 = vadd.f32 %v212, 0.0
    %v221 = vadd.f32 %v213, 0.0
    %v222 = vadd.f32 %v214, 0.0
    %v223 = vadd.f32 %v215, 0.0
    %224 = vrot.lane.b32.xlu0 %v201, 127
    %v225 = vpop.permute.xlu0 %224
    %s226 = vtos %v225
    %v227 = vstv %s226
    %v229 = vmul.f32 %v193, %v227
    %v230 = vmul.f32 %v194, %v227
    %v231 = vmul.f32 %v195, %v227
    %v232 = vmul.f32 %v196, %v227
    %v233 = vmul.f32 %v197, %v227
    %v234 = vmul.f32 %v198, %v227
    %v235 = vmul.f32 %v199, %v227
    %v236 = vmul.f32 %v200, %v227
    %v237 = vadd.f32 %v229, 0.0
    %v238 = vadd.f32 %v230, 0.0
    %v239 = vadd.f32 %v231, 0.0
    %v240 = vadd.f32 %v232, 0.0
    %v241 = vadd.f32 %v233, 0.0
    %v242 = vadd.f32 %v234, 0.0
    %v243 = vadd.f32 %v235, 0.0
    %v244 = vadd.f32 %v236, 0.0
    %245 = vrot.lane.b32.xlu0 %v201, 126
    %v246 = vpop.permute.xlu0 %245
    %s247 = vtos %v246
    %v248 = vstv %s247
    %v250 = vmul.f32 %v193, %v248
    %v251 = vmul.f32 %v194, %v248
    %v252 = vmul.f32 %v195, %v248
    %v253 = vmul.f32 %v196, %v248
    %v254 = vmul.f32 %v197, %v248
    %v255 = vmul.f32 %v198, %v248
    %v256 = vmul.f32 %v199, %v248
    %v257 = vmul.f32 %v200, %v248
    %v258 = vadd.f32 %v250, 0.0
    %v259 = vadd.f32 %v251, 0.0
    %v260 = vadd.f32 %v252, 0.0
    %v261 = vadd.f32 %v253, 0.0
    %v262 = vadd.f32 %v254, 0.0
    %v263 = vadd.f32 %v255, 0.0
    %v264 = vadd.f32 %v256, 0.0
    %v265 = vadd.f32 %v257, 0.0
    %v266 = vrot.slane %v201, 1
    %s267 = vtos %v266
    %v268 = vstv %s267
    %v270 = vmul.f32 %v193, %v268
    %v271 = vmul.f32 %v194, %v268
    %v272 = vmul.f32 %v195, %v268
    %v273 = vmul.f32 %v196, %v268
    %v274 = vmul.f32 %v197, %v268
    %v275 = vmul.f32 %v198, %v268
    %v276 = vmul.f32 %v199, %v268
    %v277 = vmul.f32 %v200, %v268
    %286 = vrot.lane.b32.xlu0 %v270, 127
    %v287 = vpop.permute.xlu0 %286
    %288 = vrot.lane.b32.xlu0 %v271, 127
    %v289 = vpop.permute.xlu0 %288
    %290 = vrot.lane.b32.xlu0 %v272, 127
    %v291 = vpop.permute.xlu0 %290
    %292 = vrot.lane.b32.xlu0 %v273, 127
    %v293 = vpop.permute.xlu0 %292
    %294 = vrot.lane.b32.xlu0 %v274, 127
    %v295 = vpop.permute.xlu0 %294
    %296 = vrot.lane.b32.xlu0 %v275, 127
    %v297 = vpop.permute.xlu0 %296
    %298 = vrot.lane.b32.xlu0 %v276, 127
    %v299 = vpop.permute.xlu0 %298
    %300 = vrot.lane.b32.xlu0 %v277, 127
    %v301 = vpop.permute.xlu0 %300
    %v310 = vadd.f32 %v216, %v287
    %v311 = vadd.f32 %v217, %v289
    %v312 = vadd.f32 %v218, %v291
    %v313 = vadd.f32 %v219, %v293
    %v314 = vadd.f32 %v220, %v295
    %v315 = vadd.f32 %v221, %v297
    %v316 = vadd.f32 %v222, %v299
    %v317 = vadd.f32 %v223, %v301
    %318 = vrot.lane.b32.xlu0 %v266, 127
    %v319 = vpop.permute.xlu0 %318
    %s320 = vtos %v319
    %v321 = vstv %s320
    %v323 = vmul.f32 %v193, %v321
    %v324 = vmul.f32 %v194, %v321
    %v325 = vmul.f32 %v195, %v321
    %v326 = vmul.f32 %v196, %v321
    %v327 = vmul.f32 %v197, %v321
    %v328 = vmul.f32 %v198, %v321
    %v329 = vmul.f32 %v199, %v321
    %v330 = vmul.f32 %v200, %v321
    %339 = vrot.lane.b32.xlu0 %v323, 127
    %v340 = vpop.permute.xlu0 %339
    %341 = vrot.lane.b32.xlu0 %v324, 127
    %v342 = vpop.permute.xlu0 %341
    %343 = vrot.lane.b32.xlu0 %v325, 127
    %v344 = vpop.permute.xlu0 %343
    %345 = vrot.lane.b32.xlu0 %v326, 127
    %v346 = vpop.permute.xlu0 %345
    %347 = vrot.lane.b32.xlu0 %v327, 127
    %v348 = vpop.permute.xlu0 %347
    %349 = vrot.lane.b32.xlu0 %v328, 127
    %v350 = vpop.permute.xlu0 %349
    %351 = vrot.lane.b32.xlu0 %v329, 127
    %v352 = vpop.permute.xlu0 %351
    %353 = vrot.lane.b32.xlu0 %v330, 127
    %v354 = vpop.permute.xlu0 %353
    %v363 = vadd.f32 %v237, %v340
    %v364 = vadd.f32 %v238, %v342
    %v365 = vadd.f32 %v239, %v344
    %v366 = vadd.f32 %v240, %v346
    %v367 = vadd.f32 %v241, %v348
    %v368 = vadd.f32 %v242, %v350
    %v369 = vadd.f32 %v243, %v352
    %v370 = vadd.f32 %v244, %v354
    %371 = vrot.lane.b32.xlu0 %v266, 126
    %v372 = vpop.permute.xlu0 %371
    %s373 = vtos %v372
    %v374 = vstv %s373
    %v376 = vmul.f32 %v193, %v374
    %v377 = vmul.f32 %v194, %v374
    %v378 = vmul.f32 %v195, %v374
    %v379 = vmul.f32 %v196, %v374
    %v380 = vmul.f32 %v197, %v374
    %v381 = vmul.f32 %v198, %v374
    %v382 = vmul.f32 %v199, %v374
    %v383 = vmul.f32 %v200, %v374
    %392 = vrot.lane.b32.xlu0 %v376, 127
    %v393 = vpop.permute.xlu0 %392
    %394 = vrot.lane.b32.xlu0 %v377, 127
    %v395 = vpop.permute.xlu0 %394
    %396 = vrot.lane.b32.xlu0 %v378, 127
    %v397 = vpop.permute.xlu0 %396
    %398 = vrot.lane.b32.xlu0 %v379, 127
    %v399 = vpop.permute.xlu0 %398
    %400 = vrot.lane.b32.xlu0 %v380, 127
    %v401 = vpop.permute.xlu0 %400
    %402 = vrot.lane.b32.xlu0 %v381, 127
    %v403 = vpop.permute.xlu0 %402
    %404 = vrot.lane.b32.xlu0 %v382, 127
    %v405 = vpop.permute.xlu0 %404
    %406 = vrot.lane.b32.xlu0 %v383, 127
    %v407 = vpop.permute.xlu0 %406
    %v416 = vadd.f32 %v258, %v393
    %v417 = vadd.f32 %v259, %v395
    %v418 = vadd.f32 %v260, %v397
    %v419 = vadd.f32 %v261, %v399
    %v420 = vadd.f32 %v262, %v401
    %v421 = vadd.f32 %v263, %v403
    %v422 = vadd.f32 %v264, %v405
    %v423 = vadd.f32 %v265, %v407
    %v424 = vrot.slane %v201, 2
    %s425 = vtos %v424
    %v426 = vstv %s425
    %v428 = vmul.f32 %v193, %v426
    %v429 = vmul.f32 %v194, %v426
    %v430 = vmul.f32 %v195, %v426
    %v431 = vmul.f32 %v196, %v426
    %v432 = vmul.f32 %v197, %v426
    %v433 = vmul.f32 %v198, %v426
    %v434 = vmul.f32 %v199, %v426
    %v435 = vmul.f32 %v200, %v426
    %444 = vrot.lane.b32.xlu0 %v428, 126
    %v445 = vpop.permute.xlu0 %444
    %446 = vrot.lane.b32.xlu0 %v429, 126
    %v447 = vpop.permute.xlu0 %446
    %448 = vrot.lane.b32.xlu0 %v430, 126
    %v449 = vpop.permute.xlu0 %448
    %450 = vrot.lane.b32.xlu0 %v431, 126
    %v451 = vpop.permute.xlu0 %450
    %452 = vrot.lane.b32.xlu0 %v432, 126
    %v453 = vpop.permute.xlu0 %452
    %454 = vrot.lane.b32.xlu0 %v433, 126
    %v455 = vpop.permute.xlu0 %454
    %456 = vrot.lane.b32.xlu0 %v434, 126
    %v457 = vpop.permute.xlu0 %456
    %458 = vrot.lane.b32.xlu0 %v435, 126
    %v459 = vpop.permute.xlu0 %458
    %v468 = vadd.f32 %v310, %v445
    %v469 = vadd.f32 %v311, %v447
    %v470 = vadd.f32 %v312, %v449
    %v471 = vadd.f32 %v313, %v451
    %v472 = vadd.f32 %v314, %v453
    %v473 = vadd.f32 %v315, %v455
    %v474 = vadd.f32 %v316, %v457
    %v475 = vadd.f32 %v317, %v459
    %476 = vrot.lane.b32.xlu0 %v424, 127
    %v477 = vpop.permute.xlu0 %476
    %s478 = vtos %v477
    %v479 = vstv %s478
    %v481 = vmul.f32 %v193, %v479
    %v482 = vmul.f32 %v194, %v479
    %v483 = vmul.f32 %v195, %v479
    %v484 = vmul.f32 %v196, %v479
    %v485 = vmul.f32 %v197, %v479
    %v486 = vmul.f32 %v198, %v479
    %v487 = vmul.f32 %v199, %v479
    %v488 = vmul.f32 %v200, %v479
    %497 = vrot.lane.b32.xlu0 %v481, 126
    %v498 = vpop.permute.xlu0 %497
    %499 = vrot.lane.b32.xlu0 %v482, 126
    %v500 = vpop.permute.xlu0 %499
    %501 = vrot.lane.b32.xlu0 %v483, 126
    %v502 = vpop.permute.xlu0 %501
    %503 = vrot.lane.b32.xlu0 %v484, 126
    %v504 = vpop.permute.xlu0 %503
    %505 = vrot.lane.b32.xlu0 %v485, 126
    %v506 = vpop.permute.xlu0 %505
    %507 = vrot.lane.b32.xlu0 %v486, 126
    %v508 = vpop.permute.xlu0 %507
    %509 = vrot.lane.b32.xlu0 %v487, 126
    %v510 = vpop.permute.xlu0 %509
    %511 = vrot.lane.b32.xlu0 %v488, 126
    %v512 = vpop.permute.xlu0 %511
    %v521 = vadd.f32 %v363, %v498
    %v522 = vadd.f32 %v364, %v500
    %v523 = vadd.f32 %v365, %v502
    %v524 = vadd.f32 %v366, %v504
    %v525 = vadd.f32 %v367, %v506
    %v526 = vadd.f32 %v368, %v508
    %v527 = vadd.f32 %v369, %v510
    %v528 = vadd.f32 %v370, %v512
    %529 = vrot.lane.b32.xlu0 %v424, 126
    %v530 = vpop.permute.xlu0 %529
    %s531 = vtos %v530
    %v532 = vstv %s531
    %v534 = vmul.f32 %v193, %v532
    %v535 = vmul.f32 %v194, %v532
    %v536 = vmul.f32 %v195, %v532
    %v537 = vmul.f32 %v196, %v532
    %v538 = vmul.f32 %v197, %v532
    %v539 = vmul.f32 %v198, %v532
    %v540 = vmul.f32 %v199, %v532
    %v541 = vmul.f32 %v200, %v532
    %550 = vrot.lane.b32.xlu0 %v534, 126
    %v551 = vpop.permute.xlu0 %550
    %552 = vrot.lane.b32.xlu0 %v535, 126
    %v553 = vpop.permute.xlu0 %552
    %554 = vrot.lane.b32.xlu0 %v536, 126
    %v555 = vpop.permute.xlu0 %554
    %556 = vrot.lane.b32.xlu0 %v537, 126
    %v557 = vpop.permute.xlu0 %556
    %558 = vrot.lane.b32.xlu0 %v538, 126
    %v559 = vpop.permute.xlu0 %558
    %560 = vrot.lane.b32.xlu0 %v539, 126
    %v561 = vpop.permute.xlu0 %560
    %562 = vrot.lane.b32.xlu0 %v540, 126
    %v563 = vpop.permute.xlu0 %562
    %564 = vrot.lane.b32.xlu0 %v541, 126
    %v565 = vpop.permute.xlu0 %564
    %v574 = vadd.f32 %v416, %v551
    %v575 = vadd.f32 %v417, %v553
    %v576 = vadd.f32 %v418, %v555
    %v577 = vadd.f32 %v419, %v557
    %v578 = vadd.f32 %v420, %v559
    %v579 = vadd.f32 %v421, %v561
    %v580 = vadd.f32 %v422, %v563
    %v581 = vadd.f32 %v423, %v565
    %v582 = vrot.slane %v201, 3
    %s583 = vtos %v582
    %v584 = vstv %s583
    %v586 = vmul.f32 %v193, %v584
    %v587 = vmul.f32 %v194, %v584
    %v588 = vmul.f32 %v195, %v584
    %v589 = vmul.f32 %v196, %v584
    %v590 = vmul.f32 %v197, %v584
    %v591 = vmul.f32 %v198, %v584
    %v592 = vmul.f32 %v199, %v584
    %v593 = vmul.f32 %v200, %v584
    %vm602 = vcmask 1046528
    %v603 = vrot.slane %v586, 1
    %v604 = vrot.slane %v587, 1
    %v605 = vsel %vm602, %v603, %v604
    %v606 = vrot.slane %v588, 1
    %v607 = vsel %vm602, %v604, %v606
    %v608 = vrot.slane %v589, 1
    %v609 = vsel %vm602, %v606, %v608
    %v610 = vrot.slane %v590, 1
    %v611 = vrot.slane %v591, 1
    %v612 = vsel %vm602, %v610, %v611
    %v613 = vrot.slane %v592, 1
    %v614 = vsel %vm602, %v611, %v613
    %v615 = vrot.slane %v593, 1
    %v616 = vsel %vm602, %v613, %v615
    %v625 = vadd.f32 %v468, %v605
    %v626 = vadd.f32 %v469, %v607
    %v627 = vadd.f32 %v470, %v609
    %v628 = vadd.f32 %v471, %v608
    %v629 = vadd.f32 %v472, %v612
    %v630 = vadd.f32 %v473, %v614
    %v631 = vadd.f32 %v474, %v616
    %v632 = vadd.f32 %v475, %v615
    %633 = vrot.lane.b32.xlu0 %v582, 127
    %v634 = vpop.permute.xlu0 %633
    %s635 = vtos %v634
    %v636 = vstv %s635
    %v638 = vmul.f32 %v193, %v636
    %v639 = vmul.f32 %v194, %v636
    %v640 = vmul.f32 %v195, %v636
    %v641 = vmul.f32 %v196, %v636
    %v642 = vmul.f32 %v197, %v636
    %v643 = vmul.f32 %v198, %v636
    %v644 = vmul.f32 %v199, %v636
    %v645 = vmul.f32 %v200, %v636
    %v654 = vrot.slane %v638, 1
    %v655 = vrot.slane %v639, 1
    %v656 = vsel %vm602, %v654, %v655
    %v657 = vrot.slane %v640, 1
    %v658 = vsel %vm602, %v655, %v657
    %v659 = vrot.slane %v641, 1
    %v660 = vsel %vm602, %v657, %v659
    %v661 = vrot.slane %v642, 1
    %v662 = vrot.slane %v643, 1
    %v663 = vsel %vm602, %v661, %v662
    %v664 = vrot.slane %v644, 1
    %v665 = vsel %vm602, %v662, %v664
    %v666 = vrot.slane %v645, 1
    %v667 = vsel %vm602, %v664, %v666
    %v676 = vadd.f32 %v521, %v656
    %v677 = vadd.f32 %v522, %v658
    %v678 = vadd.f32 %v523, %v660
    %v679 = vadd.f32 %v524, %v659
    %v680 = vadd.f32 %v525, %v663
    %v681 = vadd.f32 %v526, %v665
    %v682 = vadd.f32 %v527, %v667
    %v683 = vadd.f32 %v528, %v666
    %684 = vrot.lane.b32.xlu0 %v582, 126
    %v685 = vpop.permute.xlu0 %684
    %s686 = vtos %v685
    %v687 = vstv %s686
    %v689 = vmul.f32 %v193, %v687
    %v690 = vmul.f32 %v194, %v687
    %v691 = vmul.f32 %v195, %v687
    %v692 = vmul.f32 %v196, %v687
    %v693 = vmul.f32 %v197, %v687
    %v694 = vmul.f32 %v198, %v687
    %v695 = vmul.f32 %v199, %v687
    %v696 = vmul.f32 %v200, %v687
    %v705 = vrot.slane %v689, 1
    %v706 = vrot.slane %v690, 1
    %v707 = vsel %vm602, %v705, %v706
    %v708 = vrot.slane %v691, 1
    %v709 = vsel %vm602, %v706, %v708
    %v710 = vrot.slane %v692, 1
    %v711 = vsel %vm602, %v708, %v710
    %v712 = vrot.slane %v693, 1
    %v713 = vrot.slane %v694, 1
    %v714 = vsel %vm602, %v712, %v713
    %v715 = vrot.slane %v695, 1
    %v716 = vsel %vm602, %v713, %v715
    %v717 = vrot.slane %v696, 1
    %v718 = vsel %vm602, %v715, %v717
    %v727 = vadd.f32 %v574, %v707
    %v728 = vadd.f32 %v575, %v709
    %v729 = vadd.f32 %v576, %v711
    %v730 = vadd.f32 %v577, %v710
    %v731 = vadd.f32 %v578, %v714
    %v732 = vadd.f32 %v579, %v716
    %v733 = vadd.f32 %v580, %v718
    %v734 = vadd.f32 %v581, %v717
    %v735 = vrot.slane %v201, 4
    %s736 = vtos %v735
    %v737 = vstv %s736
    %v739 = vmul.f32 %v193, %v737
    %v740 = vmul.f32 %v194, %v737
    %v741 = vmul.f32 %v195, %v737
    %v742 = vmul.f32 %v196, %v737
    %v743 = vmul.f32 %v197, %v737
    %v744 = vmul.f32 %v198, %v737
    %v745 = vmul.f32 %v199, %v737
    %v746 = vmul.f32 %v200, %v737
    %v755 = vrot.slane %v739, 1
    %v756 = vrot.slane %v740, 1
    %v757 = vsel %vm602, %v755, %v756
    %v758 = vrot.slane %v741, 1
    %v759 = vsel %vm602, %v756, %v758
    %v760 = vrot.slane %v742, 1
    %v761 = vsel %vm602, %v758, %v760
    %v762 = vrot.slane %v743, 1
    %v763 = vrot.slane %v744, 1
    %v764 = vsel %vm602, %v762, %v763
    %v765 = vrot.slane %v745, 1
    %v766 = vsel %vm602, %v763, %v765
    %v767 = vrot.slane %v746, 1
    %v768 = vsel %vm602, %v765, %v767
    %769 = vrot.lane.b32.xlu0 %v757, 127
    %v770 = vpop.permute.xlu0 %769
    %771 = vrot.lane.b32.xlu0 %v759, 127
    %v772 = vpop.permute.xlu0 %771
    %773 = vrot.lane.b32.xlu0 %v761, 127
    %v774 = vpop.permute.xlu0 %773
    %775 = vrot.lane.b32.xlu0 %v760, 127
    %v776 = vpop.permute.xlu0 %775
    %777 = vrot.lane.b32.xlu0 %v764, 127
    %v778 = vpop.permute.xlu0 %777
    %779 = vrot.lane.b32.xlu0 %v766, 127
    %v780 = vpop.permute.xlu0 %779
    %781 = vrot.lane.b32.xlu0 %v768, 127
    %v782 = vpop.permute.xlu0 %781
    %783 = vrot.lane.b32.xlu0 %v767, 127
    %v784 = vpop.permute.xlu0 %783
    %v793 = vadd.f32 %v625, %v770
    %v794 = vadd.f32 %v626, %v772
    %v795 = vadd.f32 %v627, %v774
    %v796 = vadd.f32 %v628, %v776
    %v797 = vadd.f32 %v629, %v778
    %v798 = vadd.f32 %v630, %v780
    %v799 = vadd.f32 %v631, %v782
    %v800 = vadd.f32 %v632, %v784
    %801 = vrot.lane.b32.xlu0 %v735, 127
    %v802 = vpop.permute.xlu0 %801
    %s803 = vtos %v802
    %v804 = vstv %s803
    %v806 = vmul.f32 %v193, %v804
    %v807 = vmul.f32 %v194, %v804
    %v808 = vmul.f32 %v195, %v804
    %v809 = vmul.f32 %v196, %v804
    %v810 = vmul.f32 %v197, %v804
    %v811 = vmul.f32 %v198, %v804
    %v812 = vmul.f32 %v199, %v804
    %v813 = vmul.f32 %v200, %v804
    %v822 = vrot.slane %v806, 1
    %v823 = vrot.slane %v807, 1
    %v824 = vsel %vm602, %v822, %v823
    %v825 = vrot.slane %v808, 1
    %v826 = vsel %vm602, %v823, %v825
    %v827 = vrot.slane %v809, 1
    %v828 = vsel %vm602, %v825, %v827
    %v829 = vrot.slane %v810, 1
    %v830 = vrot.slane %v811, 1
    %v831 = vsel %vm602, %v829, %v830
    %v832 = vrot.slane %v812, 1
    %v833 = vsel %vm602, %v830, %v832
    %v834 = vrot.slane %v813, 1
    %v835 = vsel %vm602, %v832, %v834
    %836 = vrot.lane.b32.xlu0 %v824, 127
    %v837 = vpop.permute.xlu0 %836
    %838 = vrot.lane.b32.xlu0 %v826, 127
    %v839 = vpop.permute.xlu0 %838
    %840 = vrot.lane.b32.xlu0 %v828, 127
    %v841 = vpop.permute.xlu0 %840
    %842 = vrot.lane.b32.xlu0 %v827, 127
    %v843 = vpop.permute.xlu0 %842
    %844 = vrot.lane.b32.xlu0 %v831, 127
    %v845 = vpop.permute.xlu0 %844
    %846 = vrot.lane.b32.xlu0 %v833, 127
    %v847 = vpop.permute.xlu0 %846
    %848 = vrot.lane.b32.xlu0 %v835, 127
    %v849 = vpop.permute.xlu0 %848
    %850 = vrot.lane.b32.xlu0 %v834, 127
    %v851 = vpop.permute.xlu0 %850
    %v860 = vadd.f32 %v676, %v837
    %v861 = vadd.f32 %v677, %v839
    %v862 = vadd.f32 %v678, %v841
    %v863 = vadd.f32 %v679, %v843
    %v864 = vadd.f32 %v680, %v845
    %v865 = vadd.f32 %v681, %v847
    %v866 = vadd.f32 %v682, %v849
    %v867 = vadd.f32 %v683, %v851
    %868 = vrot.lane.b32.xlu0 %v735, 126
    %v869 = vpop.permute.xlu0 %868
    %s870 = vtos %v869
    %v871 = vstv %s870
    %v873 = vmul.f32 %v193, %v871
    %v874 = vmul.f32 %v194, %v871
    %v875 = vmul.f32 %v195, %v871
    %v876 = vmul.f32 %v196, %v871
    %v877 = vmul.f32 %v197, %v871
    %v878 = vmul.f32 %v198, %v871
    %v879 = vmul.f32 %v199, %v871
    %v880 = vmul.f32 %v200, %v871
    %v889 = vrot.slane %v873, 1
    %v890 = vrot.slane %v874, 1
    %v891 = vsel %vm602, %v889, %v890
    %v892 = vrot.slane %v875, 1
    %v893 = vsel %vm602, %v890, %v892
    %v894 = vrot.slane %v876, 1
    %v895 = vsel %vm602, %v892, %v894
    %v896 = vrot.slane %v877, 1
    %v897 = vrot.slane %v878, 1
    %v898 = vsel %vm602, %v896, %v897
    %v899 = vrot.slane %v879, 1
    %v900 = vsel %vm602, %v897, %v899
    %v901 = vrot.slane %v880, 1
    %v902 = vsel %vm602, %v899, %v901
    %903 = vrot.lane.b32.xlu0 %v891, 127
    %v904 = vpop.permute.xlu0 %903
    %905 = vrot.lane.b32.xlu0 %v893, 127
    %v906 = vpop.permute.xlu0 %905
    %907 = vrot.lane.b32.xlu0 %v895, 127
    %v908 = vpop.permute.xlu0 %907
    %909 = vrot.lane.b32.xlu0 %v894, 127
    %v910 = vpop.permute.xlu0 %909
    %911 = vrot.lane.b32.xlu0 %v898, 127
    %v912 = vpop.permute.xlu0 %911
    %913 = vrot.lane.b32.xlu0 %v900, 127
    %v914 = vpop.permute.xlu0 %913
    %915 = vrot.lane.b32.xlu0 %v902, 127
    %v916 = vpop.permute.xlu0 %915
    %917 = vrot.lane.b32.xlu0 %v901, 127
    %v918 = vpop.permute.xlu0 %917
    %v927 = vadd.f32 %v727, %v904
    %v928 = vadd.f32 %v728, %v906
    %v929 = vadd.f32 %v729, %v908
    %v930 = vadd.f32 %v730, %v910
    %v931 = vadd.f32 %v731, %v912
    %v932 = vadd.f32 %v732, %v914
    %v933 = vadd.f32 %v733, %v916
    %v934 = vadd.f32 %v734, %v918
    %v935 = vrot.slane %v201, 5
    %s936 = vtos %v935
    %v937 = vstv %s936
    %v939 = vmul.f32 %v193, %v937
    %v940 = vmul.f32 %v194, %v937
    %v941 = vmul.f32 %v195, %v937
    %v942 = vmul.f32 %v196, %v937
    %v943 = vmul.f32 %v197, %v937
    %v944 = vmul.f32 %v198, %v937
    %v945 = vmul.f32 %v199, %v937
    %v946 = vmul.f32 %v200, %v937
    %v955 = vrot.slane %v939, 1
    %v956 = vrot.slane %v940, 1
    %v957 = vsel %vm602, %v955, %v956
    %v958 = vrot.slane %v941, 1
    %v959 = vsel %vm602, %v956, %v958
    %v960 = vrot.slane %v942, 1
    %v961 = vsel %vm602, %v958, %v960
    %v962 = vrot.slane %v943, 1
    %v963 = vrot.slane %v944, 1
    %v964 = vsel %vm602, %v962, %v963
    %v965 = vrot.slane %v945, 1
    %v966 = vsel %vm602, %v963, %v965
    %v967 = vrot.slane %v946, 1
    %v968 = vsel %vm602, %v965, %v967
    %969 = vrot.lane.b32.xlu0 %v957, 126
    %v970 = vpop.permute.xlu0 %969
    %971 = vrot.lane.b32.xlu0 %v959, 126
    %v972 = vpop.permute.xlu0 %971
    %973 = vrot.lane.b32.xlu0 %v961, 126
    %v974 = vpop.permute.xlu0 %973
    %975 = vrot.lane.b32.xlu0 %v960, 126
    %v976 = vpop.permute.xlu0 %975
    %977 = vrot.lane.b32.xlu0 %v964, 126
    %v978 = vpop.permute.xlu0 %977
    %979 = vrot.lane.b32.xlu0 %v966, 126
    %v980 = vpop.permute.xlu0 %979
    %981 = vrot.lane.b32.xlu0 %v968, 126
    %v982 = vpop.permute.xlu0 %981
    %983 = vrot.lane.b32.xlu0 %v967, 126
    %v984 = vpop.permute.xlu0 %983
    %v993 = vadd.f32 %v793, %v970
    %v994 = vadd.f32 %v794, %v972
    %v995 = vadd.f32 %v795, %v974
    %v996 = vadd.f32 %v796, %v976
    %v997 = vadd.f32 %v797, %v978
    %v998 = vadd.f32 %v798, %v980
    %v999 = vadd.f32 %v799, %v982
    %v1000 = vadd.f32 %v800, %v984
    %1001 = vrot.lane.b32.xlu0 %v935, 127
    %v1002 = vpop.permute.xlu0 %1001
    %s1003 = vtos %v1002
    %v1004 = vstv %s1003
    %v1006 = vmul.f32 %v193, %v1004
    %v1007 = vmul.f32 %v194, %v1004
    %v1008 = vmul.f32 %v195, %v1004
    %v1009 = vmul.f32 %v196, %v1004
    %v1010 = vmul.f32 %v197, %v1004
    %v1011 = vmul.f32 %v198, %v1004
    %v1012 = vmul.f32 %v199, %v1004
    %v1013 = vmul.f32 %v200, %v1004
    %v1022 = vrot.slane %v1006, 1
    %v1023 = vrot.slane %v1007, 1
    %v1024 = vsel %vm602, %v1022, %v1023
    %v1025 = vrot.slane %v1008, 1
    %v1026 = vsel %vm602, %v1023, %v1025
    %v1027 = vrot.slane %v1009, 1
    %v1028 = vsel %vm602, %v1025, %v1027
    %v1029 = vrot.slane %v1010, 1
    %v1030 = vrot.slane %v1011, 1
    %v1031 = vsel %vm602, %v1029, %v1030
    %v1032 = vrot.slane %v1012, 1
    %v1033 = vsel %vm602, %v1030, %v1032
    %v1034 = vrot.slane %v1013, 1
    %v1035 = vsel %vm602, %v1032, %v1034
    %1036 = vrot.lane.b32.xlu0 %v1024, 126
    %v1037 = vpop.permute.xlu0 %1036
    %1038 = vrot.lane.b32.xlu0 %v1026, 126
    %v1039 = vpop.permute.xlu0 %1038
    %1040 = vrot.lane.b32.xlu0 %v1028, 126
    %v1041 = vpop.permute.xlu0 %1040
    %1042 = vrot.lane.b32.xlu0 %v1027, 126
    %v1043 = vpop.permute.xlu0 %1042
    %1044 = vrot.lane.b32.xlu0 %v1031, 126
    %v1045 = vpop.permute.xlu0 %1044
    %1046 = vrot.lane.b32.xlu0 %v1033, 126
    %v1047 = vpop.permute.xlu0 %1046
    %1048 = vrot.lane.b32.xlu0 %v1035, 126
    %v1049 = vpop.permute.xlu0 %1048
    %1050 = vrot.lane.b32.xlu0 %v1034, 126
    %v1051 = vpop.permute.xlu0 %1050
    %v1060 = vadd.f32 %v860, %v1037
    %v1061 = vadd.f32 %v861, %v1039
    %v1062 = vadd.f32 %v862, %v1041
    %v1063 = vadd.f32 %v863, %v1043
    %v1064 = vadd.f32 %v864, %v1045
    %v1065 = vadd.f32 %v865, %v1047
    %v1066 = vadd.f32 %v866, %v1049
    %v1067 = vadd.f32 %v867, %v1051
    %1068 = vrot.lane.b32.xlu0 %v935, 126
    %v1069 = vpop.permute.xlu0 %1068
    %s1070 = vtos %v1069
    %v1071 = vstv %s1070
    %v1073 = vmul.f32 %v193, %v1071
    %v1074 = vmul.f32 %v194, %v1071
    %v1075 = vmul.f32 %v195, %v1071
    %v1076 = vmul.f32 %v196, %v1071
    %v1077 = vmul.f32 %v197, %v1071
    %v1078 = vmul.f32 %v198, %v1071
    %v1079 = vmul.f32 %v199, %v1071
    %v1080 = vmul.f32 %v200, %v1071
    %v1089 = vrot.slane %v1073, 1
    %v1090 = vrot.slane %v1074, 1
    %v1091 = vsel %vm602, %v1089, %v1090
    %v1092 = vrot.slane %v1075, 1
    %v1093 = vsel %vm602, %v1090, %v1092
    %v1094 = vrot.slane %v1076, 1
    %v1095 = vsel %vm602, %v1092, %v1094
    %v1096 = vrot.slane %v1077, 1
    %v1097 = vrot.slane %v1078, 1
    %v1098 = vsel %vm602, %v1096, %v1097
    %v1099 = vrot.slane %v1079, 1
    %v1100 = vsel %vm602, %v1097, %v1099
    %v1101 = vrot.slane %v1080, 1
    %v1102 = vsel %vm602, %v1099, %v1101
    %1103 = vrot.lane.b32.xlu0 %v1091, 126
    %v1104 = vpop.permute.xlu0 %1103
    %1105 = vrot.lane.b32.xlu0 %v1093, 126
    %v1106 = vpop.permute.xlu0 %1105
    %1107 = vrot.lane.b32.xlu0 %v1095, 126
    %v1108 = vpop.permute.xlu0 %1107
    %1109 = vrot.lane.b32.xlu0 %v1094, 126
    %v1110 = vpop.permute.xlu0 %1109
    %1111 = vrot.lane.b32.xlu0 %v1098, 126
    %v1112 = vpop.permute.xlu0 %1111
    %1113 = vrot.lane.b32.xlu0 %v1100, 126
    %v1114 = vpop.permute.xlu0 %1113
    %1115 = vrot.lane.b32.xlu0 %v1102, 126
    %v1116 = vpop.permute.xlu0 %1115
    %1117 = vrot.lane.b32.xlu0 %v1101, 126
    %v1118 = vpop.permute.xlu0 %1117
    %v1127 = vadd.f32 %v927, %v1104
    %v1128 = vadd.f32 %v928, %v1106
    %v1129 = vadd.f32 %v929, %v1108
    %v1130 = vadd.f32 %v930, %v1110
    %v1131 = vadd.f32 %v931, %v1112
    %v1132 = vadd.f32 %v932, %v1114
    %v1133 = vadd.f32 %v933, %v1116
    %v1134 = vadd.f32 %v934, %v1118
    %v1135 = vrot.slane %v201, 6
    %s1136 = vtos %v1135
    %v1137 = vstv %s1136
    %v1139 = vmul.f32 %v193, %v1137
    %v1140 = vmul.f32 %v194, %v1137
    %v1141 = vmul.f32 %v195, %v1137
    %v1142 = vmul.f32 %v196, %v1137
    %v1143 = vmul.f32 %v197, %v1137
    %v1144 = vmul.f32 %v198, %v1137
    %v1145 = vmul.f32 %v199, %v1137
    %v1146 = vmul.f32 %v200, %v1137
    %vm1155 = vcmask 1045504
    %v1156 = vrot.slane %v1139, 2
    %v1157 = vrot.slane %v1140, 2
    %v1158 = vsel %vm1155, %v1156, %v1157
    %v1159 = vrot.slane %v1141, 2
    %v1160 = vsel %vm1155, %v1157, %v1159
    %v1161 = vrot.slane %v1142, 2
    %v1162 = vsel %vm1155, %v1159, %v1161
    %v1163 = vrot.slane %v1143, 2
    %v1164 = vrot.slane %v1144, 2
    %v1165 = vsel %vm1155, %v1163, %v1164
    %v1166 = vrot.slane %v1145, 2
    %v1167 = vsel %vm1155, %v1164, %v1166
    %v1168 = vrot.slane %v1146, 2
    %v1169 = vsel %vm1155, %v1166, %v1168
    %v1178 = vadd.f32 %v993, %v1158
    %v1179 = vadd.f32 %v994, %v1160
    %v1180 = vadd.f32 %v995, %v1162
    %v1181 = vadd.f32 %v996, %v1161
    %v1182 = vadd.f32 %v997, %v1165
    %v1183 = vadd.f32 %v998, %v1167
    %v1184 = vadd.f32 %v999, %v1169
    %v1185 = vadd.f32 %v1000, %v1168
    %1186 = vrot.lane.b32.xlu0 %v1135, 127
    %v1187 = vpop.permute.xlu0 %1186
    %s1188 = vtos %v1187
    %v1189 = vstv %s1188
    %v1191 = vmul.f32 %v193, %v1189
    %v1192 = vmul.f32 %v194, %v1189
    %v1193 = vmul.f32 %v195, %v1189
    %v1194 = vmul.f32 %v196, %v1189
    %v1195 = vmul.f32 %v197, %v1189
    %v1196 = vmul.f32 %v198, %v1189
    %v1197 = vmul.f32 %v199, %v1189
    %v1198 = vmul.f32 %v200, %v1189
    %v1207 = vrot.slane %v1191, 2
    %v1208 = vrot.slane %v1192, 2
    %v1209 = vsel %vm1155, %v1207, %v1208
    %v1210 = vrot.slane %v1193, 2
    %v1211 = vsel %vm1155, %v1208, %v1210
    %v1212 = vrot.slane %v1194, 2
    %v1213 = vsel %vm1155, %v1210, %v1212
    %v1214 = vrot.slane %v1195, 2
    %v1215 = vrot.slane %v1196, 2
    %v1216 = vsel %vm1155, %v1214, %v1215
    %v1217 = vrot.slane %v1197, 2
    %v1218 = vsel %vm1155, %v1215, %v1217
    %v1219 = vrot.slane %v1198, 2
    %v1220 = vsel %vm1155, %v1217, %v1219
    %v1229 = vadd.f32 %v1060, %v1209
    %v1230 = vadd.f32 %v1061, %v1211
    %v1231 = vadd.f32 %v1062, %v1213
    %v1232 = vadd.f32 %v1063, %v1212
    %v1233 = vadd.f32 %v1064, %v1216
    %v1234 = vadd.f32 %v1065, %v1218
    %v1235 = vadd.f32 %v1066, %v1220
    %v1236 = vadd.f32 %v1067, %v1219
    %1237 = vrot.lane.b32.xlu0 %v1135, 126
    %v1238 = vpop.permute.xlu0 %1237
    %s1239 = vtos %v1238
    %v1240 = vstv %s1239
    %v1242 = vmul.f32 %v193, %v1240
    %v1243 = vmul.f32 %v194, %v1240
    %v1244 = vmul.f32 %v195, %v1240
    %v1245 = vmul.f32 %v196, %v1240
    %v1246 = vmul.f32 %v197, %v1240
    %v1247 = vmul.f32 %v198, %v1240
    %v1248 = vmul.f32 %v199, %v1240
    %v1249 = vmul.f32 %v200, %v1240
    %v1258 = vrot.slane %v1242, 2
    %v1259 = vrot.slane %v1243, 2
    %v1260 = vsel %vm1155, %v1258, %v1259
    %v1261 = vrot.slane %v1244, 2
    %v1262 = vsel %vm1155, %v1259, %v1261
    %v1263 = vrot.slane %v1245, 2
    %v1264 = vsel %vm1155, %v1261, %v1263
    %v1265 = vrot.slane %v1246, 2
    %v1266 = vrot.slane %v1247, 2
    %v1267 = vsel %vm1155, %v1265, %v1266
    %v1268 = vrot.slane %v1248, 2
    %v1269 = vsel %vm1155, %v1266, %v1268
    %v1270 = vrot.slane %v1249, 2
    %v1271 = vsel %vm1155, %v1268, %v1270
    %v1280 = vadd.f32 %v1127, %v1260
    %v1281 = vadd.f32 %v1128, %v1262
    %v1282 = vadd.f32 %v1129, %v1264
    %v1283 = vadd.f32 %v1130, %v1263
    %v1284 = vadd.f32 %v1131, %v1267
    %v1285 = vadd.f32 %v1132, %v1269
    %v1286 = vadd.f32 %v1133, %v1271
    %v1287 = vadd.f32 %v1134, %v1270
    %v1288 = vrot.slane %v201, 7
    %s1289 = vtos %v1288
    %v1290 = vstv %s1289
    %v1292 = vmul.f32 %v193, %v1290
    %v1293 = vmul.f32 %v194, %v1290
    %v1294 = vmul.f32 %v195, %v1290
    %v1295 = vmul.f32 %v196, %v1290
    %v1296 = vmul.f32 %v197, %v1290
    %v1297 = vmul.f32 %v198, %v1290
    %v1298 = vmul.f32 %v199, %v1290
    %v1299 = vmul.f32 %v200, %v1290
    %v1308 = vrot.slane %v1292, 2
    %v1309 = vrot.slane %v1293, 2
    %v1310 = vsel %vm1155, %v1308, %v1309
    %v1311 = vrot.slane %v1294, 2
    %v1312 = vsel %vm1155, %v1309, %v1311
    %v1313 = vrot.slane %v1295, 2
    %v1314 = vsel %vm1155, %v1311, %v1313
    %v1315 = vrot.slane %v1296, 2
    %v1316 = vrot.slane %v1297, 2
    %v1317 = vsel %vm1155, %v1315, %v1316
    %v1318 = vrot.slane %v1298, 2
    %v1319 = vsel %vm1155, %v1316, %v1318
    %v1320 = vrot.slane %v1299, 2
    %v1321 = vsel %vm1155, %v1318, %v1320
    %1322 = vrot.lane.b32.xlu0 %v1310, 127
    %v1323 = vpop.permute.xlu0 %1322
    %1324 = vrot.lane.b32.xlu0 %v1312, 127
    %v1325 = vpop.permute.xlu0 %1324
    %1326 = vrot.lane.b32.xlu0 %v1314, 127
    %v1327 = vpop.permute.xlu0 %1326
    %1328 = vrot.lane.b32.xlu0 %v1313, 127
    %v1329 = vpop.permute.xlu0 %1328
    %1330 = vrot.lane.b32.xlu0 %v1317, 127
    %v1331 = vpop.permute.xlu0 %1330
    %1332 = vrot.lane.b32.xlu0 %v1319, 127
    %v1333 = vpop.permute.xlu0 %1332
    %1334 = vrot.lane.b32.xlu0 %v1321, 127
    %v1335 = vpop.permute.xlu0 %1334
    %1336 = vrot.lane.b32.xlu0 %v1320, 127
    %v1337 = vpop.permute.xlu0 %1336
    %v1346 = vadd.f32 %v1178, %v1323
    %v1347 = vadd.f32 %v1179, %v1325
    %v1348 = vadd.f32 %v1180, %v1327
    %v1349 = vadd.f32 %v1181, %v1329
    %v1350 = vadd.f32 %v1182, %v1331
    %v1351 = vadd.f32 %v1183, %v1333
    %v1352 = vadd.f32 %v1184, %v1335
    %v1353 = vadd.f32 %v1185, %v1337
    %1354 = vrot.lane.b32.xlu0 %v1288, 127
    %v1355 = vpop.permute.xlu0 %1354
    %s1356 = vtos %v1355
    %v1357 = vstv %s1356
    %v1359 = vmul.f32 %v193, %v1357
    %v1360 = vmul.f32 %v194, %v1357
    %v1361 = vmul.f32 %v195, %v1357
    %v1362 = vmul.f32 %v196, %v1357
    %v1363 = vmul.f32 %v197, %v1357
    %v1364 = vmul.f32 %v198, %v1357
    %v1365 = vmul.f32 %v199, %v1357
    %v1366 = vmul.f32 %v200, %v1357
    %v1375 = vrot.slane %v1359, 2
    %v1376 = vrot.slane %v1360, 2
    %v1377 = vsel %vm1155, %v1375, %v1376
    %v1378 = vrot.slane %v1361, 2
    %v1379 = vsel %vm1155, %v1376, %v1378
    %v1380 = vrot.slane %v1362, 2
    %v1381 = vsel %vm1155, %v1378, %v1380
    %v1382 = vrot.slane %v1363, 2
    %v1383 = vrot.slane %v1364, 2
    %v1384 = vsel %vm1155, %v1382, %v1383
    %v1385 = vrot.slane %v1365, 2
    %v1386 = vsel %vm1155, %v1383, %v1385
    %v1387 = vrot.slane %v1366, 2
    %v1388 = vsel %vm1155, %v1385, %v1387
    %1389 = vrot.lane.b32.xlu0 %v1377, 127
    %v1390 = vpop.permute.xlu0 %1389
    %1391 = vrot.lane.b32.xlu0 %v1379, 127
    %v1392 = vpop.permute.xlu0 %1391
    %1393 = vrot.lane.b32.xlu0 %v1381, 127
    %v1394 = vpop.permute.xlu0 %1393
    %1395 = vrot.lane.b32.xlu0 %v1380, 127
    %v1396 = vpop.permute.xlu0 %1395
    %1397 = vrot.lane.b32.xlu0 %v1384, 127
    %v1398 = vpop.permute.xlu0 %1397
    %1399 = vrot.lane.b32.xlu0 %v1386, 127
    %v1400 = vpop.permute.xlu0 %1399
    %1401 = vrot.lane.b32.xlu0 %v1388, 127
    %v1402 = vpop.permute.xlu0 %1401
    %1403 = vrot.lane.b32.xlu0 %v1387, 127
    %v1404 = vpop.permute.xlu0 %1403
    %v1413 = vadd.f32 %v1229, %v1390
    %v1414 = vadd.f32 %v1230, %v1392
    %v1415 = vadd.f32 %v1231, %v1394
    %v1416 = vadd.f32 %v1232, %v1396
    %v1417 = vadd.f32 %v1233, %v1398
    %v1418 = vadd.f32 %v1234, %v1400
    %v1419 = vadd.f32 %v1235, %v1402
    %v1420 = vadd.f32 %v1236, %v1404
    %1421 = vrot.lane.b32.xlu0 %v1288, 126
    %v1422 = vpop.permute.xlu0 %1421
    %s1423 = vtos %v1422
    %v1424 = vstv %s1423
    %v1426 = vmul.f32 %v193, %v1424
    %v1427 = vmul.f32 %v194, %v1424
    %v1428 = vmul.f32 %v195, %v1424
    %v1429 = vmul.f32 %v196, %v1424
    %v1430 = vmul.f32 %v197, %v1424
    %v1431 = vmul.f32 %v198, %v1424
    %v1432 = vmul.f32 %v199, %v1424
    %v1433 = vmul.f32 %v200, %v1424
    %v1442 = vrot.slane %v1426, 2
    %v1443 = vrot.slane %v1427, 2
    %v1444 = vsel %vm1155, %v1442, %v1443
    %v1445 = vrot.slane %v1428, 2
    %v1446 = vsel %vm1155, %v1443, %v1445
    %v1447 = vrot.slane %v1429, 2
    %v1448 = vsel %vm1155, %v1445, %v1447
    %v1449 = vrot.slane %v1430, 2
    %v1450 = vrot.slane %v1431, 2
    %v1451 = vsel %vm1155, %v1449, %v1450
    %v1452 = vrot.slane %v1432, 2
    %v1453 = vsel %vm1155, %v1450, %v1452
    %v1454 = vrot.slane %v1433, 2
    %v1455 = vsel %vm1155, %v1452, %v1454
    %1456 = vrot.lane.b32.xlu0 %v1444, 127
    %v1457 = vpop.permute.xlu0 %1456
    %1458 = vrot.lane.b32.xlu0 %v1446, 127
    %v1459 = vpop.permute.xlu0 %1458
    %1460 = vrot.lane.b32.xlu0 %v1448, 127
    %v1461 = vpop.permute.xlu0 %1460
    %1462 = vrot.lane.b32.xlu0 %v1447, 127
    %v1463 = vpop.permute.xlu0 %1462
    %1464 = vrot.lane.b32.xlu0 %v1451, 127
    %v1465 = vpop.permute.xlu0 %1464
    %1466 = vrot.lane.b32.xlu0 %v1453, 127
    %v1467 = vpop.permute.xlu0 %1466
    %1468 = vrot.lane.b32.xlu0 %v1455, 127
    %v1469 = vpop.permute.xlu0 %1468
    %1470 = vrot.lane.b32.xlu0 %v1454, 127
    %v1471 = vpop.permute.xlu0 %1470
    %v1480 = vadd.f32 %v1280, %v1457
    %v1481 = vadd.f32 %v1281, %v1459
    %v1482 = vadd.f32 %v1282, %v1461
    %v1483 = vadd.f32 %v1283, %v1463
    %v1484 = vadd.f32 %v1284, %v1465
    %v1485 = vadd.f32 %v1285, %v1467
    %v1486 = vadd.f32 %v1286, %v1469
    %v1487 = vadd.f32 %v1287, %v1471
    %s1489 = vtos %v202
    %v1490 = vstv %s1489
    %v1492 = vmul.f32 %v193, %v1490
    %v1493 = vmul.f32 %v194, %v1490
    %v1494 = vmul.f32 %v195, %v1490
    %v1495 = vmul.f32 %v196, %v1490
    %v1496 = vmul.f32 %v197, %v1490
    %v1497 = vmul.f32 %v198, %v1490
    %v1498 = vmul.f32 %v199, %v1490
    %v1499 = vmul.f32 %v200, %v1490
    %v1508 = vrot.slane %v1492, 2
    %v1509 = vrot.slane %v1493, 2
    %v1510 = vsel %vm1155, %v1508, %v1509
    %v1511 = vrot.slane %v1494, 2
    %v1512 = vsel %vm1155, %v1509, %v1511
    %v1513 = vrot.slane %v1495, 2
    %v1514 = vsel %vm1155, %v1511, %v1513
    %v1515 = vrot.slane %v1496, 2
    %v1516 = vrot.slane %v1497, 2
    %v1517 = vsel %vm1155, %v1515, %v1516
    %v1518 = vrot.slane %v1498, 2
    %v1519 = vsel %vm1155, %v1516, %v1518
    %v1520 = vrot.slane %v1499, 2
    %v1521 = vsel %vm1155, %v1518, %v1520
    %1522 = vrot.lane.b32.xlu0 %v1510, 126
    %v1523 = vpop.permute.xlu0 %1522
    %1524 = vrot.lane.b32.xlu0 %v1512, 126
    %v1525 = vpop.permute.xlu0 %1524
    %1526 = vrot.lane.b32.xlu0 %v1514, 126
    %v1527 = vpop.permute.xlu0 %1526
    %1528 = vrot.lane.b32.xlu0 %v1513, 126
    %v1529 = vpop.permute.xlu0 %1528
    %1530 = vrot.lane.b32.xlu0 %v1517, 126
    %v1531 = vpop.permute.xlu0 %1530
    %1532 = vrot.lane.b32.xlu0 %v1519, 126
    %v1533 = vpop.permute.xlu0 %1532
    %1534 = vrot.lane.b32.xlu0 %v1521, 126
    %v1535 = vpop.permute.xlu0 %1534
    %1536 = vrot.lane.b32.xlu0 %v1520, 126
    %v1537 = vpop.permute.xlu0 %1536
    %v1546 = vadd.f32 %v1346, %v1523
    %v1547 = vadd.f32 %v1347, %v1525
    %v1548 = vadd.f32 %v1348, %v1527
    %v1549 = vadd.f32 %v1349, %v1529
    %v1550 = vadd.f32 %v1350, %v1531
    %v1551 = vadd.f32 %v1351, %v1533
    %v1552 = vadd.f32 %v1352, %v1535
    %v1553 = vadd.f32 %v1353, %v1537
    %1554 = vrot.lane.b32.xlu0 %v202, 127
    %v1555 = vpop.permute.xlu0 %1554
    %s1556 = vtos %v1555
    %v1557 = vstv %s1556
    %v1559 = vmul.f32 %v193, %v1557
    %v1560 = vmul.f32 %v194, %v1557
    %v1561 = vmul.f32 %v195, %v1557
    %v1562 = vmul.f32 %v196, %v1557
    %v1563 = vmul.f32 %v197, %v1557
    %v1564 = vmul.f32 %v198, %v1557
    %v1565 = vmul.f32 %v199, %v1557
    %v1566 = vmul.f32 %v200, %v1557
    %v1575 = vrot.slane %v1559, 2
    %v1576 = vrot.slane %v1560, 2
    %v1577 = vsel %vm1155, %v1575, %v1576
    %v1578 = vrot.slane %v1561, 2
    %v1579 = vsel %vm1155, %v1576, %v1578
    %v1580 = vrot.slane %v1562, 2
    %v1581 = vsel %vm1155, %v1578, %v1580
    %v1582 = vrot.slane %v1563, 2
    %v1583 = vrot.slane %v1564, 2
    %v1584 = vsel %vm1155, %v1582, %v1583
    %v1585 = vrot.slane %v1565, 2
    %v1586 = vsel %vm1155, %v1583, %v1585
    %v1587 = vrot.slane %v1566, 2
    %v1588 = vsel %vm1155, %v1585, %v1587
    %1589 = vrot.lane.b32.xlu0 %v1577, 126
    %v1590 = vpop.permute.xlu0 %1589
    %1591 = vrot.lane.b32.xlu0 %v1579, 126
    %v1592 = vpop.permute.xlu0 %1591
    %1593 = vrot.lane.b32.xlu0 %v1581, 126
    %v1594 = vpop.permute.xlu0 %1593
    %1595 = vrot.lane.b32.xlu0 %v1580, 126
    %v1596 = vpop.permute.xlu0 %1595
    %1597 = vrot.lane.b32.xlu0 %v1584, 126
    %v1598 = vpop.permute.xlu0 %1597
    %1599 = vrot.lane.b32.xlu0 %v1586, 126
    %v1600 = vpop.permute.xlu0 %1599
    %1601 = vrot.lane.b32.xlu0 %v1588, 126
    %v1602 = vpop.permute.xlu0 %1601
    %1603 = vrot.lane.b32.xlu0 %v1587, 126
    %v1604 = vpop.permute.xlu0 %1603
    %v1613 = vadd.f32 %v1413, %v1590
    %v1614 = vadd.f32 %v1414, %v1592
    %v1615 = vadd.f32 %v1415, %v1594
    %v1616 = vadd.f32 %v1416, %v1596
    %v1617 = vadd.f32 %v1417, %v1598
    %v1618 = vadd.f32 %v1418, %v1600
    %v1619 = vadd.f32 %v1419, %v1602
    %v1620 = vadd.f32 %v1420, %v1604
    %1621 = vrot.lane.b32.xlu0 %v202, 126
    %v1622 = vpop.permute.xlu0 %1621
    %s1623 = vtos %v1622
    %v1624 = vstv %s1623
    %v1626 = vmul.f32 %v193, %v1624
    %v1627 = vmul.f32 %v194, %v1624
    %v1628 = vmul.f32 %v195, %v1624
    %v1629 = vmul.f32 %v196, %v1624
    %v1630 = vmul.f32 %v197, %v1624
    %v1631 = vmul.f32 %v198, %v1624
    %v1632 = vmul.f32 %v199, %v1624
    %v1633 = vmul.f32 %v200, %v1624
    %v1642 = vrot.slane %v1626, 2
    %v1643 = vrot.slane %v1627, 2
    %v1644 = vsel %vm1155, %v1642, %v1643
    %v1645 = vrot.slane %v1628, 2
    %v1646 = vsel %vm1155, %v1643, %v1645
    %v1647 = vrot.slane %v1629, 2
    %v1648 = vsel %vm1155, %v1645, %v1647
    %v1649 = vrot.slane %v1630, 2
    %v1650 = vrot.slane %v1631, 2
    %v1651 = vsel %vm1155, %v1649, %v1650
    %v1652 = vrot.slane %v1632, 2
    %v1653 = vsel %vm1155, %v1650, %v1652
    %v1654 = vrot.slane %v1633, 2
    %v1655 = vsel %vm1155, %v1652, %v1654
    %1656 = vrot.lane.b32.xlu0 %v1644, 126
    %v1657 = vpop.permute.xlu0 %1656
    %1658 = vrot.lane.b32.xlu0 %v1646, 126
    %v1659 = vpop.permute.xlu0 %1658
    %1660 = vrot.lane.b32.xlu0 %v1648, 126
    %v1661 = vpop.permute.xlu0 %1660
    %1662 = vrot.lane.b32.xlu0 %v1647, 126
    %v1663 = vpop.permute.xlu0 %1662
    %1664 = vrot.lane.b32.xlu0 %v1651, 126
    %v1665 = vpop.permute.xlu0 %1664
    %1666 = vrot.lane.b32.xlu0 %v1653, 126
    %v1667 = vpop.permute.xlu0 %1666
    %1668 = vrot.lane.b32.xlu0 %v1655, 126
    %v1669 = vpop.permute.xlu0 %1668
    %1670 = vrot.lane.b32.xlu0 %v1654, 126
    %v1671 = vpop.permute.xlu0 %1670
    %v1680 = vadd.f32 %v1480, %v1657
    %v1681 = vadd.f32 %v1481, %v1659
    %v1682 = vadd.f32 %v1482, %v1661
    %v1683 = vadd.f32 %v1483, %v1663
    %v1684 = vadd.f32 %v1484, %v1665
    %v1685 = vadd.f32 %v1485, %v1667
    %v1686 = vadd.f32 %v1486, %v1669
    %v1687 = vadd.f32 %v1487, %v1671
    %v1689 = vlaneseq
    %v1690 = vshrl.u32 %v1689, 7
    %v1691 = vsub.s32 0, %v1690
    %v1692 = vrot.slane %v203, %v1691
    %1693 = vset.pattern.permute.xlu0 0
    %1694 = vperm.xlu0 %1693, %v1692
    %v1695 = vpop.permute.xlu0 %1694
    %v1697 = vadd.f32 %v1546, %v1695
    %v1698 = vadd.f32 %v1547, %v1695
    %v1699 = vadd.f32 %v1548, %v1695
    %v1700 = vadd.f32 %v1549, %v1695
    %v1701 = vadd.f32 %v1550, %v1695
    %v1702 = vadd.f32 %v1551, %v1695
    %v1703 = vadd.f32 %v1552, %v1695
    %v1704 = vadd.f32 %v1553, %v1695
    %vm1705 = vcmask 211968
    %v1706 = vsel %vm1705, %v1697, 0.0
    %1707 = vadd.xlane.f32.xlu0 %v1706
    %v1708 = vpop.xlane.xlu0 %1707
    %v1709 = vsel %vm1705, %v1698, 0.0
    %1710 = vadd.xlane.f32.xlu0 %v1709
    %v1711 = vpop.xlane.xlu0 %1710
    %v1712 = vsel %vm1705, %v1699, 0.0
    %1713 = vadd.xlane.f32.xlu0 %v1712
    %v1714 = vpop.xlane.xlu0 %1713
    %vm1715 = vcmask 205824
    %v1716 = vsel %vm1715, %v1700, 0.0
    %1717 = vadd.xlane.f32.xlu0 %v1716
    %v1718 = vpop.xlane.xlu0 %1717
    %v1719 = vsel %vm1705, %v1701, 0.0
    %1720 = vadd.xlane.f32.xlu0 %v1719
    %v1721 = vpop.xlane.xlu0 %1720
    %v1722 = vsel %vm1705, %v1702, 0.0
    %1723 = vadd.xlane.f32.xlu0 %v1722
    %v1724 = vpop.xlane.xlu0 %1723
    %v1725 = vsel %vm1705, %v1703, 0.0
    %1726 = vadd.xlane.f32.xlu0 %v1725
    %v1727 = vpop.xlane.xlu0 %1726
    %v1728 = vsel %vm1715, %v1704, 0.0
    %1729 = vadd.xlane.f32.xlu0 %v1728
    %v1730 = vpop.xlane.xlu0 %1729
    %v1731 = vadd.f32 %v1708, %v1711
    %v1732 = vadd.f32 %v1731, %v1714
    %vm1733 = vcmask 1041408
    %v1734 = vsel %vm1733, %v1718, 0.0
    %v1735 = vadd.f32 %v1732, %v1734
    %v1736 = vrot.slane %v1735, 4
    %v1737 = vadd.f32 %v1735, %v1736
    %v1738 = vrot.slane %v1737, 2
    %v1739 = vadd.f32 %v1737, %v1738
    %v1740 = vrot.slane %v1739, 1
    %v1741 = vadd.f32 %v1739, %v1740
    %v1742 = vadd.f32 %v1721, %v1724
    %v1743 = vadd.f32 %v1742, %v1727
    %v1744 = vsel %vm1733, %v1730, 0.0
    %v1745 = vadd.f32 %v1743, %v1744
    %v1746 = vrot.slane %v1745, 4
    %v1747 = vadd.f32 %v1745, %v1746
    %v1748 = vrot.slane %v1747, 2
    %v1749 = vadd.f32 %v1747, %v1748
    %v1750 = vrot.slane %v1749, 1
    %v1751 = vadd.f32 %v1749, %v1750
    %v1752 = vadd.f32 %v1741, %v1751
    %v1753 = vmul.f32 %v1752, 0.000739645
    %v1754 = vsub.f32 %v1697, %v1753
    %v1755 = vsub.f32 %v1698, %v1753
    %v1756 = vsub.f32 %v1699, %v1753
    %v1757 = vsub.f32 %v1700, %v1753
    %v1758 = vsub.f32 %v1701, %v1753
    %v1759 = vsub.f32 %v1702, %v1753
    %v1760 = vsub.f32 %v1703, %v1753
    %v1761 = vsub.f32 %v1704, %v1753
    %v1762 = vmul.f32 %v1754, %v1754
    %v1763 = vmul.f32 %v1755, %v1755
    %v1764 = vmul.f32 %v1756, %v1756
    %v1765 = vmul.f32 %v1757, %v1757
    %v1766 = vmul.f32 %v1758, %v1758
    %v1767 = vmul.f32 %v1759, %v1759
    %v1768 = vmul.f32 %v1760, %v1760
    %v1769 = vmul.f32 %v1761, %v1761
    %v1770 = vsel %vm1705, %v1762, 0.0
    %1771 = vadd.xlane.f32.xlu0 %v1770
    %v1772 = vpop.xlane.xlu0 %1771
    %v1773 = vsel %vm1705, %v1763, 0.0
    %1774 = vadd.xlane.f32.xlu0 %v1773
    %v1775 = vpop.xlane.xlu0 %1774
    %v1776 = vsel %vm1705, %v1764, 0.0
    %1777 = vadd.xlane.f32.xlu0 %v1776
    %v1778 = vpop.xlane.xlu0 %1777
    %v1779 = vsel %vm1715, %v1765, 0.0
    %1780 = vadd.xlane.f32.xlu0 %v1779
    %v1781 = vpop.xlane.xlu0 %1780
    %v1782 = vsel %vm1705, %v1766, 0.0
    %1783 = vadd.xlane.f32.xlu0 %v1782
    %v1784 = vpop.xlane.xlu0 %1783
    %v1785 = vsel %vm1705, %v1767, 0.0
    %1786 = vadd.xlane.f32.xlu0 %v1785
    %v1787 = vpop.xlane.xlu0 %1786
    %v1788 = vsel %vm1705, %v1768, 0.0
    %1789 = vadd.xlane.f32.xlu0 %v1788
    %v1790 = vpop.xlane.xlu0 %1789
    %v1791 = vsel %vm1715, %v1769, 0.0
    %1792 = vadd.xlane.f32.xlu0 %v1791
    %v1793 = vpop.xlane.xlu0 %1792
    %v1794 = vadd.f32 %v1772, %v1775
    %v1795 = vadd.f32 %v1794, %v1778
    %v1796 = vsel %vm1733, %v1781, 0.0
    %v1797 = vadd.f32 %v1795, %v1796
    %v1798 = vrot.slane %v1797, 4
    %v1799 = vadd.f32 %v1797, %v1798
    %v1800 = vrot.slane %v1799, 2
    %v1801 = vadd.f32 %v1799, %v1800
    %v1802 = vrot.slane %v1801, 1
    %v1803 = vadd.f32 %v1801, %v1802
    %v1804 = vadd.f32 %v1784, %v1787
    %v1805 = vadd.f32 %v1804, %v1790
    %v1806 = vsel %vm1733, %v1793, 0.0
    %v1807 = vadd.f32 %v1805, %v1806
    %v1808 = vrot.slane %v1807, 4
    %v1809 = vadd.f32 %v1807, %v1808
    %v1810 = vrot.slane %v1809, 2
    %v1811 = vadd.f32 %v1809, %v1810
    %v1812 = vrot.slane %v1811, 1
    %v1813 = vadd.f32 %v1811, %v1812
    %v1814 = vadd.f32 %v1803, %v1813
    %v1815 = vmul.f32 %v1814, 0.000739645
    %v1816 = vadd.f32 %v1815, 1e-05
    %v1817 = vrsqrt.pop %v1816
    %v1818 = vmul.f32 %v1754, %v1817
    %v1819 = vmul.f32 %v1755, %v1817
    %v1820 = vmul.f32 %v1756, %v1817
    %v1821 = vmul.f32 %v1757, %v1817
    %v1822 = vmul.f32 %v1758, %v1817
    %v1823 = vmul.f32 %v1759, %v1817
    %v1824 = vmul.f32 %v1760, %v1817
    %v1825 = vmul.f32 %v1761, %v1817
    %v1826 = vmax.f32 %v1818, 0.0
    %v1827 = vmax.f32 %v1819, 0.0
    %v1828 = vmax.f32 %v1820, 0.0
    %v1829 = vmax.f32 %v1821, 0.0
    %v1830 = vmax.f32 %v1822, 0.0
    %v1831 = vmax.f32 %v1823, 0.0
    %v1832 = vmax.f32 %v1824, 0.0
    %v1833 = vmax.f32 %v1825, 0.0
    %1834 = vset.pattern.permute.xlu0 1
    %1835 = vperm.xlu0 %1834, %v1692
    %v1836 = vpop.permute.xlu0 %1835
    %v1838 = vadd.f32 %v1613, %v1836
    %v1839 = vadd.f32 %v1614, %v1836
    %v1840 = vadd.f32 %v1615, %v1836
    %v1841 = vadd.f32 %v1616, %v1836
    %v1842 = vadd.f32 %v1617, %v1836
    %v1843 = vadd.f32 %v1618, %v1836
    %v1844 = vadd.f32 %v1619, %v1836
    %v1845 = vadd.f32 %v1620, %v1836
    %v1846 = vsel %vm1705, %v1838, 0.0
    %1847 = vadd.xlane.f32.xlu0 %v1846
    %v1848 = vpop.xlane.xlu0 %1847
    %v1849 = vsel %vm1705, %v1839, 0.0
    %1850 = vadd.xlane.f32.xlu0 %v1849
    %v1851 = vpop.xlane.xlu0 %1850
    %v1852 = vsel %vm1705, %v1840, 0.0
    %1853 = vadd.xlane.f32.xlu0 %v1852
    %v1854 = vpop.xlane.xlu0 %1853
    %v1855 = vsel %vm1715, %v1841, 0.0
    %1856 = vadd.xlane.f32.xlu0 %v1855
    %v1857 = vpop.xlane.xlu0 %1856
    %v1858 = vsel %vm1705, %v1842, 0.0
    %1859 = vadd.xlane.f32.xlu0 %v1858
    %v1860 = vpop.xlane.xlu0 %1859
    %v1861 = vsel %vm1705, %v1843, 0.0
    %1862 = vadd.xlane.f32.xlu0 %v1861
    %v1863 = vpop.xlane.xlu0 %1862
    %v1864 = vsel %vm1705, %v1844, 0.0
    %1865 = vadd.xlane.f32.xlu0 %v1864
    %v1866 = vpop.xlane.xlu0 %1865
    %v1867 = vsel %vm1715, %v1845, 0.0
    %1868 = vadd.xlane.f32.xlu0 %v1867
    %v1869 = vpop.xlane.xlu0 %1868
    %v1870 = vadd.f32 %v1848, %v1851
    %v1871 = vadd.f32 %v1870, %v1854
    %v1872 = vsel %vm1733, %v1857, 0.0
    %v1873 = vadd.f32 %v1871, %v1872
    %v1874 = vrot.slane %v1873, 4
    %v1875 = vadd.f32 %v1873, %v1874
    %v1876 = vrot.slane %v1875, 2
    %v1877 = vadd.f32 %v1875, %v1876
    %v1878 = vrot.slane %v1877, 1
    %v1879 = vadd.f32 %v1877, %v1878
    %v1880 = vadd.f32 %v1860, %v1863
    %v1881 = vadd.f32 %v1880, %v1866
    %v1882 = vsel %vm1733, %v1869, 0.0
    %v1883 = vadd.f32 %v1881, %v1882
    %v1884 = vrot.slane %v1883, 4
    %v1885 = vadd.f32 %v1883, %v1884
    %v1886 = vrot.slane %v1885, 2
    %v1887 = vadd.f32 %v1885, %v1886
    %v1888 = vrot.slane %v1887, 1
    %v1889 = vadd.f32 %v1887, %v1888
    %v1890 = vadd.f32 %v1879, %v1889
    %v1891 = vmul.f32 %v1890, 0.000739645
    %v1892 = vsub.f32 %v1838, %v1891
    %v1893 = vsub.f32 %v1839, %v1891
    %v1894 = vsub.f32 %v1840, %v1891
    %v1895 = vsub.f32 %v1841, %v1891
    %v1896 = vsub.f32 %v1842, %v1891
    %v1897 = vsub.f32 %v1843, %v1891
    %v1898 = vsub.f32 %v1844, %v1891
    %v1899 = vsub.f32 %v1845, %v1891
    %v1900 = vmul.f32 %v1892, %v1892
    %v1901 = vmul.f32 %v1893, %v1893
    %v1902 = vmul.f32 %v1894, %v1894
    %v1903 = vmul.f32 %v1895, %v1895
    %v1904 = vmul.f32 %v1896, %v1896
    %v1905 = vmul.f32 %v1897, %v1897
    %v1906 = vmul.f32 %v1898, %v1898
    %v1907 = vmul.f32 %v1899, %v1899
    %v1908 = vsel %vm1705, %v1900, 0.0
    %1909 = vadd.xlane.f32.xlu0 %v1908
    %v1910 = vpop.xlane.xlu0 %1909
    %v1911 = vsel %vm1705, %v1901, 0.0
    %1912 = vadd.xlane.f32.xlu0 %v1911
    %v1913 = vpop.xlane.xlu0 %1912
    %v1914 = vsel %vm1705, %v1902, 0.0
    %1915 = vadd.xlane.f32.xlu0 %v1914
    %v1916 = vpop.xlane.xlu0 %1915
    %v1917 = vsel %vm1715, %v1903, 0.0
    %1918 = vadd.xlane.f32.xlu0 %v1917
    %v1919 = vpop.xlane.xlu0 %1918
    %v1920 = vsel %vm1705, %v1904, 0.0
    %1921 = vadd.xlane.f32.xlu0 %v1920
    %v1922 = vpop.xlane.xlu0 %1921
    %v1923 = vsel %vm1705, %v1905, 0.0
    %1924 = vadd.xlane.f32.xlu0 %v1923
    %v1925 = vpop.xlane.xlu0 %1924
    %v1926 = vsel %vm1705, %v1906, 0.0
    %1927 = vadd.xlane.f32.xlu0 %v1926
    %v1928 = vpop.xlane.xlu0 %1927
    %v1929 = vsel %vm1715, %v1907, 0.0
    %1930 = vadd.xlane.f32.xlu0 %v1929
    %v1931 = vpop.xlane.xlu0 %1930
    %v1932 = vadd.f32 %v1910, %v1913
    %v1933 = vadd.f32 %v1932, %v1916
    %v1934 = vsel %vm1733, %v1919, 0.0
    %v1935 = vadd.f32 %v1933, %v1934
    %v1936 = vrot.slane %v1935, 4
    %v1937 = vadd.f32 %v1935, %v1936
    %v1938 = vrot.slane %v1937, 2
    %v1939 = vadd.f32 %v1937, %v1938
    %v1940 = vrot.slane %v1939, 1
    %v1941 = vadd.f32 %v1939, %v1940
    %v1942 = vadd.f32 %v1922, %v1925
    %v1943 = vadd.f32 %v1942, %v1928
    %v1944 = vsel %vm1733, %v1931, 0.0
    %v1945 = vadd.f32 %v1943, %v1944
    %v1946 = vrot.slane %v1945, 4
    %v1947 = vadd.f32 %v1945, %v1946
    %v1948 = vrot.slane %v1947, 2
    %v1949 = vadd.f32 %v1947, %v1948
    %v1950 = vrot.slane %v1949, 1
    %v1951 = vadd.f32 %v1949, %v1950
    %v1952 = vadd.f32 %v1941, %v1951
    %v1953 = vmul.f32 %v1952, 0.000739645
    %v1954 = vadd.f32 %v1953, 1e-05
    %v1955 = vrsqrt.pop %v1954
    %v1956 = vmul.f32 %v1892, %v1955
    %v1957 = vmul.f32 %v1893, %v1955
    %v1958 = vmul.f32 %v1894, %v1955
    %v1959 = vmul.f32 %v1895, %v1955
    %v1960 = vmul.f32 %v1896, %v1955
    %v1961 = vmul.f32 %v1897, %v1955
    %v1962 = vmul.f32 %v1898, %v1955
    %v1963 = vmul.f32 %v1899, %v1955
    %v1964 = vmax.f32 %v1956, 0.0
    %v1965 = vmax.f32 %v1957, 0.0
    %v1966 = vmax.f32 %v1958, 0.0
    %v1967 = vmax.f32 %v1959, 0.0
    %v1968 = vmax.f32 %v1960, 0.0
    %v1969 = vmax.f32 %v1961, 0.0
    %v1970 = vmax.f32 %v1962, 0.0
    %v1971 = vmax.f32 %v1963, 0.0
    %1972 = vset.pattern.permute.xlu0 2
    %1973 = vperm.xlu0 %1972, %v1692
    %v1974 = vpop.permute.xlu0 %1973
    %v1976 = vadd.f32 %v1680, %v1974
    %v1977 = vadd.f32 %v1681, %v1974
    %v1978 = vadd.f32 %v1682, %v1974
    %v1979 = vadd.f32 %v1683, %v1974
    %v1980 = vadd.f32 %v1684, %v1974
    %v1981 = vadd.f32 %v1685, %v1974
    %v1982 = vadd.f32 %v1686, %v1974
    %v1983 = vadd.f32 %v1687, %v1974
    %v1984 = vsel %vm1705, %v1976, 0.0
    %1985 = vadd.xlane.f32.xlu0 %v1984
    %v1986 = vpop.xlane.xlu0 %1985
    %v1987 = vsel %vm1705, %v1977, 0.0
    %1988 = vadd.xlane.f32.xlu0 %v1987
    %v1989 = vpop.xlane.xlu0 %1988
    %v1990 = vsel %vm1705, %v1978, 0.0
    %1991 = vadd.xlane.f32.xlu0 %v1990
    %v1992 = vpop.xlane.xlu0 %1991
    %v1993 = vsel %vm1715, %v1979, 0.0
    %1994 = vadd.xlane.f32.xlu0 %v1993
    %v1995 = vpop.xlane.xlu0 %1994
    %v1996 = vsel %vm1705, %v1980, 0.0
    %1997 = vadd.xlane.f32.xlu0 %v1996
    %v1998 = vpop.xlane.xlu0 %1997
    %v1999 = vsel %vm1705, %v1981, 0.0
    %2000 = vadd.xlane.f32.xlu0 %v1999
    %v2001 = vpop.xlane.xlu0 %2000
    %v2002 = vsel %vm1705, %v1982, 0.0
    %2003 = vadd.xlane.f32.xlu0 %v2002
    %v2004 = vpop.xlane.xlu0 %2003
    %v2005 = vsel %vm1715, %v1983, 0.0
    %2006 = vadd.xlane.f32.xlu0 %v2005
    %v2007 = vpop.xlane.xlu0 %2006
    %v2008 = vadd.f32 %v1986, %v1989
    %v2009 = vadd.f32 %v2008, %v1992
    %v2010 = vsel %vm1733, %v1995, 0.0
    %v2011 = vadd.f32 %v2009, %v2010
    %v2012 = vrot.slane %v2011, 4
    %v2013 = vadd.f32 %v2011, %v2012
    %v2014 = vrot.slane %v2013, 2
    %v2015 = vadd.f32 %v2013, %v2014
    %v2016 = vrot.slane %v2015, 1
    %v2017 = vadd.f32 %v2015, %v2016
    %v2018 = vadd.f32 %v1998, %v2001
    %v2019 = vadd.f32 %v2018, %v2004
    %v2020 = vsel %vm1733, %v2007, 0.0
    %v2021 = vadd.f32 %v2019, %v2020
    %v2022 = vrot.slane %v2021, 4
    %v2023 = vadd.f32 %v2021, %v2022
    %v2024 = vrot.slane %v2023, 2
    %v2025 = vadd.f32 %v2023, %v2024
    %v2026 = vrot.slane %v2025, 1
    %v2027 = vadd.f32 %v2025, %v2026
    %v2028 = vadd.f32 %v2017, %v2027
    %v2029 = vmul.f32 %v2028, 0.000739645
    %v2030 = vsub.f32 %v1976, %v2029
    %v2031 = vsub.f32 %v1977, %v2029
    %v2032 = vsub.f32 %v1978, %v2029
    %v2033 = vsub.f32 %v1979, %v2029
    %v2034 = vsub.f32 %v1980, %v2029
    %v2035 = vsub.f32 %v1981, %v2029
    %v2036 = vsub.f32 %v1982, %v2029
    %v2037 = vsub.f32 %v1983, %v2029
    %v2038 = vmul.f32 %v2030, %v2030
    %v2039 = vmul.f32 %v2031, %v2031
    %v2040 = vmul.f32 %v2032, %v2032
    %v2041 = vmul.f32 %v2033, %v2033
    %v2042 = vmul.f32 %v2034, %v2034
    %v2043 = vmul.f32 %v2035, %v2035
    %v2044 = vmul.f32 %v2036, %v2036
    %v2045 = vmul.f32 %v2037, %v2037
    %v2046 = vsel %vm1705, %v2038, 0.0
    %2047 = vadd.xlane.f32.xlu0 %v2046
    %v2048 = vpop.xlane.xlu0 %2047
    %v2049 = vsel %vm1705, %v2039, 0.0
    %2050 = vadd.xlane.f32.xlu0 %v2049
    %v2051 = vpop.xlane.xlu0 %2050
    %v2052 = vsel %vm1705, %v2040, 0.0
    %2053 = vadd.xlane.f32.xlu0 %v2052
    %v2054 = vpop.xlane.xlu0 %2053
    %v2055 = vsel %vm1715, %v2041, 0.0
    %2056 = vadd.xlane.f32.xlu0 %v2055
    %v2057 = vpop.xlane.xlu0 %2056
    %v2058 = vsel %vm1705, %v2042, 0.0
    %2059 = vadd.xlane.f32.xlu0 %v2058
    %v2060 = vpop.xlane.xlu0 %2059
    %v2061 = vsel %vm1705, %v2043, 0.0
    %2062 = vadd.xlane.f32.xlu0 %v2061
    %v2063 = vpop.xlane.xlu0 %2062
    %v2064 = vsel %vm1705, %v2044, 0.0
    %2065 = vadd.xlane.f32.xlu0 %v2064
    %v2066 = vpop.xlane.xlu0 %2065
    %v2067 = vsel %vm1715, %v2045, 0.0
    %2068 = vadd.xlane.f32.xlu0 %v2067
    %v2069 = vpop.xlane.xlu0 %2068
    %v2070 = vadd.f32 %v2048, %v2051
    %v2071 = vadd.f32 %v2070, %v2054
    %v2072 = vsel %vm1733, %v2057, 0.0
    %v2073 = vadd.f32 %v2071, %v2072
    %v2074 = vrot.slane %v2073, 4
    %v2075 = vadd.f32 %v2073, %v2074
    %v2076 = vrot.slane %v2075, 2
    %v2077 = vadd.f32 %v2075, %v2076
    %v2078 = vrot.slane %v2077, 1
    %v2079 = vadd.f32 %v2077, %v2078
    %v2080 = vadd.f32 %v2060, %v2063
    %v2081 = vadd.f32 %v2080, %v2066
    %v2082 = vsel %vm1733, %v2069, 0.0
    %v2083 = vadd.f32 %v2081, %v2082
    %v2084 = vrot.slane %v2083, 4
    %v2085 = vadd.f32 %v2083, %v2084
    %v2086 = vrot.slane %v2085, 2
    %v2087 = vadd.f32 %v2085, %v2086
    %v2088 = vrot.slane %v2087, 1
    %v2089 = vadd.f32 %v2087, %v2088
    %v2090 = vadd.f32 %v2079, %v2089
    %v2091 = vmul.f32 %v2090, 0.000739645
    %v2092 = vadd.f32 %v2091, 1e-05
    %v2093 = vrsqrt.pop %v2092
    %v2094 = vmul.f32 %v2030, %v2093
    %v2095 = vmul.f32 %v2031, %v2093
    %v2096 = vmul.f32 %v2032, %v2093
    %v2097 = vmul.f32 %v2033, %v2093
    %v2098 = vmul.f32 %v2034, %v2093
    %v2099 = vmul.f32 %v2035, %v2093
    %v2100 = vmul.f32 %v2036, %v2093
    %v2101 = vmul.f32 %v2037, %v2093
    %v2102 = vmax.f32 %v2094, 0.0
    %v2103 = vmax.f32 %v2095, 0.0
    %v2104 = vmax.f32 %v2096, 0.0
    %v2105 = vmax.f32 %v2097, 0.0
    %v2106 = vmax.f32 %v2098, 0.0
    %v2107 = vmax.f32 %v2099, 0.0
    %v2108 = vmax.f32 %v2100, 0.0
    %v2109 = vmax.f32 %v2101, 0.0
    %v2110 = vsel %vm1705, %v1826, inf
    %2111 = vmin.xlane.f32.xlu0 %v2110
    %v2112 = vpop.xlane.xlu0 %2111
    %v2113 = vsel %vm1705, %v1827, inf
    %2114 = vmin.xlane.f32.xlu0 %v2113
    %v2115 = vpop.xlane.xlu0 %2114
    %v2116 = vsel %vm1705, %v1828, inf
    %2117 = vmin.xlane.f32.xlu0 %v2116
    %v2118 = vpop.xlane.xlu0 %2117
    %v2119 = vsel %vm1715, %v1829, inf
    %2120 = vmin.xlane.f32.xlu0 %v2119
    %v2121 = vpop.xlane.xlu0 %2120
    %v2122 = vsel %vm1705, %v1830, inf
    %2123 = vmin.xlane.f32.xlu0 %v2122
    %v2124 = vpop.xlane.xlu0 %2123
    %v2125 = vsel %vm1705, %v1831, inf
    %2126 = vmin.xlane.f32.xlu0 %v2125
    %v2127 = vpop.xlane.xlu0 %2126
    %v2128 = vsel %vm1705, %v1832, inf
    %2129 = vmin.xlane.f32.xlu0 %v2128
    %v2130 = vpop.xlane.xlu0 %2129
    %v2131 = vsel %vm1715, %v1833, inf
    %2132 = vmin.xlane.f32.xlu0 %v2131
    %v2133 = vpop.xlane.xlu0 %2132
    %v2134 = vmin.f32 %v2112, %v2118
    %v2135 = vsel %vm1733, %v2121, inf
    %v2136 = vmin.f32 %v2115, %v2135
    %v2137 = vmin.f32 %v2134, %v2136
    %v2138 = vrot.slane %v2137, 4
    %v2139 = vmin.f32 %v2137, %v2138
    %v2140 = vrot.slane %v2139, 2
    %v2141 = vmin.f32 %v2139, %v2140
    %v2142 = vrot.slane %v2141, 1
    %v2143 = vmin.f32 %v2141, %v2142
    %v2144 = vmin.f32 %v2124, %v2130
    %v2145 = vsel %vm1733, %v2133, inf
    %v2146 = vmin.f32 %v2127, %v2145
    %v2147 = vmin.f32 %v2144, %v2146
    %v2148 = vrot.slane %v2147, 4
    %v2149 = vmin.f32 %v2147, %v2148
    %v2150 = vrot.slane %v2149, 2
    %v2151 = vmin.f32 %v2149, %v2150
    %v2152 = vrot.slane %v2151, 1
    %v2153 = vmin.f32 %v2151, %v2152
    %v2154 = vsel %vm1705, %v1964, inf
    %2155 = vmin.xlane.f32.xlu0 %v2154
    %v2156 = vpop.xlane.xlu0 %2155
    %v2157 = vsel %vm1705, %v1965, inf
    %2158 = vmin.xlane.f32.xlu0 %v2157
    %v2159 = vpop.xlane.xlu0 %2158
    %v2160 = vsel %vm1705, %v1966, inf
    %2161 = vmin.xlane.f32.xlu0 %v2160
    %v2162 = vpop.xlane.xlu0 %2161
    %v2163 = vsel %vm1715, %v1967, inf
    %2164 = vmin.xlane.f32.xlu0 %v2163
    %v2165 = vpop.xlane.xlu0 %2164
    %v2166 = vsel %vm1705, %v1968, inf
    %2167 = vmin.xlane.f32.xlu0 %v2166
    %v2168 = vpop.xlane.xlu0 %2167
    %v2169 = vsel %vm1705, %v1969, inf
    %2170 = vmin.xlane.f32.xlu0 %v2169
    %v2171 = vpop.xlane.xlu0 %2170
    %v2172 = vsel %vm1705, %v1970, inf
    %2173 = vmin.xlane.f32.xlu0 %v2172
    %v2174 = vpop.xlane.xlu0 %2173
    %v2175 = vsel %vm1715, %v1971, inf
    %2176 = vmin.xlane.f32.xlu0 %v2175
    %v2177 = vpop.xlane.xlu0 %2176
    %v2178 = vmin.f32 %v2156, %v2162
    %v2179 = vsel %vm1733, %v2165, inf
    %v2180 = vmin.f32 %v2159, %v2179
    %v2181 = vmin.f32 %v2178, %v2180
    %v2182 = vrot.slane %v2181, 4
    %v2183 = vmin.f32 %v2181, %v2182
    %v2184 = vrot.slane %v2183, 2
    %v2185 = vmin.f32 %v2183, %v2184
    %v2186 = vrot.slane %v2185, 1
    %v2187 = vmin.f32 %v2185, %v2186
    %v2188 = vmin.f32 %v2168, %v2174
    %v2189 = vsel %vm1733, %v2177, inf
    %v2190 = vmin.f32 %v2171, %v2189
    %v2191 = vmin.f32 %v2188, %v2190
    %v2192 = vrot.slane %v2191, 4
    %v2193 = vmin.f32 %v2191, %v2192
    %v2194 = vrot.slane %v2193, 2
    %v2195 = vmin.f32 %v2193, %v2194
    %v2196 = vrot.slane %v2195, 1
    %v2197 = vmin.f32 %v2195, %v2196
    %v2198 = vsel %vm1705, %v2102, inf
    %2199 = vmin.xlane.f32.xlu0 %v2198
    %v2200 = vpop.xlane.xlu0 %2199
    %v2201 = vsel %vm1705, %v2103, inf
    %2202 = vmin.xlane.f32.xlu0 %v2201
    %v2203 = vpop.xlane.xlu0 %2202
    %v2204 = vsel %vm1705, %v2104, inf
    %2205 = vmin.xlane.f32.xlu0 %v2204
    %v2206 = vpop.xlane.xlu0 %2205
    %v2207 = vsel %vm1715, %v2105, inf
    %2208 = vmin.xlane.f32.xlu0 %v2207
    %v2209 = vpop.xlane.xlu0 %2208
    %v2210 = vsel %vm1705, %v2106, inf
    %2211 = vmin.xlane.f32.xlu0 %v2210
    %v2212 = vpop.xlane.xlu0 %2211
    %v2213 = vsel %vm1705, %v2107, inf
    %2214 = vmin.xlane.f32.xlu0 %v2213
    %v2215 = vpop.xlane.xlu0 %2214
    %v2216 = vsel %vm1705, %v2108, inf
    %2217 = vmin.xlane.f32.xlu0 %v2216
    %v2218 = vpop.xlane.xlu0 %2217
    %v2219 = vsel %vm1715, %v2109, inf
    %2220 = vmin.xlane.f32.xlu0 %v2219
    %v2221 = vpop.xlane.xlu0 %2220
    %v2222 = vmin.f32 %v2200, %v2206
    %v2223 = vsel %vm1733, %v2209, inf
    %v2224 = vmin.f32 %v2203, %v2223
    %v2225 = vmin.f32 %v2222, %v2224
    %v2226 = vrot.slane %v2225, 4
    %v2227 = vmin.f32 %v2225, %v2226
    %v2228 = vrot.slane %v2227, 2
    %v2229 = vmin.f32 %v2227, %v2228
    %v2230 = vrot.slane %v2229, 1
    %v2231 = vmin.f32 %v2229, %v2230
    %v2232 = vmin.f32 %v2212, %v2218
    %v2233 = vsel %vm1733, %v2221, inf
    %v2234 = vmin.f32 %v2215, %v2233
    %v2235 = vmin.f32 %v2232, %v2234
    %v2236 = vrot.slane %v2235, 4
    %v2237 = vmin.f32 %v2235, %v2236
    %v2238 = vrot.slane %v2237, 2
    %v2239 = vmin.f32 %v2237, %v2238
    %v2240 = vrot.slane %v2239, 1
    %v2241 = vmin.f32 %v2239, %v2240
    %v2242 = vsel %vm1705, %v1826, -inf
    %2243 = vmax.xlane.f32.xlu0 %v2242
    %v2244 = vpop.xlane.xlu0 %2243
    %v2245 = vsel %vm1705, %v1827, -inf
    %2246 = vmax.xlane.f32.xlu0 %v2245
    %v2247 = vpop.xlane.xlu0 %2246
    %v2248 = vsel %vm1705, %v1828, -inf
    %2249 = vmax.xlane.f32.xlu0 %v2248
    %v2250 = vpop.xlane.xlu0 %2249
    %v2251 = vsel %vm1715, %v1829, -inf
    %2252 = vmax.xlane.f32.xlu0 %v2251
    %v2253 = vpop.xlane.xlu0 %2252
    %v2254 = vsel %vm1705, %v1830, -inf
    %2255 = vmax.xlane.f32.xlu0 %v2254
    %v2256 = vpop.xlane.xlu0 %2255
    %v2257 = vsel %vm1705, %v1831, -inf
    %2258 = vmax.xlane.f32.xlu0 %v2257
    %v2259 = vpop.xlane.xlu0 %2258
    %v2260 = vsel %vm1705, %v1832, -inf
    %2261 = vmax.xlane.f32.xlu0 %v2260
    %v2262 = vpop.xlane.xlu0 %2261
    %v2263 = vsel %vm1715, %v1833, -inf
    %2264 = vmax.xlane.f32.xlu0 %v2263
    %v2265 = vpop.xlane.xlu0 %2264
    %v2266 = vmax.f32 %v2244, %v2250
    %v2267 = vsel %vm1733, %v2253, -inf
    %v2268 = vmax.f32 %v2247, %v2267
    %v2269 = vmax.f32 %v2266, %v2268
    %v2270 = vrot.slane %v2269, 4
    %v2271 = vmax.f32 %v2269, %v2270
    %v2272 = vrot.slane %v2271, 2
    %v2273 = vmax.f32 %v2271, %v2272
    %v2274 = vrot.slane %v2273, 1
    %v2275 = vmax.f32 %v2273, %v2274
    %v2276 = vmax.f32 %v2256, %v2262
    %v2277 = vsel %vm1733, %v2265, -inf
    %v2278 = vmax.f32 %v2259, %v2277
    %v2279 = vmax.f32 %v2276, %v2278
    %v2280 = vrot.slane %v2279, 4
    %v2281 = vmax.f32 %v2279, %v2280
    %v2282 = vrot.slane %v2281, 2
    %v2283 = vmax.f32 %v2281, %v2282
    %v2284 = vrot.slane %v2283, 1
    %v2285 = vmax.f32 %v2283, %v2284
    %v2286 = vsel %vm1705, %v1964, -inf
    %2287 = vmax.xlane.f32.xlu0 %v2286
    %v2288 = vpop.xlane.xlu0 %2287
    %v2289 = vsel %vm1705, %v1965, -inf
    %2290 = vmax.xlane.f32.xlu0 %v2289
    %v2291 = vpop.xlane.xlu0 %2290
    %v2292 = vsel %vm1705, %v1966, -inf
    %2293 = vmax.xlane.f32.xlu0 %v2292
    %v2294 = vpop.xlane.xlu0 %2293
    %v2295 = vsel %vm1715, %v1967, -inf
    %2296 = vmax.xlane.f32.xlu0 %v2295
    %v2297 = vpop.xlane.xlu0 %2296
    %v2298 = vsel %vm1705, %v1968, -inf
    %2299 = vmax.xlane.f32.xlu0 %v2298
    %v2300 = vpop.xlane.xlu0 %2299
    %v2301 = vsel %vm1705, %v1969, -inf
    %2302 = vmax.xlane.f32.xlu0 %v2301
    %v2303 = vpop.xlane.xlu0 %2302
    %v2304 = vsel %vm1705, %v1970, -inf
    %2305 = vmax.xlane.f32.xlu0 %v2304
    %v2306 = vpop.xlane.xlu0 %2305
    %v2307 = vsel %vm1715, %v1971, -inf
    %2308 = vmax.xlane.f32.xlu0 %v2307
    %v2309 = vpop.xlane.xlu0 %2308
    %v2310 = vmax.f32 %v2288, %v2294
    %v2311 = vsel %vm1733, %v2297, -inf
    %v2312 = vmax.f32 %v2291, %v2311
    %v2313 = vmax.f32 %v2310, %v2312
    %v2314 = vrot.slane %v2313, 4
    %v2315 = vmax.f32 %v2313, %v2314
    %v2316 = vrot.slane %v2315, 2
    %v2317 = vmax.f32 %v2315, %v2316
    %v2318 = vrot.slane %v2317, 1
    %v2319 = vmax.f32 %v2317, %v2318
    %v2320 = vmax.f32 %v2300, %v2306
    %v2321 = vsel %vm1733, %v2309, -inf
    %v2322 = vmax.f32 %v2303, %v2321
    %v2323 = vmax.f32 %v2320, %v2322
    %v2324 = vrot.slane %v2323, 4
    %v2325 = vmax.f32 %v2323, %v2324
    %v2326 = vrot.slane %v2325, 2
    %v2327 = vmax.f32 %v2325, %v2326
    %v2328 = vrot.slane %v2327, 1
    %v2329 = vmax.f32 %v2327, %v2328
    %v2330 = vsel %vm1705, %v2102, -inf
    %2331 = vmax.xlane.f32.xlu0 %v2330
    %v2332 = vpop.xlane.xlu0 %2331
    %v2333 = vsel %vm1705, %v2103, -inf
    %2334 = vmax.xlane.f32.xlu0 %v2333
    %v2335 = vpop.xlane.xlu0 %2334
    %v2336 = vsel %vm1705, %v2104, -inf
    %2337 = vmax.xlane.f32.xlu0 %v2336
    %v2338 = vpop.xlane.xlu0 %2337
    %v2339 = vsel %vm1715, %v2105, -inf
    %2340 = vmax.xlane.f32.xlu0 %v2339
    %v2341 = vpop.xlane.xlu0 %2340
    %v2342 = vsel %vm1705, %v2106, -inf
    %2343 = vmax.xlane.f32.xlu0 %v2342
    %v2344 = vpop.xlane.xlu0 %2343
    %v2345 = vsel %vm1705, %v2107, -inf
    %2346 = vmax.xlane.f32.xlu0 %v2345
    %v2347 = vpop.xlane.xlu0 %2346
    %v2348 = vsel %vm1705, %v2108, -inf
    %2349 = vmax.xlane.f32.xlu0 %v2348
    %v2350 = vpop.xlane.xlu0 %2349
    %v2351 = vsel %vm1715, %v2109, -inf
    %2352 = vmax.xlane.f32.xlu0 %v2351
    %v2353 = vpop.xlane.xlu0 %2352
    %v2354 = vmax.f32 %v2332, %v2338
    %v2355 = vsel %vm1733, %v2341, -inf
    %v2356 = vmax.f32 %v2335, %v2355
    %v2357 = vmax.f32 %v2354, %v2356
    %v2358 = vrot.slane %v2357, 4
    %v2359 = vmax.f32 %v2357, %v2358
    %v2360 = vrot.slane %v2359, 2
    %v2361 = vmax.f32 %v2359, %v2360
    %v2362 = vrot.slane %v2361, 1
    %v2363 = vmax.f32 %v2361, %v2362
    %v2364 = vmax.f32 %v2344, %v2350
    %v2365 = vsel %vm1733, %v2353, -inf
    %v2366 = vmax.f32 %v2347, %v2365
    %v2367 = vmax.f32 %v2364, %v2366
    %v2368 = vrot.slane %v2367, 4
    %v2369 = vmax.f32 %v2367, %v2368
    %v2370 = vrot.slane %v2369, 2
    %v2371 = vmax.f32 %v2369, %v2370
    %v2372 = vrot.slane %v2371, 1
    %v2373 = vmax.f32 %v2371, %v2372
    %v2374 = vmin.f32 %v2143, %v2187
    %v2375 = vmin.f32 %v2153, %v2197
    %v2376 = vmin.f32 %v2374, %v2231
    %v2377 = vmin.f32 %v2375, %v2241
    %v2378 = vmax.f32 %v2275, %v2319
    %v2379 = vmax.f32 %v2285, %v2329
    %v2380 = vmax.f32 %v2378, %v2363
    %v2381 = vmax.f32 %v2379, %v2373
    %v2382 = vsub.f32 %v2380, %v2376
    %v2383 = vsub.f32 %v2381, %v2377
    %v2384 = vmul.f32 %v2382, 0.14285715
    %v2385 = vmul.f32 %v2383, 0.14285715
    %vm2386 = vcmp.eq.f32.partialorder %v2384, 0.0
    %vm2387 = vcmp.eq.f32.partialorder %v2385, 0.0
    %v2388 = vsel %vm2386, 1.0, %v2384
    %v2389 = vsel %vm2387, 1.0, %v2385
    %v2390 = vrcp.pop %v2388
    %v2391 = vmul.f32 1.0, %v2390
    %v2392 = vrcp.pop %v2389
    %v2393 = vmul.f32 1.0, %v2392
    %v2394 = vsub.f32 %v1826, %v2376
    %v2395 = vsub.f32 %v1827, %v2376
    %v2396 = vsub.f32 %v1828, %v2376
    %v2397 = vsub.f32 %v1829, %v2376
    %v2398 = vsub.f32 %v1830, %v2377
    %v2399 = vsub.f32 %v1831, %v2377
    %v2400 = vsub.f32 %v1832, %v2377
    %v2401 = vsub.f32 %v1833, %v2377
    %v2402 = vmul.f32 %v2394, %v2391
    %v2403 = vmul.f32 %v2395, %v2391
    %v2404 = vmul.f32 %v2396, %v2391
    %v2405 = vmul.f32 %v2397, %v2391
    %v2406 = vmul.f32 %v2398, %v2393
    %v2407 = vmul.f32 %v2399, %v2393
    %v2408 = vmul.f32 %v2400, %v2393
    %v2409 = vmul.f32 %v2401, %v2393
    %v2410 = vround.ne.pseudo %v2402
    %v2411 = vround.ne.pseudo %v2403
    %v2412 = vround.ne.pseudo %v2404
    %v2413 = vround.ne.pseudo %v2405
    %v2414 = vround.ne.pseudo %v2406
    %v2415 = vround.ne.pseudo %v2407
    %v2416 = vround.ne.pseudo %v2408
    %v2417 = vround.ne.pseudo %v2409
    %v2418 = vmul.f32 %v2410, %v2384
    %v2419 = vmul.f32 %v2411, %v2384
    %v2420 = vmul.f32 %v2412, %v2384
    %v2421 = vmul.f32 %v2413, %v2384
    %v2422 = vmul.f32 %v2414, %v2385
    %v2423 = vmul.f32 %v2415, %v2385
    %v2424 = vmul.f32 %v2416, %v2385
    %v2425 = vmul.f32 %v2417, %v2385
    %v2426 = vadd.f32 %v2418, %v2376
    %v2427 = vadd.f32 %v2419, %v2376
    %v2428 = vadd.f32 %v2420, %v2376
    %v2429 = vadd.f32 %v2421, %v2376
    %v2430 = vadd.f32 %v2422, %v2377
    %v2431 = vadd.f32 %v2423, %v2377
    %v2432 = vadd.f32 %v2424, %v2377
    %v2433 = vadd.f32 %v2425, %v2377
    %v2434 = vsub.f32 %v1964, %v2376
    %v2435 = vsub.f32 %v1965, %v2376
    %v2436 = vsub.f32 %v1966, %v2376
    %v2437 = vsub.f32 %v1967, %v2376
    %v2438 = vsub.f32 %v1968, %v2377
    %v2439 = vsub.f32 %v1969, %v2377
    %v2440 = vsub.f32 %v1970, %v2377
    %v2441 = vsub.f32 %v1971, %v2377
    %v2442 = vmul.f32 %v2434, %v2391
    %v2443 = vmul.f32 %v2435, %v2391
    %v2444 = vmul.f32 %v2436, %v2391
    %v2445 = vmul.f32 %v2437, %v2391
    %v2446 = vmul.f32 %v2438, %v2393
    %v2447 = vmul.f32 %v2439, %v2393
    %v2448 = vmul.f32 %v2440, %v2393
    %v2449 = vmul.f32 %v2441, %v2393
    %v2450 = vround.ne.pseudo %v2442
    %v2451 = vround.ne.pseudo %v2443
    %v2452 = vround.ne.pseudo %v2444
    %v2453 = vround.ne.pseudo %v2445
    %v2454 = vround.ne.pseudo %v2446
    %v2455 = vround.ne.pseudo %v2447
    %v2456 = vround.ne.pseudo %v2448
    %v2457 = vround.ne.pseudo %v2449
    %v2458 = vmul.f32 %v2450, %v2384
    %v2459 = vmul.f32 %v2451, %v2384
    %v2460 = vmul.f32 %v2452, %v2384
    %v2461 = vmul.f32 %v2453, %v2384
    %v2462 = vmul.f32 %v2454, %v2385
    %v2463 = vmul.f32 %v2455, %v2385
    %v2464 = vmul.f32 %v2456, %v2385
    %v2465 = vmul.f32 %v2457, %v2385
    %v2466 = vadd.f32 %v2458, %v2376
    %v2467 = vadd.f32 %v2459, %v2376
    %v2468 = vadd.f32 %v2460, %v2376
    %v2469 = vadd.f32 %v2461, %v2376
    %v2470 = vadd.f32 %v2462, %v2377
    %v2471 = vadd.f32 %v2463, %v2377
    %v2472 = vadd.f32 %v2464, %v2377
    %v2473 = vadd.f32 %v2465, %v2377
    %v2474 = vsub.f32 %v2102, %v2376
    %v2475 = vsub.f32 %v2103, %v2376
    %v2476 = vsub.f32 %v2104, %v2376
    %v2477 = vsub.f32 %v2105, %v2376
    %v2478 = vsub.f32 %v2106, %v2377
    %v2479 = vsub.f32 %v2107, %v2377
    %v2480 = vsub.f32 %v2108, %v2377
    %v2481 = vsub.f32 %v2109, %v2377
    %v2482 = vmul.f32 %v2474, %v2391
    %v2483 = vmul.f32 %v2475, %v2391
    %v2484 = vmul.f32 %v2476, %v2391
    %v2485 = vmul.f32 %v2477, %v2391
    %v2486 = vmul.f32 %v2478, %v2393
    %v2487 = vmul.f32 %v2479, %v2393
    %v2488 = vmul.f32 %v2480, %v2393
    %v2489 = vmul.f32 %v2481, %v2393
    %v2490 = vround.ne.pseudo %v2482
    %v2491 = vround.ne.pseudo %v2483
    %v2492 = vround.ne.pseudo %v2484
    %v2493 = vround.ne.pseudo %v2485
    %v2494 = vround.ne.pseudo %v2486
    %v2495 = vround.ne.pseudo %v2487
    %v2496 = vround.ne.pseudo %v2488
    %v2497 = vround.ne.pseudo %v2489
    %v2498 = vmul.f32 %v2490, %v2384
    %v2499 = vmul.f32 %v2491, %v2384
    %v2500 = vmul.f32 %v2492, %v2384
    %v2501 = vmul.f32 %v2493, %v2384
    %v2502 = vmul.f32 %v2494, %v2385
    %v2503 = vmul.f32 %v2495, %v2385
    %v2504 = vmul.f32 %v2496, %v2385
    %v2505 = vmul.f32 %v2497, %v2385
    %v2506 = vadd.f32 %v2498, %v2376
    %v2507 = vadd.f32 %v2499, %v2376
    %v2508 = vadd.f32 %v2500, %v2376
    %v2509 = vadd.f32 %v2501, %v2376
    %v2510 = vadd.f32 %v2502, %v2377
    %v2511 = vadd.f32 %v2503, %v2377
    %v2512 = vadd.f32 %v2504, %v2377
    %v2513 = vadd.f32 %v2505, %v2377
    %v2514 = vld [vmem:[%s3] sm:$0xff]
    %v2515 = vld [vmem:[%s3 + $0x8] sm:$0x1]
    %s2517 = vtos %v2514
    %v2518 = vstv %s2517
    %v2520 = vmul.f32 %v2426, %v2518
    %v2521 = vmul.f32 %v2427, %v2518
    %v2522 = vmul.f32 %v2428, %v2518
    %v2523 = vmul.f32 %v2430, %v2518
    %v2524 = vmul.f32 %v2431, %v2518
    %v2525 = vmul.f32 %v2432, %v2518
    %v2526 = vadd.f32 %v2520, 0.0
    %v2527 = vadd.f32 %v2521, 0.0
    %v2528 = vadd.f32 %v2522, 0.0
    %v2529 = vadd.f32 %v2523, 0.0
    %v2530 = vadd.f32 %v2524, 0.0
    %v2531 = vadd.f32 %v2525, 0.0
    %2532 = vrot.lane.b32.xlu0 %v2514, 127
    %v2533 = vpop.permute.xlu0 %2532
    %s2534 = vtos %v2533
    %v2535 = vstv %s2534
    %v2537 = vmul.f32 %v2466, %v2535
    %v2538 = vmul.f32 %v2467, %v2535
    %v2539 = vmul.f32 %v2468, %v2535
    %v2540 = vmul.f32 %v2470, %v2535
    %v2541 = vmul.f32 %v2471, %v2535
    %v2542 = vmul.f32 %v2472, %v2535
    %v2543 = vadd.f32 %v2526, %v2537
    %v2544 = vadd.f32 %v2527, %v2538
    %v2545 = vadd.f32 %v2528, %v2539
    %v2546 = vadd.f32 %v2529, %v2540
    %v2547 = vadd.f32 %v2530, %v2541
    %v2548 = vadd.f32 %v2531, %v2542
    %2549 = vrot.lane.b32.xlu0 %v2514, 126
    %v2550 = vpop.permute.xlu0 %2549
    %s2551 = vtos %v2550
    %v2552 = vstv %s2551
    %v2554 = vmul.f32 %v2506, %v2552
    %v2555 = vmul.f32 %v2507, %v2552
    %v2556 = vmul.f32 %v2508, %v2552
    %v2557 = vmul.f32 %v2510, %v2552
    %v2558 = vmul.f32 %v2511, %v2552
    %v2559 = vmul.f32 %v2512, %v2552
    %v2560 = vadd.f32 %v2543, %v2554
    %v2561 = vadd.f32 %v2544, %v2555
    %v2562 = vadd.f32 %v2545, %v2556
    %v2563 = vadd.f32 %v2546, %v2557
    %v2564 = vadd.f32 %v2547, %v2558
    %v2565 = vadd.f32 %v2548, %v2559
    %v2566 = vrot.slane %v2514, 1
    %s2567 = vtos %v2566
    %v2568 = vstv %s2567
    %v2570 = vmul.f32 %v2426, %v2568
    %v2571 = vmul.f32 %v2427, %v2568
    %v2572 = vmul.f32 %v2428, %v2568
    %v2573 = vmul.f32 %v2430, %v2568
    %v2574 = vmul.f32 %v2431, %v2568
    %v2575 = vmul.f32 %v2432, %v2568
    %2582 = vrot.lane.b32.xlu0 %v2570, 127
    %v2583 = vpop.permute.xlu0 %2582
    %2584 = vrot.lane.b32.xlu0 %v2571, 127
    %v2585 = vpop.permute.xlu0 %2584
    %2586 = vrot.lane.b32.xlu0 %v2572, 127
    %v2587 = vpop.permute.xlu0 %2586
    %2588 = vrot.lane.b32.xlu0 %v2573, 127
    %v2589 = vpop.permute.xlu0 %2588
    %2590 = vrot.lane.b32.xlu0 %v2574, 127
    %v2591 = vpop.permute.xlu0 %2590
    %2592 = vrot.lane.b32.xlu0 %v2575, 127
    %v2593 = vpop.permute.xlu0 %2592
    %v2600 = vadd.f32 %v2560, %v2583
    %v2601 = vadd.f32 %v2561, %v2585
    %v2602 = vadd.f32 %v2562, %v2587
    %v2603 = vadd.f32 %v2563, %v2589
    %v2604 = vadd.f32 %v2564, %v2591
    %v2605 = vadd.f32 %v2565, %v2593
    %2606 = vrot.lane.b32.xlu0 %v2566, 127
    %v2607 = vpop.permute.xlu0 %2606
    %s2608 = vtos %v2607
    %v2609 = vstv %s2608
    %v2611 = vmul.f32 %v2466, %v2609
    %v2612 = vmul.f32 %v2467, %v2609
    %v2613 = vmul.f32 %v2468, %v2609
    %v2614 = vmul.f32 %v2470, %v2609
    %v2615 = vmul.f32 %v2471, %v2609
    %v2616 = vmul.f32 %v2472, %v2609
    %2623 = vrot.lane.b32.xlu0 %v2611, 127
    %v2624 = vpop.permute.xlu0 %2623
    %2625 = vrot.lane.b32.xlu0 %v2612, 127
    %v2626 = vpop.permute.xlu0 %2625
    %2627 = vrot.lane.b32.xlu0 %v2613, 127
    %v2628 = vpop.permute.xlu0 %2627
    %2629 = vrot.lane.b32.xlu0 %v2614, 127
    %v2630 = vpop.permute.xlu0 %2629
    %2631 = vrot.lane.b32.xlu0 %v2615, 127
    %v2632 = vpop.permute.xlu0 %2631
    %2633 = vrot.lane.b32.xlu0 %v2616, 127
    %v2634 = vpop.permute.xlu0 %2633
    %v2641 = vadd.f32 %v2600, %v2624
    %v2642 = vadd.f32 %v2601, %v2626
    %v2643 = vadd.f32 %v2602, %v2628
    %v2644 = vadd.f32 %v2603, %v2630
    %v2645 = vadd.f32 %v2604, %v2632
    %v2646 = vadd.f32 %v2605, %v2634
    %2647 = vrot.lane.b32.xlu0 %v2566, 126
    %v2648 = vpop.permute.xlu0 %2647
    %s2649 = vtos %v2648
    %v2650 = vstv %s2649
    %v2652 = vmul.f32 %v2506, %v2650
    %v2653 = vmul.f32 %v2507, %v2650
    %v2654 = vmul.f32 %v2508, %v2650
    %v2655 = vmul.f32 %v2510, %v2650
    %v2656 = vmul.f32 %v2511, %v2650
    %v2657 = vmul.f32 %v2512, %v2650
    %2664 = vrot.lane.b32.xlu0 %v2652, 127
    %v2665 = vpop.permute.xlu0 %2664
    %2666 = vrot.lane.b32.xlu0 %v2653, 127
    %v2667 = vpop.permute.xlu0 %2666
    %2668 = vrot.lane.b32.xlu0 %v2654, 127
    %v2669 = vpop.permute.xlu0 %2668
    %2670 = vrot.lane.b32.xlu0 %v2655, 127
    %v2671 = vpop.permute.xlu0 %2670
    %2672 = vrot.lane.b32.xlu0 %v2656, 127
    %v2673 = vpop.permute.xlu0 %2672
    %2674 = vrot.lane.b32.xlu0 %v2657, 127
    %v2675 = vpop.permute.xlu0 %2674
    %v2682 = vadd.f32 %v2641, %v2665
    %v2683 = vadd.f32 %v2642, %v2667
    %v2684 = vadd.f32 %v2643, %v2669
    %v2685 = vadd.f32 %v2644, %v2671
    %v2686 = vadd.f32 %v2645, %v2673
    %v2687 = vadd.f32 %v2646, %v2675
    %v2688 = vrot.slane %v2514, 2
    %s2689 = vtos %v2688
    %v2690 = vstv %s2689
    %v2692 = vmul.f32 %v2426, %v2690
    %v2693 = vmul.f32 %v2427, %v2690
    %v2694 = vmul.f32 %v2428, %v2690
    %v2695 = vmul.f32 %v2430, %v2690
    %v2696 = vmul.f32 %v2431, %v2690
    %v2697 = vmul.f32 %v2432, %v2690
    %2704 = vrot.lane.b32.xlu0 %v2692, 126
    %v2705 = vpop.permute.xlu0 %2704
    %2706 = vrot.lane.b32.xlu0 %v2693, 126
    %v2707 = vpop.permute.xlu0 %2706
    %2708 = vrot.lane.b32.xlu0 %v2694, 126
    %v2709 = vpop.permute.xlu0 %2708
    %2710 = vrot.lane.b32.xlu0 %v2695, 126
    %v2711 = vpop.permute.xlu0 %2710
    %2712 = vrot.lane.b32.xlu0 %v2696, 126
    %v2713 = vpop.permute.xlu0 %2712
    %2714 = vrot.lane.b32.xlu0 %v2697, 126
    %v2715 = vpop.permute.xlu0 %2714
    %v2722 = vadd.f32 %v2682, %v2705
    %v2723 = vadd.f32 %v2683, %v2707
    %v2724 = vadd.f32 %v2684, %v2709
    %v2725 = vadd.f32 %v2685, %v2711
    %v2726 = vadd.f32 %v2686, %v2713
    %v2727 = vadd.f32 %v2687, %v2715
    %2728 = vrot.lane.b32.xlu0 %v2688, 127
    %v2729 = vpop.permute.xlu0 %2728
    %s2730 = vtos %v2729
    %v2731 = vstv %s2730
    %v2733 = vmul.f32 %v2466, %v2731
    %v2734 = vmul.f32 %v2467, %v2731
    %v2735 = vmul.f32 %v2468, %v2731
    %v2736 = vmul.f32 %v2470, %v2731
    %v2737 = vmul.f32 %v2471, %v2731
    %v2738 = vmul.f32 %v2472, %v2731
    %2745 = vrot.lane.b32.xlu0 %v2733, 126
    %v2746 = vpop.permute.xlu0 %2745
    %2747 = vrot.lane.b32.xlu0 %v2734, 126
    %v2748 = vpop.permute.xlu0 %2747
    %2749 = vrot.lane.b32.xlu0 %v2735, 126
    %v2750 = vpop.permute.xlu0 %2749
    %2751 = vrot.lane.b32.xlu0 %v2736, 126
    %v2752 = vpop.permute.xlu0 %2751
    %2753 = vrot.lane.b32.xlu0 %v2737, 126
    %v2754 = vpop.permute.xlu0 %2753
    %2755 = vrot.lane.b32.xlu0 %v2738, 126
    %v2756 = vpop.permute.xlu0 %2755
    %v2763 = vadd.f32 %v2722, %v2746
    %v2764 = vadd.f32 %v2723, %v2748
    %v2765 = vadd.f32 %v2724, %v2750
    %v2766 = vadd.f32 %v2725, %v2752
    %v2767 = vadd.f32 %v2726, %v2754
    %v2768 = vadd.f32 %v2727, %v2756
    %2769 = vrot.lane.b32.xlu0 %v2688, 126
    %v2770 = vpop.permute.xlu0 %2769
    %s2771 = vtos %v2770
    %v2772 = vstv %s2771
    %v2774 = vmul.f32 %v2506, %v2772
    %v2775 = vmul.f32 %v2507, %v2772
    %v2776 = vmul.f32 %v2508, %v2772
    %v2777 = vmul.f32 %v2510, %v2772
    %v2778 = vmul.f32 %v2511, %v2772
    %v2779 = vmul.f32 %v2512, %v2772
    %2786 = vrot.lane.b32.xlu0 %v2774, 126
    %v2787 = vpop.permute.xlu0 %2786
    %2788 = vrot.lane.b32.xlu0 %v2775, 126
    %v2789 = vpop.permute.xlu0 %2788
    %2790 = vrot.lane.b32.xlu0 %v2776, 126
    %v2791 = vpop.permute.xlu0 %2790
    %2792 = vrot.lane.b32.xlu0 %v2777, 126
    %v2793 = vpop.permute.xlu0 %2792
    %2794 = vrot.lane.b32.xlu0 %v2778, 126
    %v2795 = vpop.permute.xlu0 %2794
    %2796 = vrot.lane.b32.xlu0 %v2779, 126
    %v2797 = vpop.permute.xlu0 %2796
    %v2804 = vadd.f32 %v2763, %v2787
    %v2805 = vadd.f32 %v2764, %v2789
    %v2806 = vadd.f32 %v2765, %v2791
    %v2807 = vadd.f32 %v2766, %v2793
    %v2808 = vadd.f32 %v2767, %v2795
    %v2809 = vadd.f32 %v2768, %v2797
    %v2810 = vrot.slane %v2514, 3
    %s2811 = vtos %v2810
    %v2812 = vstv %s2811
    %v2814 = vmul.f32 %v2426, %v2812
    %v2815 = vmul.f32 %v2427, %v2812
    %v2816 = vmul.f32 %v2428, %v2812
    %v2817 = vmul.f32 %v2429, %v2812
    %v2818 = vmul.f32 %v2430, %v2812
    %v2819 = vmul.f32 %v2431, %v2812
    %v2820 = vmul.f32 %v2432, %v2812
    %v2821 = vmul.f32 %v2433, %v2812
    %v2830 = vrot.slane %v2814, 1
    %v2831 = vrot.slane %v2815, 1
    %v2832 = vsel %vm602, %v2830, %v2831
    %v2833 = vrot.slane %v2816, 1
    %v2834 = vsel %vm602, %v2831, %v2833
    %v2835 = vrot.slane %v2817, 1
    %v2836 = vsel %vm602, %v2833, %v2835
    %v2837 = vrot.slane %v2818, 1
    %v2838 = vrot.slane %v2819, 1
    %v2839 = vsel %vm602, %v2837, %v2838
    %v2840 = vrot.slane %v2820, 1
    %v2841 = vsel %vm602, %v2838, %v2840
    %v2842 = vrot.slane %v2821, 1
    %v2843 = vsel %vm602, %v2840, %v2842
    %v2850 = vadd.f32 %v2804, %v2832
    %v2851 = vadd.f32 %v2805, %v2834
    %v2852 = vadd.f32 %v2806, %v2836
    %v2853 = vadd.f32 %v2807, %v2839
    %v2854 = vadd.f32 %v2808, %v2841
    %v2855 = vadd.f32 %v2809, %v2843
    %2856 = vrot.lane.b32.xlu0 %v2810, 127
    %v2857 = vpop.permute.xlu0 %2856
    %s2858 = vtos %v2857
    %v2859 = vstv %s2858
    %v2861 = vmul.f32 %v2466, %v2859
    %v2862 = vmul.f32 %v2467, %v2859
    %v2863 = vmul.f32 %v2468, %v2859
    %v2864 = vmul.f32 %v2469, %v2859
    %v2865 = vmul.f32 %v2470, %v2859
    %v2866 = vmul.f32 %v2471, %v2859
    %v2867 = vmul.f32 %v2472, %v2859
    %v2868 = vmul.f32 %v2473, %v2859
    %v2877 = vrot.slane %v2861, 1
    %v2878 = vrot.slane %v2862, 1
    %v2879 = vsel %vm602, %v2877, %v2878
    %v2880 = vrot.slane %v2863, 1
    %v2881 = vsel %vm602, %v2878, %v2880
    %v2882 = vrot.slane %v2864, 1
    %v2883 = vsel %vm602, %v2880, %v2882
    %v2884 = vrot.slane %v2865, 1
    %v2885 = vrot.slane %v2866, 1
    %v2886 = vsel %vm602, %v2884, %v2885
    %v2887 = vrot.slane %v2867, 1
    %v2888 = vsel %vm602, %v2885, %v2887
    %v2889 = vrot.slane %v2868, 1
    %v2890 = vsel %vm602, %v2887, %v2889
    %v2897 = vadd.f32 %v2850, %v2879
    %v2898 = vadd.f32 %v2851, %v2881
    %v2899 = vadd.f32 %v2852, %v2883
    %v2900 = vadd.f32 %v2853, %v2886
    %v2901 = vadd.f32 %v2854, %v2888
    %v2902 = vadd.f32 %v2855, %v2890
    %2903 = vrot.lane.b32.xlu0 %v2810, 126
    %v2904 = vpop.permute.xlu0 %2903
    %s2905 = vtos %v2904
    %v2906 = vstv %s2905
    %v2908 = vmul.f32 %v2506, %v2906
    %v2909 = vmul.f32 %v2507, %v2906
    %v2910 = vmul.f32 %v2508, %v2906
    %v2911 = vmul.f32 %v2509, %v2906
    %v2912 = vmul.f32 %v2510, %v2906
    %v2913 = vmul.f32 %v2511, %v2906
    %v2914 = vmul.f32 %v2512, %v2906
    %v2915 = vmul.f32 %v2513, %v2906
    %v2924 = vrot.slane %v2908, 1
    %v2925 = vrot.slane %v2909, 1
    %v2926 = vsel %vm602, %v2924, %v2925
    %v2927 = vrot.slane %v2910, 1
    %v2928 = vsel %vm602, %v2925, %v2927
    %v2929 = vrot.slane %v2911, 1
    %v2930 = vsel %vm602, %v2927, %v2929
    %v2931 = vrot.slane %v2912, 1
    %v2932 = vrot.slane %v2913, 1
    %v2933 = vsel %vm602, %v2931, %v2932
    %v2934 = vrot.slane %v2914, 1
    %v2935 = vsel %vm602, %v2932, %v2934
    %v2936 = vrot.slane %v2915, 1
    %v2937 = vsel %vm602, %v2934, %v2936
    %v2944 = vadd.f32 %v2897, %v2926
    %v2945 = vadd.f32 %v2898, %v2928
    %v2946 = vadd.f32 %v2899, %v2930
    %v2947 = vadd.f32 %v2900, %v2933
    %v2948 = vadd.f32 %v2901, %v2935
    %v2949 = vadd.f32 %v2902, %v2937
    %v2950 = vrot.slane %v2514, 4
    %s2951 = vtos %v2950
    %v2952 = vstv %s2951
    %v2954 = vmul.f32 %v2426, %v2952
    %v2955 = vmul.f32 %v2427, %v2952
    %v2956 = vmul.f32 %v2428, %v2952
    %v2957 = vmul.f32 %v2429, %v2952
    %v2958 = vmul.f32 %v2430, %v2952
    %v2959 = vmul.f32 %v2431, %v2952
    %v2960 = vmul.f32 %v2432, %v2952
    %v2961 = vmul.f32 %v2433, %v2952
    %v2970 = vrot.slane %v2954, 1
    %v2971 = vrot.slane %v2955, 1
    %v2972 = vsel %vm602, %v2970, %v2971
    %v2973 = vrot.slane %v2956, 1
    %v2974 = vsel %vm602, %v2971, %v2973
    %v2975 = vrot.slane %v2957, 1
    %v2976 = vsel %vm602, %v2973, %v2975
    %v2977 = vrot.slane %v2958, 1
    %v2978 = vrot.slane %v2959, 1
    %v2979 = vsel %vm602, %v2977, %v2978
    %v2980 = vrot.slane %v2960, 1
    %v2981 = vsel %vm602, %v2978, %v2980
    %v2982 = vrot.slane %v2961, 1
    %v2983 = vsel %vm602, %v2980, %v2982
    %2984 = vrot.lane.b32.xlu0 %v2972, 127
    %v2985 = vpop.permute.xlu0 %2984
    %2986 = vrot.lane.b32.xlu0 %v2974, 127
    %v2987 = vpop.permute.xlu0 %2986
    %2988 = vrot.lane.b32.xlu0 %v2976, 127
    %v2989 = vpop.permute.xlu0 %2988
    %2990 = vrot.lane.b32.xlu0 %v2979, 127
    %v2991 = vpop.permute.xlu0 %2990
    %2992 = vrot.lane.b32.xlu0 %v2981, 127
    %v2993 = vpop.permute.xlu0 %2992
    %2994 = vrot.lane.b32.xlu0 %v2983, 127
    %v2995 = vpop.permute.xlu0 %2994
    %v3002 = vadd.f32 %v2944, %v2985
    %v3003 = vadd.f32 %v2945, %v2987
    %v3004 = vadd.f32 %v2946, %v2989
    %v3005 = vadd.f32 %v2947, %v2991
    %v3006 = vadd.f32 %v2948, %v2993
    %v3007 = vadd.f32 %v2949, %v2995
    %3008 = vrot.lane.b32.xlu0 %v2950, 127
    %v3009 = vpop.permute.xlu0 %3008
    %s3010 = vtos %v3009
    %v3011 = vstv %s3010
    %v3013 = vmul.f32 %v2466, %v3011
    %v3014 = vmul.f32 %v2467, %v3011
    %v3015 = vmul.f32 %v2468, %v3011
    %v3016 = vmul.f32 %v2469, %v3011
    %v3017 = vmul.f32 %v2470, %v3011
    %v3018 = vmul.f32 %v2471, %v3011
    %v3019 = vmul.f32 %v2472, %v3011
    %v3020 = vmul.f32 %v2473, %v3011
    %v3029 = vrot.slane %v3013, 1
    %v3030 = vrot.slane %v3014, 1
    %v3031 = vsel %vm602, %v3029, %v3030
    %v3032 = vrot.slane %v3015, 1
    %v3033 = vsel %vm602, %v3030, %v3032
    %v3034 = vrot.slane %v3016, 1
    %v3035 = vsel %vm602, %v3032, %v3034
    %v3036 = vrot.slane %v3017, 1
    %v3037 = vrot.slane %v3018, 1
    %v3038 = vsel %vm602, %v3036, %v3037
    %v3039 = vrot.slane %v3019, 1
    %v3040 = vsel %vm602, %v3037, %v3039
    %v3041 = vrot.slane %v3020, 1
    %v3042 = vsel %vm602, %v3039, %v3041
    %3043 = vrot.lane.b32.xlu0 %v3031, 127
    %v3044 = vpop.permute.xlu0 %3043
    %3045 = vrot.lane.b32.xlu0 %v3033, 127
    %v3046 = vpop.permute.xlu0 %3045
    %3047 = vrot.lane.b32.xlu0 %v3035, 127
    %v3048 = vpop.permute.xlu0 %3047
    %3049 = vrot.lane.b32.xlu0 %v3038, 127
    %v3050 = vpop.permute.xlu0 %3049
    %3051 = vrot.lane.b32.xlu0 %v3040, 127
    %v3052 = vpop.permute.xlu0 %3051
    %3053 = vrot.lane.b32.xlu0 %v3042, 127
    %v3054 = vpop.permute.xlu0 %3053
    %v3061 = vadd.f32 %v3002, %v3044
    %v3062 = vadd.f32 %v3003, %v3046
    %v3063 = vadd.f32 %v3004, %v3048
    %v3064 = vadd.f32 %v3005, %v3050
    %v3065 = vadd.f32 %v3006, %v3052
    %v3066 = vadd.f32 %v3007, %v3054
    %3067 = vrot.lane.b32.xlu0 %v2950, 126
    %v3068 = vpop.permute.xlu0 %3067
    %s3069 = vtos %v3068
    %v3070 = vstv %s3069
    %v3072 = vmul.f32 %v2506, %v3070
    %v3073 = vmul.f32 %v2507, %v3070
    %v3074 = vmul.f32 %v2508, %v3070
    %v3075 = vmul.f32 %v2509, %v3070
    %v3076 = vmul.f32 %v2510, %v3070
    %v3077 = vmul.f32 %v2511, %v3070
    %v3078 = vmul.f32 %v2512, %v3070
    %v3079 = vmul.f32 %v2513, %v3070
    %v3088 = vrot.slane %v3072, 1
    %v3089 = vrot.slane %v3073, 1
    %v3090 = vsel %vm602, %v3088, %v3089
    %v3091 = vrot.slane %v3074, 1
    %v3092 = vsel %vm602, %v3089, %v3091
    %v3093 = vrot.slane %v3075, 1
    %v3094 = vsel %vm602, %v3091, %v3093
    %v3095 = vrot.slane %v3076, 1
    %v3096 = vrot.slane %v3077, 1
    %v3097 = vsel %vm602, %v3095, %v3096
    %v3098 = vrot.slane %v3078, 1
    %v3099 = vsel %vm602, %v3096, %v3098
    %v3100 = vrot.slane %v3079, 1
    %v3101 = vsel %vm602, %v3098, %v3100
    %3102 = vrot.lane.b32.xlu0 %v3090, 127
    %v3103 = vpop.permute.xlu0 %3102
    %3104 = vrot.lane.b32.xlu0 %v3092, 127
    %v3105 = vpop.permute.xlu0 %3104
    %3106 = vrot.lane.b32.xlu0 %v3094, 127
    %v3107 = vpop.permute.xlu0 %3106
    %3108 = vrot.lane.b32.xlu0 %v3097, 127
    %v3109 = vpop.permute.xlu0 %3108
    %3110 = vrot.lane.b32.xlu0 %v3099, 127
    %v3111 = vpop.permute.xlu0 %3110
    %3112 = vrot.lane.b32.xlu0 %v3101, 127
    %v3113 = vpop.permute.xlu0 %3112
    %v3120 = vadd.f32 %v3061, %v3103
    %v3121 = vadd.f32 %v3062, %v3105
    %v3122 = vadd.f32 %v3063, %v3107
    %v3123 = vadd.f32 %v3064, %v3109
    %v3124 = vadd.f32 %v3065, %v3111
    %v3125 = vadd.f32 %v3066, %v3113
    %v3126 = vrot.slane %v2514, 5
    %s3127 = vtos %v3126
    %v3128 = vstv %s3127
    %v3130 = vmul.f32 %v2426, %v3128
    %v3131 = vmul.f32 %v2427, %v3128
    %v3132 = vmul.f32 %v2428, %v3128
    %v3133 = vmul.f32 %v2429, %v3128
    %v3134 = vmul.f32 %v2430, %v3128
    %v3135 = vmul.f32 %v2431, %v3128
    %v3136 = vmul.f32 %v2432, %v3128
    %v3137 = vmul.f32 %v2433, %v3128
    %v3146 = vrot.slane %v3130, 1
    %v3147 = vrot.slane %v3131, 1
    %v3148 = vsel %vm602, %v3146, %v3147
    %v3149 = vrot.slane %v3132, 1
    %v3150 = vsel %vm602, %v3147, %v3149
    %v3151 = vrot.slane %v3133, 1
    %v3152 = vsel %vm602, %v3149, %v3151
    %v3153 = vrot.slane %v3134, 1
    %v3154 = vrot.slane %v3135, 1
    %v3155 = vsel %vm602, %v3153, %v3154
    %v3156 = vrot.slane %v3136, 1
    %v3157 = vsel %vm602, %v3154, %v3156
    %v3158 = vrot.slane %v3137, 1
    %v3159 = vsel %vm602, %v3156, %v3158
    %3160 = vrot.lane.b32.xlu0 %v3148, 126
    %v3161 = vpop.permute.xlu0 %3160
    %3162 = vrot.lane.b32.xlu0 %v3150, 126
    %v3163 = vpop.permute.xlu0 %3162
    %3164 = vrot.lane.b32.xlu0 %v3152, 126
    %v3165 = vpop.permute.xlu0 %3164
    %3166 = vrot.lane.b32.xlu0 %v3155, 126
    %v3167 = vpop.permute.xlu0 %3166
    %3168 = vrot.lane.b32.xlu0 %v3157, 126
    %v3169 = vpop.permute.xlu0 %3168
    %3170 = vrot.lane.b32.xlu0 %v3159, 126
    %v3171 = vpop.permute.xlu0 %3170
    %v3178 = vadd.f32 %v3120, %v3161
    %v3179 = vadd.f32 %v3121, %v3163
    %v3180 = vadd.f32 %v3122, %v3165
    %v3181 = vadd.f32 %v3123, %v3167
    %v3182 = vadd.f32 %v3124, %v3169
    %v3183 = vadd.f32 %v3125, %v3171
    %3184 = vrot.lane.b32.xlu0 %v3126, 127
    %v3185 = vpop.permute.xlu0 %3184
    %s3186 = vtos %v3185
    %v3187 = vstv %s3186
    %v3189 = vmul.f32 %v2466, %v3187
    %v3190 = vmul.f32 %v2467, %v3187
    %v3191 = vmul.f32 %v2468, %v3187
    %v3192 = vmul.f32 %v2469, %v3187
    %v3193 = vmul.f32 %v2470, %v3187
    %v3194 = vmul.f32 %v2471, %v3187
    %v3195 = vmul.f32 %v2472, %v3187
    %v3196 = vmul.f32 %v2473, %v3187
    %v3205 = vrot.slane %v3189, 1
    %v3206 = vrot.slane %v3190, 1
    %v3207 = vsel %vm602, %v3205, %v3206
    %v3208 = vrot.slane %v3191, 1
    %v3209 = vsel %vm602, %v3206, %v3208
    %v3210 = vrot.slane %v3192, 1
    %v3211 = vsel %vm602, %v3208, %v3210
    %v3212 = vrot.slane %v3193, 1
    %v3213 = vrot.slane %v3194, 1
    %v3214 = vsel %vm602, %v3212, %v3213
    %v3215 = vrot.slane %v3195, 1
    %v3216 = vsel %vm602, %v3213, %v3215
    %v3217 = vrot.slane %v3196, 1
    %v3218 = vsel %vm602, %v3215, %v3217
    %3219 = vrot.lane.b32.xlu0 %v3207, 126
    %v3220 = vpop.permute.xlu0 %3219
    %3221 = vrot.lane.b32.xlu0 %v3209, 126
    %v3222 = vpop.permute.xlu0 %3221
    %3223 = vrot.lane.b32.xlu0 %v3211, 126
    %v3224 = vpop.permute.xlu0 %3223
    %3225 = vrot.lane.b32.xlu0 %v3214, 126
    %v3226 = vpop.permute.xlu0 %3225
    %3227 = vrot.lane.b32.xlu0 %v3216, 126
    %v3228 = vpop.permute.xlu0 %3227
    %3229 = vrot.lane.b32.xlu0 %v3218, 126
    %v3230 = vpop.permute.xlu0 %3229
    %v3237 = vadd.f32 %v3178, %v3220
    %v3238 = vadd.f32 %v3179, %v3222
    %v3239 = vadd.f32 %v3180, %v3224
    %v3240 = vadd.f32 %v3181, %v3226
    %v3241 = vadd.f32 %v3182, %v3228
    %v3242 = vadd.f32 %v3183, %v3230
    %3243 = vrot.lane.b32.xlu0 %v3126, 126
    %v3244 = vpop.permute.xlu0 %3243
    %s3245 = vtos %v3244
    %v3246 = vstv %s3245
    %v3248 = vmul.f32 %v2506, %v3246
    %v3249 = vmul.f32 %v2507, %v3246
    %v3250 = vmul.f32 %v2508, %v3246
    %v3251 = vmul.f32 %v2509, %v3246
    %v3252 = vmul.f32 %v2510, %v3246
    %v3253 = vmul.f32 %v2511, %v3246
    %v3254 = vmul.f32 %v2512, %v3246
    %v3255 = vmul.f32 %v2513, %v3246
    %v3264 = vrot.slane %v3248, 1
    %v3265 = vrot.slane %v3249, 1
    %v3266 = vsel %vm602, %v3264, %v3265
    %v3267 = vrot.slane %v3250, 1
    %v3268 = vsel %vm602, %v3265, %v3267
    %v3269 = vrot.slane %v3251, 1
    %v3270 = vsel %vm602, %v3267, %v3269
    %v3271 = vrot.slane %v3252, 1
    %v3272 = vrot.slane %v3253, 1
    %v3273 = vsel %vm602, %v3271, %v3272
    %v3274 = vrot.slane %v3254, 1
    %v3275 = vsel %vm602, %v3272, %v3274
    %v3276 = vrot.slane %v3255, 1
    %v3277 = vsel %vm602, %v3274, %v3276
    %3278 = vrot.lane.b32.xlu0 %v3266, 126
    %v3279 = vpop.permute.xlu0 %3278
    %3280 = vrot.lane.b32.xlu0 %v3268, 126
    %v3281 = vpop.permute.xlu0 %3280
    %3282 = vrot.lane.b32.xlu0 %v3270, 126
    %v3283 = vpop.permute.xlu0 %3282
    %3284 = vrot.lane.b32.xlu0 %v3273, 126
    %v3285 = vpop.permute.xlu0 %3284
    %3286 = vrot.lane.b32.xlu0 %v3275, 126
    %v3287 = vpop.permute.xlu0 %3286
    %3288 = vrot.lane.b32.xlu0 %v3277, 126
    %v3289 = vpop.permute.xlu0 %3288
    %v3296 = vadd.f32 %v3237, %v3279
    %v3297 = vadd.f32 %v3238, %v3281
    %v3298 = vadd.f32 %v3239, %v3283
    %v3299 = vadd.f32 %v3240, %v3285
    %v3300 = vadd.f32 %v3241, %v3287
    %v3301 = vadd.f32 %v3242, %v3289
    %v3302 = vrot.slane %v2514, 6
    %s3303 = vtos %v3302
    %v3304 = vstv %s3303
    %v3306 = vmul.f32 %v2426, %v3304
    %v3307 = vmul.f32 %v2427, %v3304
    %v3308 = vmul.f32 %v2428, %v3304
    %v3309 = vmul.f32 %v2429, %v3304
    %v3310 = vmul.f32 %v2430, %v3304
    %v3311 = vmul.f32 %v2431, %v3304
    %v3312 = vmul.f32 %v2432, %v3304
    %v3313 = vmul.f32 %v2433, %v3304
    %v3322 = vrot.slane %v3306, 2
    %v3323 = vrot.slane %v3307, 2
    %v3324 = vsel %vm1155, %v3322, %v3323
    %v3325 = vrot.slane %v3308, 2
    %v3326 = vsel %vm1155, %v3323, %v3325
    %v3327 = vrot.slane %v3309, 2
    %v3328 = vsel %vm1155, %v3325, %v3327
    %v3329 = vrot.slane %v3310, 2
    %v3330 = vrot.slane %v3311, 2
    %v3331 = vsel %vm1155, %v3329, %v3330
    %v3332 = vrot.slane %v3312, 2
    %v3333 = vsel %vm1155, %v3330, %v3332
    %v3334 = vrot.slane %v3313, 2
    %v3335 = vsel %vm1155, %v3332, %v3334
    %v3342 = vadd.f32 %v3296, %v3324
    %v3343 = vadd.f32 %v3297, %v3326
    %v3344 = vadd.f32 %v3298, %v3328
    %v3345 = vadd.f32 %v3299, %v3331
    %v3346 = vadd.f32 %v3300, %v3333
    %v3347 = vadd.f32 %v3301, %v3335
    %3348 = vrot.lane.b32.xlu0 %v3302, 127
    %v3349 = vpop.permute.xlu0 %3348
    %s3350 = vtos %v3349
    %v3351 = vstv %s3350
    %v3353 = vmul.f32 %v2466, %v3351
    %v3354 = vmul.f32 %v2467, %v3351
    %v3355 = vmul.f32 %v2468, %v3351
    %v3356 = vmul.f32 %v2469, %v3351
    %v3357 = vmul.f32 %v2470, %v3351
    %v3358 = vmul.f32 %v2471, %v3351
    %v3359 = vmul.f32 %v2472, %v3351
    %v3360 = vmul.f32 %v2473, %v3351
    %v3369 = vrot.slane %v3353, 2
    %v3370 = vrot.slane %v3354, 2
    %v3371 = vsel %vm1155, %v3369, %v3370
    %v3372 = vrot.slane %v3355, 2
    %v3373 = vsel %vm1155, %v3370, %v3372
    %v3374 = vrot.slane %v3356, 2
    %v3375 = vsel %vm1155, %v3372, %v3374
    %v3376 = vrot.slane %v3357, 2
    %v3377 = vrot.slane %v3358, 2
    %v3378 = vsel %vm1155, %v3376, %v3377
    %v3379 = vrot.slane %v3359, 2
    %v3380 = vsel %vm1155, %v3377, %v3379
    %v3381 = vrot.slane %v3360, 2
    %v3382 = vsel %vm1155, %v3379, %v3381
    %v3389 = vadd.f32 %v3342, %v3371
    %v3390 = vadd.f32 %v3343, %v3373
    %v3391 = vadd.f32 %v3344, %v3375
    %v3392 = vadd.f32 %v3345, %v3378
    %v3393 = vadd.f32 %v3346, %v3380
    %v3394 = vadd.f32 %v3347, %v3382
    %3395 = vrot.lane.b32.xlu0 %v3302, 126
    %v3396 = vpop.permute.xlu0 %3395
    %s3397 = vtos %v3396
    %v3398 = vstv %s3397
    %v3400 = vmul.f32 %v2506, %v3398
    %v3401 = vmul.f32 %v2507, %v3398
    %v3402 = vmul.f32 %v2508, %v3398
    %v3403 = vmul.f32 %v2509, %v3398
    %v3404 = vmul.f32 %v2510, %v3398
    %v3405 = vmul.f32 %v2511, %v3398
    %v3406 = vmul.f32 %v2512, %v3398
    %v3407 = vmul.f32 %v2513, %v3398
    %v3416 = vrot.slane %v3400, 2
    %v3417 = vrot.slane %v3401, 2
    %v3418 = vsel %vm1155, %v3416, %v3417
    %v3419 = vrot.slane %v3402, 2
    %v3420 = vsel %vm1155, %v3417, %v3419
    %v3421 = vrot.slane %v3403, 2
    %v3422 = vsel %vm1155, %v3419, %v3421
    %v3423 = vrot.slane %v3404, 2
    %v3424 = vrot.slane %v3405, 2
    %v3425 = vsel %vm1155, %v3423, %v3424
    %v3426 = vrot.slane %v3406, 2
    %v3427 = vsel %vm1155, %v3424, %v3426
    %v3428 = vrot.slane %v3407, 2
    %v3429 = vsel %vm1155, %v3426, %v3428
    %v3436 = vadd.f32 %v3389, %v3418
    %v3437 = vadd.f32 %v3390, %v3420
    %v3438 = vadd.f32 %v3391, %v3422
    %v3439 = vadd.f32 %v3392, %v3425
    %v3440 = vadd.f32 %v3393, %v3427
    %v3441 = vadd.f32 %v3394, %v3429
    %v3442 = vrot.slane %v2514, 7
    %s3443 = vtos %v3442
    %v3444 = vstv %s3443
    %v3446 = vmul.f32 %v2426, %v3444
    %v3447 = vmul.f32 %v2427, %v3444
    %v3448 = vmul.f32 %v2428, %v3444
    %v3449 = vmul.f32 %v2429, %v3444
    %v3450 = vmul.f32 %v2430, %v3444
    %v3451 = vmul.f32 %v2431, %v3444
    %v3452 = vmul.f32 %v2432, %v3444
    %v3453 = vmul.f32 %v2433, %v3444
    %v3462 = vrot.slane %v3446, 2
    %v3463 = vrot.slane %v3447, 2
    %v3464 = vsel %vm1155, %v3462, %v3463
    %v3465 = vrot.slane %v3448, 2
    %v3466 = vsel %vm1155, %v3463, %v3465
    %v3467 = vrot.slane %v3449, 2
    %v3468 = vsel %vm1155, %v3465, %v3467
    %v3469 = vrot.slane %v3450, 2
    %v3470 = vrot.slane %v3451, 2
    %v3471 = vsel %vm1155, %v3469, %v3470
    %v3472 = vrot.slane %v3452, 2
    %v3473 = vsel %vm1155, %v3470, %v3472
    %v3474 = vrot.slane %v3453, 2
    %v3475 = vsel %vm1155, %v3472, %v3474
    %3476 = vrot.lane.b32.xlu0 %v3464, 127
    %v3477 = vpop.permute.xlu0 %3476
    %3478 = vrot.lane.b32.xlu0 %v3466, 127
    %v3479 = vpop.permute.xlu0 %3478
    %3480 = vrot.lane.b32.xlu0 %v3468, 127
    %v3481 = vpop.permute.xlu0 %3480
    %3482 = vrot.lane.b32.xlu0 %v3471, 127
    %v3483 = vpop.permute.xlu0 %3482
    %3484 = vrot.lane.b32.xlu0 %v3473, 127
    %v3485 = vpop.permute.xlu0 %3484
    %3486 = vrot.lane.b32.xlu0 %v3475, 127
    %v3487 = vpop.permute.xlu0 %3486
    %v3494 = vadd.f32 %v3436, %v3477
    %v3495 = vadd.f32 %v3437, %v3479
    %v3496 = vadd.f32 %v3438, %v3481
    %v3497 = vadd.f32 %v3439, %v3483
    %v3498 = vadd.f32 %v3440, %v3485
    %v3499 = vadd.f32 %v3441, %v3487
    %3500 = vrot.lane.b32.xlu0 %v3442, 127
    %v3501 = vpop.permute.xlu0 %3500
    %s3502 = vtos %v3501
    %v3503 = vstv %s3502
    %v3505 = vmul.f32 %v2466, %v3503
    %v3506 = vmul.f32 %v2467, %v3503
    %v3507 = vmul.f32 %v2468, %v3503
    %v3508 = vmul.f32 %v2469, %v3503
    %v3509 = vmul.f32 %v2470, %v3503
    %v3510 = vmul.f32 %v2471, %v3503
    %v3511 = vmul.f32 %v2472, %v3503
    %v3512 = vmul.f32 %v2473, %v3503
    %v3521 = vrot.slane %v3505, 2
    %v3522 = vrot.slane %v3506, 2
    %v3523 = vsel %vm1155, %v3521, %v3522
    %v3524 = vrot.slane %v3507, 2
    %v3525 = vsel %vm1155, %v3522, %v3524
    %v3526 = vrot.slane %v3508, 2
    %v3527 = vsel %vm1155, %v3524, %v3526
    %v3528 = vrot.slane %v3509, 2
    %v3529 = vrot.slane %v3510, 2
    %v3530 = vsel %vm1155, %v3528, %v3529
    %v3531 = vrot.slane %v3511, 2
    %v3532 = vsel %vm1155, %v3529, %v3531
    %v3533 = vrot.slane %v3512, 2
    %v3534 = vsel %vm1155, %v3531, %v3533
    %3535 = vrot.lane.b32.xlu0 %v3523, 127
    %v3536 = vpop.permute.xlu0 %3535
    %3537 = vrot.lane.b32.xlu0 %v3525, 127
    %v3538 = vpop.permute.xlu0 %3537
    %3539 = vrot.lane.b32.xlu0 %v3527, 127
    %v3540 = vpop.permute.xlu0 %3539
    %3541 = vrot.lane.b32.xlu0 %v3530, 127
    %v3542 = vpop.permute.xlu0 %3541
    %3543 = vrot.lane.b32.xlu0 %v3532, 127
    %v3544 = vpop.permute.xlu0 %3543
    %3545 = vrot.lane.b32.xlu0 %v3534, 127
    %v3546 = vpop.permute.xlu0 %3545
    %v3553 = vadd.f32 %v3494, %v3536
    %v3554 = vadd.f32 %v3495, %v3538
    %v3555 = vadd.f32 %v3496, %v3540
    %v3556 = vadd.f32 %v3497, %v3542
    %v3557 = vadd.f32 %v3498, %v3544
    %v3558 = vadd.f32 %v3499, %v3546
    %3559 = vrot.lane.b32.xlu0 %v3442, 126
    %v3560 = vpop.permute.xlu0 %3559
    %s3561 = vtos %v3560
    %v3562 = vstv %s3561
    %v3564 = vmul.f32 %v2506, %v3562
    %v3565 = vmul.f32 %v2507, %v3562
    %v3566 = vmul.f32 %v2508, %v3562
    %v3567 = vmul.f32 %v2509, %v3562
    %v3568 = vmul.f32 %v2510, %v3562
    %v3569 = vmul.f32 %v2511, %v3562
    %v3570 = vmul.f32 %v2512, %v3562
    %v3571 = vmul.f32 %v2513, %v3562
    %v3580 = vrot.slane %v3564, 2
    %v3581 = vrot.slane %v3565, 2
    %v3582 = vsel %vm1155, %v3580, %v3581
    %v3583 = vrot.slane %v3566, 2
    %v3584 = vsel %vm1155, %v3581, %v3583
    %v3585 = vrot.slane %v3567, 2
    %v3586 = vsel %vm1155, %v3583, %v3585
    %v3587 = vrot.slane %v3568, 2
    %v3588 = vrot.slane %v3569, 2
    %v3589 = vsel %vm1155, %v3587, %v3588
    %v3590 = vrot.slane %v3570, 2
    %v3591 = vsel %vm1155, %v3588, %v3590
    %v3592 = vrot.slane %v3571, 2
    %v3593 = vsel %vm1155, %v3590, %v3592
    %3594 = vrot.lane.b32.xlu0 %v3582, 127
    %v3595 = vpop.permute.xlu0 %3594
    %3596 = vrot.lane.b32.xlu0 %v3584, 127
    %v3597 = vpop.permute.xlu0 %3596
    %3598 = vrot.lane.b32.xlu0 %v3586, 127
    %v3599 = vpop.permute.xlu0 %3598
    %3600 = vrot.lane.b32.xlu0 %v3589, 127
    %v3601 = vpop.permute.xlu0 %3600
    %3602 = vrot.lane.b32.xlu0 %v3591, 127
    %v3603 = vpop.permute.xlu0 %3602
    %3604 = vrot.lane.b32.xlu0 %v3593, 127
    %v3605 = vpop.permute.xlu0 %3604
    %v3612 = vadd.f32 %v3553, %v3595
    %v3613 = vadd.f32 %v3554, %v3597
    %v3614 = vadd.f32 %v3555, %v3599
    %v3615 = vadd.f32 %v3556, %v3601
    %v3616 = vadd.f32 %v3557, %v3603
    %v3617 = vadd.f32 %v3558, %v3605
    %s3619 = vtos %v2515
    %v3620 = vstv %s3619
    %v3622 = vmul.f32 %v2426, %v3620
    %v3623 = vmul.f32 %v2427, %v3620
    %v3624 = vmul.f32 %v2428, %v3620
    %v3625 = vmul.f32 %v2429, %v3620
    %v3626 = vmul.f32 %v2430, %v3620
    %v3627 = vmul.f32 %v2431, %v3620
    %v3628 = vmul.f32 %v2432, %v3620
    %v3629 = vmul.f32 %v2433, %v3620
    %v3638 = vrot.slane %v3622, 2
    %v3639 = vrot.slane %v3623, 2
    %v3640 = vsel %vm1155, %v3638, %v3639
    %v3641 = vrot.slane %v3624, 2
    %v3642 = vsel %vm1155, %v3639, %v3641
    %v3643 = vrot.slane %v3625, 2
    %v3644 = vsel %vm1155, %v3641, %v3643
    %v3645 = vrot.slane %v3626, 2
    %v3646 = vrot.slane %v3627, 2
    %v3647 = vsel %vm1155, %v3645, %v3646
    %v3648 = vrot.slane %v3628, 2
    %v3649 = vsel %vm1155, %v3646, %v3648
    %v3650 = vrot.slane %v3629, 2
    %v3651 = vsel %vm1155, %v3648, %v3650
    %3652 = vrot.lane.b32.xlu0 %v3640, 126
    %v3653 = vpop.permute.xlu0 %3652
    %3654 = vrot.lane.b32.xlu0 %v3642, 126
    %v3655 = vpop.permute.xlu0 %3654
    %3656 = vrot.lane.b32.xlu0 %v3644, 126
    %v3657 = vpop.permute.xlu0 %3656
    %3658 = vrot.lane.b32.xlu0 %v3647, 126
    %v3659 = vpop.permute.xlu0 %3658
    %3660 = vrot.lane.b32.xlu0 %v3649, 126
    %v3661 = vpop.permute.xlu0 %3660
    %3662 = vrot.lane.b32.xlu0 %v3651, 126
    %v3663 = vpop.permute.xlu0 %3662
    %v3670 = vadd.f32 %v3612, %v3653
    %v3671 = vadd.f32 %v3613, %v3655
    %v3672 = vadd.f32 %v3614, %v3657
    %v3673 = vadd.f32 %v3615, %v3659
    %v3674 = vadd.f32 %v3616, %v3661
    %v3675 = vadd.f32 %v3617, %v3663
    %3676 = vrot.lane.b32.xlu0 %v2515, 127
    %v3677 = vpop.permute.xlu0 %3676
    %s3678 = vtos %v3677
    %v3679 = vstv %s3678
    %v3681 = vmul.f32 %v2466, %v3679
    %v3682 = vmul.f32 %v2467, %v3679
    %v3683 = vmul.f32 %v2468, %v3679
    %v3684 = vmul.f32 %v2469, %v3679
    %v3685 = vmul.f32 %v2470, %v3679
    %v3686 = vmul.f32 %v2471, %v3679
    %v3687 = vmul.f32 %v2472, %v3679
    %v3688 = vmul.f32 %v2473, %v3679
    %v3697 = vrot.slane %v3681, 2
    %v3698 = vrot.slane %v3682, 2
    %v3699 = vsel %vm1155, %v3697, %v3698
    %v3700 = vrot.slane %v3683, 2
    %v3701 = vsel %vm1155, %v3698, %v3700
    %v3702 = vrot.slane %v3684, 2
    %v3703 = vsel %vm1155, %v3700, %v3702
    %v3704 = vrot.slane %v3685, 2
    %v3705 = vrot.slane %v3686, 2
    %v3706 = vsel %vm1155, %v3704, %v3705
    %v3707 = vrot.slane %v3687, 2
    %v3708 = vsel %vm1155, %v3705, %v3707
    %v3709 = vrot.slane %v3688, 2
    %v3710 = vsel %vm1155, %v3707, %v3709
    %3711 = vrot.lane.b32.xlu0 %v3699, 126
    %v3712 = vpop.permute.xlu0 %3711
    %3713 = vrot.lane.b32.xlu0 %v3701, 126
    %v3714 = vpop.permute.xlu0 %3713
    %3715 = vrot.lane.b32.xlu0 %v3703, 126
    %v3716 = vpop.permute.xlu0 %3715
    %3717 = vrot.lane.b32.xlu0 %v3706, 126
    %v3718 = vpop.permute.xlu0 %3717
    %3719 = vrot.lane.b32.xlu0 %v3708, 126
    %v3720 = vpop.permute.xlu0 %3719
    %3721 = vrot.lane.b32.xlu0 %v3710, 126
    %v3722 = vpop.permute.xlu0 %3721
    %v3729 = vadd.f32 %v3670, %v3712
    %v3730 = vadd.f32 %v3671, %v3714
    %v3731 = vadd.f32 %v3672, %v3716
    %v3732 = vadd.f32 %v3673, %v3718
    %v3733 = vadd.f32 %v3674, %v3720
    %v3734 = vadd.f32 %v3675, %v3722
    %3735 = vrot.lane.b32.xlu0 %v2515, 126
    %v3736 = vpop.permute.xlu0 %3735
    %s3737 = vtos %v3736
    %v3738 = vstv %s3737
    %v3740 = vmul.f32 %v2506, %v3738
    %v3741 = vmul.f32 %v2507, %v3738
    %v3742 = vmul.f32 %v2508, %v3738
    %v3743 = vmul.f32 %v2509, %v3738
    %v3744 = vmul.f32 %v2510, %v3738
    %v3745 = vmul.f32 %v2511, %v3738
    %v3746 = vmul.f32 %v2512, %v3738
    %v3747 = vmul.f32 %v2513, %v3738
    %v3756 = vrot.slane %v3740, 2
    %v3757 = vrot.slane %v3741, 2
    %v3758 = vsel %vm1155, %v3756, %v3757
    %v3759 = vrot.slane %v3742, 2
    %v3760 = vsel %vm1155, %v3757, %v3759
    %v3761 = vrot.slane %v3743, 2
    %v3762 = vsel %vm1155, %v3759, %v3761
    %v3763 = vrot.slane %v3744, 2
    %v3764 = vrot.slane %v3745, 2
    %v3765 = vsel %vm1155, %v3763, %v3764
    %v3766 = vrot.slane %v3746, 2
    %v3767 = vsel %vm1155, %v3764, %v3766
    %v3768 = vrot.slane %v3747, 2
    %v3769 = vsel %vm1155, %v3766, %v3768
    %3770 = vrot.lane.b32.xlu0 %v3758, 126
    %v3771 = vpop.permute.xlu0 %3770
    %3772 = vrot.lane.b32.xlu0 %v3760, 126
    %v3773 = vpop.permute.xlu0 %3772
    %3774 = vrot.lane.b32.xlu0 %v3762, 126
    %v3775 = vpop.permute.xlu0 %3774
    %3776 = vrot.lane.b32.xlu0 %v3765, 126
    %v3777 = vpop.permute.xlu0 %3776
    %3778 = vrot.lane.b32.xlu0 %v3767, 126
    %v3779 = vpop.permute.xlu0 %3778
    %3780 = vrot.lane.b32.xlu0 %v3769, 126
    %v3781 = vpop.permute.xlu0 %3780
    %v3788 = vadd.f32 %v3729, %v3771
    %v3789 = vadd.f32 %v3730, %v3773
    %v3790 = vadd.f32 %v3731, %v3775
    %v3791 = vadd.f32 %v3732, %v3777
    %v3792 = vadd.f32 %v3733, %v3779
    %v3793 = vadd.f32 %v3734, %v3781
    %v3794 = vld [vmem:[#allocation2] sm:$0x1]
    %v3796 = vlaneseq
    %v3797 = vshrl.u32 %v3796, 7
    %v3798 = vsub.s32 0, %v3797
    %v3799 = vrot.slane %v3794, %v3798
    %3800 = vset.pattern.permute.xlu0 0
    %3801 = vperm.xlu0 %3800, %v3799
    %v3802 = vpop.permute.xlu0 %3801
    %v3804 = vadd.f32 %v3788, %v3802
    %v3805 = vadd.f32 %v3789, %v3802
    %v3806 = vadd.f32 %v3790, %v3802
    %v3807 = vadd.f32 %v3791, %v3802
    %v3808 = vadd.f32 %v3792, %v3802
    %v3809 = vadd.f32 %v3793, %v3802
    %vm3810 = vcmask 195584
    %v3811 = vsel %vm3810, %v3804, 0.0
    %3812 = vadd.xlane.f32.xlu0 %v3811
    %v3813 = vpop.xlane.xlu0 %3812
    %v3814 = vsel %vm3810, %v3805, 0.0
    %3815 = vadd.xlane.f32.xlu0 %v3814
    %v3816 = vpop.xlane.xlu0 %3815
    %v3817 = vsel %vm3810, %v3806, 0.0
    %3818 = vadd.xlane.f32.xlu0 %v3817
    %v3819 = vpop.xlane.xlu0 %3818
    %v3820 = vsel %vm3810, %v3807, 0.0
    %3821 = vadd.xlane.f32.xlu0 %v3820
    %v3822 = vpop.xlane.xlu0 %3821
    %v3823 = vsel %vm3810, %v3808, 0.0
    %3824 = vadd.xlane.f32.xlu0 %v3823
    %v3825 = vpop.xlane.xlu0 %3824
    %v3826 = vsel %vm3810, %v3809, 0.0
    %3827 = vadd.xlane.f32.xlu0 %v3826
    %v3828 = vpop.xlane.xlu0 %3827
    %v3829 = vadd.f32 %v3813, %v3816
    %v3830 = vadd.f32 %v3829, %v3819
    %v3831 = vrot.slane %v3830, 4
    %v3832 = vadd.f32 %v3830, %v3831
    %v3833 = vrot.slane %v3832, 2
    %v3834 = vadd.f32 %v3832, %v3833
    %v3835 = vrot.slane %v3834, 1
    %v3836 = vadd.f32 %v3834, %v3835
    %v3837 = vadd.f32 %v3822, %v3825
    %v3838 = vadd.f32 %v3837, %v3828
    %v3839 = vrot.slane %v3838, 4
    %v3840 = vadd.f32 %v3838, %v3839
    %v3841 = vrot.slane %v3840, 2
    %v3842 = vadd.f32 %v3840, %v3841
    %v3843 = vrot.slane %v3842, 1
    %v3844 = vadd.f32 %v3842, %v3843
    %v3845 = vadd.f32 %v3836, %v3844
    %v3846 = vmul.f32 %v3845, 0.00086805556
    %v3847 = vsub.f32 %v3804, %v3846
    %v3848 = vsub.f32 %v3805, %v3846
    %v3849 = vsub.f32 %v3806, %v3846
    %v3850 = vsub.f32 %v3807, %v3846
    %v3851 = vsub.f32 %v3808, %v3846
    %v3852 = vsub.f32 %v3809, %v3846
    %v3853 = vmul.f32 %v3847, %v3847
    %v3854 = vmul.f32 %v3848, %v3848
    %v3855 = vmul.f32 %v3849, %v3849
    %v3856 = vmul.f32 %v3850, %v3850
    %v3857 = vmul.f32 %v3851, %v3851
    %v3858 = vmul.f32 %v3852, %v3852
    %v3859 = vsel %vm3810, %v3853, 0.0
    %3860 = vadd.xlane.f32.xlu0 %v3859
    %v3861 = vpop.xlane.xlu0 %3860
    %v3862 = vsel %vm3810, %v3854, 0.0
    %3863 = vadd.xlane.f32.xlu0 %v3862
    %v3864 = vpop.xlane.xlu0 %3863
    %v3865 = vsel %vm3810, %v3855, 0.0
    %3866 = vadd.xlane.f32.xlu0 %v3865
    %v3867 = vpop.xlane.xlu0 %3866
    %v3868 = vsel %vm3810, %v3856, 0.0
    %3869 = vadd.xlane.f32.xlu0 %v3868
    %v3870 = vpop.xlane.xlu0 %3869
    %v3871 = vsel %vm3810, %v3857, 0.0
    %3872 = vadd.xlane.f32.xlu0 %v3871
    %v3873 = vpop.xlane.xlu0 %3872
    %v3874 = vsel %vm3810, %v3858, 0.0
    %3875 = vadd.xlane.f32.xlu0 %v3874
    %v3876 = vpop.xlane.xlu0 %3875
    %v3877 = vadd.f32 %v3861, %v3864
    %v3878 = vadd.f32 %v3877, %v3867
    %v3879 = vrot.slane %v3878, 4
    %v3880 = vadd.f32 %v3878, %v3879
    %v3881 = vrot.slane %v3880, 2
    %v3882 = vadd.f32 %v3880, %v3881
    %v3883 = vrot.slane %v3882, 1
    %v3884 = vadd.f32 %v3882, %v3883
    %v3885 = vadd.f32 %v3870, %v3873
    %v3886 = vadd.f32 %v3885, %v3876
    %v3887 = vrot.slane %v3886, 4
    %v3888 = vadd.f32 %v3886, %v3887
    %v3889 = vrot.slane %v3888, 2
    %v3890 = vadd.f32 %v3888, %v3889
    %v3891 = vrot.slane %v3890, 1
    %v3892 = vadd.f32 %v3890, %v3891
    %v3893 = vadd.f32 %v3884, %v3892
    %v3894 = vmul.f32 %v3893, 0.00086805556
    %v3895 = vadd.f32 %v3894, 1e-05
    %v3896 = vrsqrt.pop %v3895
    %v3897 = vmul.f32 %v3847, %v3896
    %v3898 = vmul.f32 %v3848, %v3896
    %v3899 = vmul.f32 %v3849, %v3896
    %v3900 = vmul.f32 %v3850, %v3896
    %v3901 = vmul.f32 %v3851, %v3896
    %v3902 = vmul.f32 %v3852, %v3896
    %v3903 = vmax.f32 %v3897, 0.0
    %v3904 = vmax.f32 %v3898, 0.0
    %v3905 = vmax.f32 %v3899, 0.0
    %v3906 = vmax.f32 %v3900, 0.0
    %v3907 = vmax.f32 %v3901, 0.0
    %v3908 = vmax.f32 %v3902, 0.0
    %v3909 = vcombine.high %v3903, 0.0
    %v3911 = vunpack.c.l.s4 1983009808
    %v3912 = vunpack.c.0.s8 %v3911
    %v3913 = vlaneseq
    %v3914 = vshrl.u32 %v3913, 7
    %v3915 = vsub.s32 %v3912, %v3914
    %v3916 = vrot.slane %v3903, %v3915
    %v3918 = vunpack.c.l.s4 1983009808
    %v3919 = vunpack.c.0.s8 %v3918
    %v3920 = vlaneseq
    %v3921 = vshrl.u32 %v3920, 7
    %v3922 = vsub.s32 %v3919, %v3921
    %v3923 = vrot.slane %v3909, %v3922
    %v3924 = vcombine.high %v3906, 0.0
    %v3926 = vunpack.c.l.s4 1983009808
    %v3927 = vunpack.c.0.s8 %v3926
    %v3928 = vlaneseq
    %v3929 = vshrl.u32 %v3928, 7
    %v3930 = vsub.s32 %v3927, %v3929
    %v3931 = vrot.slane %v3906, %v3930
    %v3933 = vunpack.c.l.s4 1983009808
    %v3934 = vunpack.c.0.s8 %v3933
    %v3935 = vlaneseq
    %v3936 = vshrl.u32 %v3935, 7
    %v3937 = vsub.s32 %v3934, %v3936
    %v3938 = vrot.slane %v3924, %v3937
    %v3939 = vcombine.low %v3916, %v3931
    %v3940 = vcombine.high %v3916, %v3931
    %v3942 = vunpack.c.l.s4 1934713408
    %v3943 = vunpack.c.0.s8 %v3942
    %v3944 = vlaneseq
    %v3945 = vshrl.u32 %v3944, 7
    %v3946 = vsub.s32 %v3943, %v3945
    %v3947 = vrot.slane %v3939, %v3946
    %v3949 = vunpack.c.l.s4 1934713408
    %v3950 = vunpack.c.0.s8 %v3949
    %v3951 = vlaneseq
    %v3952 = vshrl.u32 %v3951, 7
    %v3953 = vsub.s32 %v3950, %v3952
    %v3954 = vrot.slane %v3940, %v3953
    %v3955 = vcombine.low %v3923, %v3938
    %v3956 = vcombine.high %v3923, %v3938
    %v3958 = vunpack.c.l.s4 1934713408
    %v3959 = vunpack.c.0.s8 %v3958
    %v3960 = vlaneseq
    %v3961 = vshrl.u32 %v3960, 7
    %v3962 = vsub.s32 %v3959, %v3961
    %v3963 = vrot.slane %v3955, %v3962
    %v3965 = vunpack.c.l.s4 1934713408
    %v3966 = vunpack.c.0.s8 %v3965
    %v3967 = vlaneseq
    %v3968 = vshrl.u32 %v3967, 7
    %v3969 = vsub.s32 %v3966, %v3968
    %v3970 = vrot.slane %v3956, %v3969
    %v3971 = vcombine.high %v3947, 0.0
    %v3972 = vcombine.high %v3954, 0.0
    %v3973 = vcombine.high %v3963, 0.0
    %v3974 = vcombine.high %v3970, 0.0
    %v3975 = vcombine.high %v3904, 0.0
    %v3977 = vunpack.c.l.s4 1983009808
    %v3978 = vunpack.c.0.s8 %v3977
    %v3979 = vlaneseq
    %v3980 = vshrl.u32 %v3979, 7
    %v3981 = vsub.s32 %v3978, %v3980
    %v3982 = vrot.slane %v3904, %v3981
    %v3984 = vunpack.c.l.s4 1983009808
    %v3985 = vunpack.c.0.s8 %v3984
    %v3986 = vlaneseq
    %v3987 = vshrl.u32 %v3986, 7
    %v3988 = vsub.s32 %v3985, %v3987
    %v3989 = vrot.slane %v3975, %v3988
    %v3990 = vcombine.high %v3907, 0.0
    %v3992 = vunpack.c.l.s4 1983009808
    %v3993 = vunpack.c.0.s8 %v3992
    %v3994 = vlaneseq
    %v3995 = vshrl.u32 %v3994, 7
    %v3996 = vsub.s32 %v3993, %v3995
    %v3997 = vrot.slane %v3907, %v3996
    %v3999 = vunpack.c.l.s4 1983009808
    %v4000 = vunpack.c.0.s8 %v3999
    %v4001 = vlaneseq
    %v4002 = vshrl.u32 %v4001, 7
    %v4003 = vsub.s32 %v4000, %v4002
    %v4004 = vrot.slane %v3990, %v4003
    %v4005 = vcombine.low %v3982, %v3997
    %v4006 = vcombine.high %v3982, %v3997
    %v4008 = vunpack.c.l.s4 1934713408
    %v4009 = vunpack.c.0.s8 %v4008
    %v4010 = vlaneseq
    %v4011 = vshrl.u32 %v4010, 7
    %v4012 = vsub.s32 %v4009, %v4011
    %v4013 = vrot.slane %v4005, %v4012
    %v4015 = vunpack.c.l.s4 1934713408
    %v4016 = vunpack.c.0.s8 %v4015
    %v4017 = vlaneseq
    %v4018 = vshrl.u32 %v4017, 7
    %v4019 = vsub.s32 %v4016, %v4018
    %v4020 = vrot.slane %v4006, %v4019
    %v4021 = vcombine.low %v3989, %v4004
    %v4022 = vcombine.high %v3989, %v4004
    %v4024 = vunpack.c.l.s4 1934713408
    %v4025 = vunpack.c.0.s8 %v4024
    %v4026 = vlaneseq
    %v4027 = vshrl.u32 %v4026, 7
    %v4028 = vsub.s32 %v4025, %v4027
    %v4029 = vrot.slane %v4021, %v4028
    %v4031 = vunpack.c.l.s4 1934713408
    %v4032 = vunpack.c.0.s8 %v4031
    %v4033 = vlaneseq
    %v4034 = vshrl.u32 %v4033, 7
    %v4035 = vsub.s32 %v4032, %v4034
    %v4036 = vrot.slane %v4022, %v4035
    %v4037 = vcombine.high %v4013, 0.0
    %v4038 = vcombine.high %v4020, 0.0
    %v4039 = vcombine.high %v4029, 0.0
    %v4040 = vcombine.high %v4036, 0.0
    %v4041 = vcombine.high %v3905, 0.0
    %v4043 = vunpack.c.l.s4 1983009808
    %v4044 = vunpack.c.0.s8 %v4043
    %v4045 = vlaneseq
    %v4046 = vshrl.u32 %v4045, 7
    %v4047 = vsub.s32 %v4044, %v4046
    %v4048 = vrot.slane %v3905, %v4047
    %v4050 = vunpack.c.l.s4 1983009808
    %v4051 = vunpack.c.0.s8 %v4050
    %v4052 = vlaneseq
    %v4053 = vshrl.u32 %v4052, 7
    %v4054 = vsub.s32 %v4051, %v4053
    %v4055 = vrot.slane %v4041, %v4054
    %v4056 = vcombine.high %v3908, 0.0
    %v4058 = vunpack.c.l.s4 1983009808
    %v4059 = vunpack.c.0.s8 %v4058
    %v4060 = vlaneseq
    %v4061 = vshrl.u32 %v4060, 7
    %v4062 = vsub.s32 %v4059, %v4061
    %v4063 = vrot.slane %v3908, %v4062
    %v4065 = vunpack.c.l.s4 1983009808
    %v4066 = vunpack.c.0.s8 %v4065
    %v4067 = vlaneseq
    %v4068 = vshrl.u32 %v4067, 7
    %v4069 = vsub.s32 %v4066, %v4068
    %v4070 = vrot.slane %v4056, %v4069
    %v4071 = vcombine.low %v4048, %v4063
    %v4072 = vcombine.high %v4048, %v4063
    %v4074 = vunpack.c.l.s4 1934713408
    %v4075 = vunpack.c.0.s8 %v4074
    %v4076 = vlaneseq
    %v4077 = vshrl.u32 %v4076, 7
    %v4078 = vsub.s32 %v4075, %v4077
    %v4079 = vrot.slane %v4071, %v4078
    %v4081 = vunpack.c.l.s4 1934713408
    %v4082 = vunpack.c.0.s8 %v4081
    %v4083 = vlaneseq
    %v4084 = vshrl.u32 %v4083, 7
    %v4085 = vsub.s32 %v4082, %v4084
    %v4086 = vrot.slane %v4072, %v4085
    %v4087 = vcombine.low %v4055, %v4070
    %v4088 = vcombine.high %v4055, %v4070
    %v4090 = vunpack.c.l.s4 1934713408
    %v4091 = vunpack.c.0.s8 %v4090
    %v4092 = vlaneseq
    %v4093 = vshrl.u32 %v4092, 7
    %v4094 = vsub.s32 %v4091, %v4093
    %v4095 = vrot.slane %v4087, %v4094
    %v4097 = vunpack.c.l.s4 1934713408
    %v4098 = vunpack.c.0.s8 %v4097
    %v4099 = vlaneseq
    %v4100 = vshrl.u32 %v4099, 7
    %v4101 = vsub.s32 %v4098, %v4100
    %v4102 = vrot.slane %v4088, %v4101
    %v4103 = vcombine.high %v4079, 0.0
    %v4104 = vcombine.high %v4086, 0.0
    %v4105 = vcombine.high %v4095, 0.0
    %v4106 = vcombine.high %v4102, 0.0
    %4108 = vrot.lane.b32.xlu0 %v3971, 24
    %v4109 = vpop.permute.xlu0 %4108
    %4112 = vrot.lane.b32.xlu0 %v3954, 48
    %v4113 = vpop.permute.xlu0 %4112
    %4116 = vrot.lane.b32.xlu0 %v3972, 72
    %v4117 = vpop.permute.xlu0 %4116
    %4120 = vrot.lane.b32.xlu0 %v3963, 96
    %v4121 = vpop.permute.xlu0 %4120
    %4124 = vrot.lane.b32.xlu0 %v3973, 120
    %v4125 = vpop.permute.xlu0 %4124
    %4128 = vrot.lane.b32.xlu0 %v3970, 16
    %v4129 = vpop.permute.xlu0 %4128
    %4132 = vrot.lane.b32.xlu0 %v3974, 40
    %v4133 = vpop.permute.xlu0 %4132
    %4136 = vrot.lane.b32.xlu0 %v4013, 64
    %v4137 = vpop.permute.xlu0 %4136
    %4140 = vrot.lane.b32.xlu0 %v4037, 88
    %v4141 = vpop.permute.xlu0 %4140
    %4144 = vrot.lane.b32.xlu0 %v4020, 112
    %v4145 = vpop.permute.xlu0 %4144
    %4148 = vrot.lane.b32.xlu0 %v4038, 8
    %v4149 = vpop.permute.xlu0 %4148
    %4152 = vrot.lane.b32.xlu0 %v4029, 32
    %v4153 = vpop.permute.xlu0 %4152
    %4156 = vrot.lane.b32.xlu0 %v4039, 56
    %v4157 = vpop.permute.xlu0 %4156
    %4160 = vrot.lane.b32.xlu0 %v4036, 80
    %v4161 = vpop.permute.xlu0 %4160
    %4164 = vrot.lane.b32.xlu0 %v4040, 104
    %v4165 = vpop.permute.xlu0 %4164
    %4168 = vrot.lane.b32.xlu0 %v4103, 24
    %v4169 = vpop.permute.xlu0 %4168
    %4172 = vrot.lane.b32.xlu0 %v4086, 48
    %v4173 = vpop.permute.xlu0 %4172
    %4176 = vrot.lane.b32.xlu0 %v4104, 72
    %v4177 = vpop.permute.xlu0 %4176
    %4180 = vrot.lane.b32.xlu0 %v4095, 96
    %v4181 = vpop.permute.xlu0 %4180
    %4184 = vrot.lane.b32.xlu0 %v4105, 120
    %v4185 = vpop.permute.xlu0 %4184
    %4188 = vrot.lane.b32.xlu0 %v4102, 16
    %v4189 = vpop.permute.xlu0 %4188
    %4192 = vrot.lane.b32.xlu0 %v4106, 40
    %v4193 = vpop.permute.xlu0 %4192
    %v4195 = vsel %vm3810, %v3947, %v4109
    %vm4196 = vcmask 392192
    %v4197 = vsel %vm4196, %v4195, %v4113
    %vm4198 = vcmask 588800
    %v4199 = vsel %vm4198, %v4197, %v4117
    %vm4200 = vcmask 785408
    %v4201 = vsel %vm4200, %v4199, %v4121
    %vm4202 = vcmask 982016
    %v4203 = vsel %vm4202, %v4201, %v4125
    %vm4204 = vcmask 130048
    %v4205 = vsel %vm4204, %v4125, %v4129
    %vm4206 = vcmask 326656
    %v4207 = vsel %vm4206, %v4205, %v4133
    %vm4208 = vcmask 523264
    %v4209 = vsel %vm4208, %v4207, %v4137
    %vm4210 = vcmask 719872
    %v4211 = vsel %vm4210, %v4209, %v4141
    %vm4212 = vcmask 916480
    %v4213 = vsel %vm4212, %v4211, %v4145
    %vm4214 = vcmask 64512
    %v4215 = vsel %vm4214, %v4145, %v4149
    %vm4216 = vcmask 261120
    %v4217 = vsel %vm4216, %v4215, %v4153
    %vm4218 = vcmask 457728
    %v4219 = vsel %vm4218, %v4217, %v4157
    %vm4220 = vcmask 654336
    %v4221 = vsel %vm4220, %v4219, %v4161
    %vm4222 = vcmask 850944
    %v4223 = vsel %vm4222, %v4221, %v4165
    %v4224 = vsel %vm3810, %v4079, %v4169
    %v4225 = vsel %vm4196, %v4224, %v4173
    %v4226 = vsel %vm4198, %v4225, %v4177
    %v4227 = vsel %vm4200, %v4226, %v4181
    %v4228 = vsel %vm4202, %v4227, %v4185
    %v4229 = vsel %vm4204, %v4185, %v4189
    %v4230 = vsel %vm4206, %v4229, %v4193
    %v4231 = vsel %vm1733, %v4203, inf
    %v4232 = vsel %vm1733, %v4213, inf
    %v4233 = vsel %vm1733, %v4223, inf
    %v4234 = vsel %vm1733, %v4228, inf
    %vm4235 = vcmask 517120
    %v4236 = vsel %vm4235, %v4230, inf
    %v4237 = vmin.f32 %v4231, %v4236
    %v4238 = vmin.f32 %v4237, %v4232
    %v4239 = vmin.f32 %v4233, %v4234
    %v4240 = vmin.f32 %v4238, %v4239
    %4241 = vmin.xlane.f32.xlu0 %v4240
    %v4242 = vpop.xlane.xlu0 %4241
    %v4243 = vsel %vm1733, %v4203, -inf
    %v4244 = vsel %vm1733, %v4213, -inf
    %v4245 = vsel %vm1733, %v4223, -inf
    %v4246 = vsel %vm1733, %v4228, -inf
    %v4247 = vsel %vm4235, %v4230, -inf
    %v4248 = vmax.f32 %v4243, %v4247
    %v4249 = vmax.f32 %v4248, %v4244
    %v4250 = vmax.f32 %v4245, %v4246
    %v4251 = vmax.f32 %v4249, %v4250
    %4252 = vmax.xlane.f32.xlu0 %v4251
    %v4253 = vpop.xlane.xlu0 %4252
    %v4254 = vsub.f32 %v4253, %v4242
    %v4255 = vmul.f32 %v4254, 0.06666667
    %vm4256 = vcmp.eq.f32.partialorder %v4255, 0.0
    %v4257 = vsel %vm4256, 1.0, %v4255
    %v4258 = vrcp.pop %v4257
    %v4259 = vmul.f32 1.0, %v4258
    %v4260 = vsub.f32 %v4203, %v4242
    %v4261 = vsub.f32 %v4213, %v4242
    %v4262 = vsub.f32 %v4223, %v4242
    %v4263 = vsub.f32 %v4228, %v4242
    %v4264 = vsub.f32 %v4230, %v4242
    %v4265 = vmul.f32 %v4260, %v4259
    %v4266 = vmul.f32 %v4261, %v4259
    %v4267 = vmul.f32 %v4262, %v4259
    %v4268 = vmul.f32 %v4263, %v4259
    %v4269 = vmul.f32 %v4264, %v4259
    %v4270 = vround.ne.pseudo %v4265
    %v4271 = vround.ne.pseudo %v4266
    %v4272 = vround.ne.pseudo %v4267
    %v4273 = vround.ne.pseudo %v4268
    %v4274 = vround.ne.pseudo %v4269
    %v4275 = vmul.f32 %v4270, %v4255
    %v4276 = vmul.f32 %v4271, %v4255
    %v4277 = vmul.f32 %v4272, %v4255
    %v4278 = vmul.f32 %v4273, %v4255
    %v4279 = vmul.f32 %v4274, %v4255
    %v4280 = vadd.f32 %v4275, %v4242
    %v4281 = vadd.f32 %v4276, %v4242
    %v4282 = vadd.f32 %v4277, %v4242
    %v4283 = vadd.f32 %v4278, %v4242
    %v4284 = vadd.f32 %v4279, %v4242
    %v4285 = vpack.c.bf16 %v4280, %v4280
    %v4286 = vpack.c.bf16 %v4281, %v4281
    %v4287 = vpack.c.bf16 %v4282, %v4282
    %v4288 = vpack.c.bf16 %v4283, %v4283
    %v4289 = vpack.c.bf16 %v4284, %v4284
    %v4290 = vld [vmem:[#allocation3] sm:$0xff]
    %v4291 = vld [vmem:[#allocation3 + $0x8] sm:$0xff]
    %v4292 = vld [vmem:[#allocation3 + $0x10] sm:$0xff]
    %v4293 = vld [vmem:[#allocation3 + $0x18] sm:$0xff]
    %v4294 = vld [vmem:[#allocation3 + $0x20] sm:$0xff]
    %v4295 = vld [vmem:[#allocation3 + $0x28] sm:$0xff]
    %v4296 = vld [vmem:[#allocation3 + $0x30] sm:$0xff]
    %v4297 = vld [vmem:[#allocation3 + $0x38] sm:$0xff]
    %v4298 = vld [vmem:[#allocation3 + $0x40] sm:$0xff]
    %v4299 = vld [vmem:[#allocation3 + $0x48] sm:$0xff]
    %v4300 = vld [vmem:[#allocation3 + $0x50] sm:$0xff]
    %v4301 = vld [vmem:[#allocation3 + $0x58] sm:$0xff]
    %v4302 = vld [vmem:[#allocation3 + $0x60] sm:$0xff]
    %v4303 = vld [vmem:[#allocation3 + $0x68] sm:$0xff]
    %v4304 = vld [vmem:[#allocation3 + $0x70] sm:$0xff]
    %v4305 = vld [vmem:[#allocation3 + $0x78] sm:$0xff]
    %v4306 = vld [vmem:[#allocation3 + $0x80] sm:$0xff]
    %v4307 = vld [vmem:[#allocation3 + $0x88] sm:$0xff]
    %v4308 = vld [vmem:[#allocation3 + $0x90] sm:$0xff]
    %v4309 = vld [vmem:[#allocation3 + $0x98] sm:$0xff]
    %v4310 = vld [vmem:[#allocation3 + $0xa0] sm:$0xff]
    %v4311 = vld [vmem:[#allocation3 + $0xa8] sm:$0xff]
    %v4312 = vld [vmem:[#allocation3 + $0xb0] sm:$0xff]
    %v4313 = vld [vmem:[#allocation3 + $0xb8] sm:$0xff]
    %v4314 = vld [vmem:[#allocation3 + $0xc0] sm:$0xff]
    %v4315 = vld [vmem:[#allocation3 + $0xc8] sm:$0xff]
    %v4316 = vld [vmem:[#allocation3 + $0xd0] sm:$0xff]
    %v4317 = vld [vmem:[#allocation3 + $0xd8] sm:$0xff]
    %v4318 = vld [vmem:[#allocation3 + $0xe0] sm:$0xff]
    %v4319 = vld [vmem:[#allocation3 + $0xe8] sm:$0xff]
    %v4320 = vld [vmem:[#allocation3 + $0xf0] sm:$0xff]
    %v4321 = vld [vmem:[#allocation3 + $0xf8] sm:$0xff]
    %v4322 = vld [vmem:[#allocation3 + $0x100] sm:$0xff]
    %v4323 = vld [vmem:[#allocation3 + $0x108] sm:$0xff]
    %v4324 = vld [vmem:[#allocation3 + $0x110] sm:$0xff]
    %v4325 = vld [vmem:[#allocation3 + $0x118] sm:$0xff]
    %v4326 = vld [vmem:[#allocation3 + $0x120] sm:$0xff]
    %v4327 = vld [vmem:[#allocation3 + $0x128] sm:$0xff]
    %v4328 = vld [vmem:[#allocation3 + $0x130] sm:$0xff]
    %v4329 = vld [vmem:[#allocation3 + $0x138] sm:$0xff]
    %v4330 = vld [vmem:[#allocation3 + $0x140] sm:$0xff]
    %v4331 = vld [vmem:[#allocation3 + $0x148] sm:$0xff]
    %v4332 = vld [vmem:[#allocation3 + $0x150] sm:$0xff]
    %v4333 = vld [vmem:[#allocation3 + $0x158] sm:$0xff]
    %v4334 = vld [vmem:[#allocation3 + $0x160] sm:$0xff]
    %v4335 = vld [vmem:[#allocation3 + $0x168] sm:$0xff]
    %v4336 = vld [vmem:[#allocation3 + $0x170] sm:$0xff]
    %v4337 = vld [vmem:[#allocation3 + $0x178] sm:$0xff]
    %v4338 = vld [vmem:[#allocation3 + $0x180] sm:$0xff]
    %v4339 = vld [vmem:[#allocation3 + $0x188] sm:$0xff]
    %v4340 = vld [vmem:[#allocation3 + $0x190] sm:$0xff]
    %v4341 = vld [vmem:[#allocation3 + $0x198] sm:$0xff]
    %v4342 = vld [vmem:[#allocation3 + $0x1a0] sm:$0xff]
    %v4343 = vld [vmem:[#allocation3 + $0x1a8] sm:$0xff]
    %v4344 = vld [vmem:[#allocation3 + $0x1b0] sm:$0xff]
    %v4345 = vld [vmem:[#allocation3 + $0x1b8] sm:$0xff]
    %v4346 = vld [vmem:[#allocation3 + $0x1c0] sm:$0xff]
    %v4347 = vld [vmem:[#allocation3 + $0x1c8] sm:$0xff]
    %v4348 = vld [vmem:[#allocation3 + $0x1d0] sm:$0xff]
    %v4349 = vld [vmem:[#allocation3 + $0x1d8] sm:$0xff]
    %v4350 = vld [vmem:[#allocation3 + $0x1e0] sm:$0xff]
    %v4351 = vld [vmem:[#allocation3 + $0x1e8] sm:$0xff]
    %v4352 = vld [vmem:[#allocation3 + $0x1f0] sm:$0xff]
    %v4353 = vld [vmem:[#allocation3 + $0x1f8] sm:$0xff]
    %v4354 = vld [vmem:[#allocation3 + $0x200] sm:$0xff]
    %v4355 = vld [vmem:[#allocation3 + $0x208] sm:$0xff]
    %v4356 = vld [vmem:[#allocation3 + $0x210] sm:$0xff]
    %v4357 = vld [vmem:[#allocation3 + $0x218] sm:$0xff]
    %v4358 = vld [vmem:[#allocation3 + $0x220] sm:$0xff]
    %v4359 = vld [vmem:[#allocation3 + $0x228] sm:$0xff]
    %v4360 = vld [vmem:[#allocation3 + $0x230] sm:$0xff]
    %v4361 = vld [vmem:[#allocation3 + $0x238] sm:$0xff]
    %v4362 = vpack.c.bf16 %v4291, %v4290
    %v4363 = vpack.c.bf16 %v4293, %v4292
    %v4364 = vpack.c.bf16 %v4295, %v4294
    %v4365 = vpack.c.bf16 %v4297, %v4296
    %v4366 = vpack.c.bf16 %v4299, %v4298
    %v4367 = vpack.c.bf16 %v4301, %v4300
    %v4368 = vpack.c.bf16 %v4303, %v4302
    %v4369 = vpack.c.bf16 %v4305, %v4304
    %v4370 = vpack.c.bf16 %v4307, %v4306
    %v4371 = vpack.c.bf16 %v4309, %v4308
    %v4372 = vpack.c.bf16 %v4311, %v4310
    %v4373 = vpack.c.bf16 %v4313, %v4312
    %v4374 = vpack.c.bf16 %v4315, %v4314
    %v4375 = vpack.c.bf16 %v4317, %v4316
    %v4376 = vpack.c.bf16 %v4319, %v4318
    %v4377 = vpack.c.bf16 %v4321, %v4320
    %v4378 = vpack.c.bf16 %v4323, %v4322
    %v4379 = vpack.c.bf16 %v4325, %v4324
    %v4380 = vpack.c.bf16 %v4327, %v4326
    %v4381 = vpack.c.bf16 %v4329, %v4328
    %v4382 = vpack.c.bf16 %v4331, %v4330
    %v4383 = vpack.c.bf16 %v4333, %v4332
    %v4384 = vpack.c.bf16 %v4335, %v4334
    %v4385 = vpack.c.bf16 %v4337, %v4336
    %v4386 = vpack.c.bf16 %v4339, %v4338
    %v4387 = vpack.c.bf16 %v4341, %v4340
    %v4388 = vpack.c.bf16 %v4343, %v4342
    %v4389 = vpack.c.bf16 %v4345, %v4344
    %v4390 = vpack.c.bf16 %v4347, %v4346
    %v4391 = vpack.c.bf16 %v4349, %v4348
    %v4392 = vpack.c.bf16 %v4351, %v4350
    %v4393 = vpack.c.bf16 %v4353, %v4352
    %v4394 = vpack.c.bf16 %v4355, %v4354
    %v4395 = vpack.c.bf16 %v4357, %v4356
    %v4396 = vpack.c.bf16 %v4359, %v4358
    %v4397 = vpack.c.bf16 %v4361, %v4360
    %v4398 = vld [vmem:[%s6] sm:$0x1]
    %v4400 = vlaneseq
    %v4401 = vshrl.u32 %v4400, 7
    %v4402 = vsub.s32 0, %v4401
    %v4403 = vrot.slane %v4398, %v4402
    %v4406 = vsel %vm4208, %v4289, 0
    %4408 = vmatprep.subr.bf16.mxu0 0
    %4409 = vmatpush1.bf16.msra.mxu0 %v4369
    %4410 = vmatprep.subr.bf16.mxu0 0
    %4411 = vmatpush1.bf16.msra.mxu0 %v4368
    %4412 = vmatprep.subr.bf16.mxu0 0
    %4413 = vmatpush1.bf16.msra.mxu0 %v4367
    %4414 = vmatprep.subr.bf16.mxu0 0
    %4415 = vmatpush1.bf16.msra.mxu0 %v4366
    %4416 = vmatprep.subr.bf16.mxu0 0
    %4417 = vmatpush1.bf16.msra.mxu0 %v4365
    %4418 = vmatprep.subr.bf16.mxu0 0
    %4419 = vmatpush1.bf16.msra.mxu0 %v4364
    %4420 = vmatprep.subr.bf16.mxu0 0
    %4421 = vmatpush1.bf16.msra.mxu0 %v4363
    %4422 = vmatprep.subr.bf16.mxu0 0
    %4423 = vmatpush1.bf16.msra.mxu0 %v4362
    %4424 = vmatprep.subr.bf16.mxu0 0
    %4425 = vmatpush2.bf16.msra.mxu0 %v4377
    %4426 = vmatprep.subr.bf16.mxu0 0
    %4427 = vmatpush2.bf16.msra.mxu0 %v4376
    %4428 = vmatprep.subr.bf16.mxu0 0
    %4429 = vmatpush2.bf16.msra.mxu0 %v4375
    %4430 = vmatprep.subr.bf16.mxu0 0
    %4431 = vmatpush2.bf16.msra.mxu0 %v4374
    %4432 = vmatprep.subr.bf16.mxu0 0
    %4433 = vmatpush2.bf16.msra.mxu0 %v4373
    %4434 = vmatprep.subr.bf16.mxu0 0
    %4435 = vmatpush2.bf16.msra.mxu0 %v4372
    %4436 = vmatprep.subr.bf16.mxu0 0
    %4437 = vmatpush2.bf16.msra.mxu0 %v4371
    %4438 = vmatprep.subr.bf16.mxu0 0
    %4439 = vmatpush2.bf16.msra.mxu0 %v4370
    %4440 = vmatprep.mubr.bf16.mxu0 %v4286
    %4441 = vmatmul.mubr.bf16.gmra.mxu0 %v4285
    %v4442 = vpop.f32.mrf.mxu0
    %v4443 = vadd.f32 %v4403, %v4442
    %v4444 = vpop.f32.mrf.mxu0
    %v4445 = vpop.f32.mrf.mxu0
    %v4446 = vpop.f32.mrf.mxu0
    %4447 = vdwg.mxu0
    %4448 = vmatprep.subr.bf16.mxu0 0
    %4449 = vmatpush1.bf16.msra.mxu0 %v4385
    %4450 = vmatprep.subr.bf16.mxu0 0
    %4451 = vmatpush1.bf16.msra.mxu0 %v4384
    %4452 = vmatprep.subr.bf16.mxu0 0
    %4453 = vmatpush1.bf16.msra.mxu0 %v4383
    %4454 = vmatprep.subr.bf16.mxu0 0
    %4455 = vmatpush1.bf16.msra.mxu0 %v4382
    %4456 = vmatprep.subr.bf16.mxu0 0
    %4457 = vmatpush1.bf16.msra.mxu0 %v4381
    %4458 = vmatprep.subr.bf16.mxu0 0
    %4459 = vmatpush1.bf16.msra.mxu0 %v4380
    %4460 = vmatprep.subr.bf16.mxu0 0
    %4461 = vmatpush1.bf16.msra.mxu0 %v4379
    %4462 = vmatprep.subr.bf16.mxu0 0
    %4463 = vmatpush1.bf16.msra.mxu0 %v4378
    %4464 = vmatprep.subr.bf16.mxu0 0
    %4465 = vmatpush2.bf16.msra.mxu0 %v4393
    %4466 = vmatprep.subr.bf16.mxu0 0
    %4467 = vmatpush2.bf16.msra.mxu0 %v4392
    %4468 = vmatprep.subr.bf16.mxu0 0
    %4469 = vmatpush2.bf16.msra.mxu0 %v4391
    %4470 = vmatprep.subr.bf16.mxu0 0
    %4471 = vmatpush2.bf16.msra.mxu0 %v4390
    %4472 = vmatprep.subr.bf16.mxu0 0
    %4473 = vmatpush2.bf16.msra.mxu0 %v4389
    %4474 = vmatprep.subr.bf16.mxu0 0
    %4475 = vmatpush2.bf16.msra.mxu0 %v4388
    %4476 = vmatprep.subr.bf16.mxu0 0
    %4477 = vmatpush2.bf16.msra.mxu0 %v4387
    %4478 = vmatprep.subr.bf16.mxu0 0
    %4479 = vmatpush2.bf16.msra.mxu0 %v4386
    %4480 = vmatprep.mubr.bf16.mxu0 %v4288
    %4481 = vmatmul.mubr.bf16.gmra.mxu0 %v4287
    %v4482 = vpop.f32.mrf.mxu0
    %v4483 = vadd.f32 %v4443, %v4482
    %v4484 = vpop.f32.mrf.mxu0
    %v4485 = vpop.f32.mrf.mxu0
    %v4486 = vpop.f32.mrf.mxu0
    %4487 = vdwg.mxu0
    %4488 = vmatprep.subr.bf16.mxu0 0
    %4489 = vmatpush1.bf16.msra.mxu0 0
    %4490 = vmatprep.subr.bf16.mxu0 0
    %4491 = vmatpush1.bf16.msra.mxu0 0
    %4492 = vmatprep.subr.bf16.mxu0 0
    %4493 = vmatpush1.bf16.msra.mxu0 0
    %4494 = vmatprep.subr.bf16.mxu0 0
    %4495 = vmatpush1.bf16.msra.mxu0 0
    %4496 = vmatprep.subr.bf16.mxu0 0
    %4497 = vmatpush1.bf16.msra.mxu0 %v4397
    %4498 = vmatprep.subr.bf16.mxu0 0
    %4499 = vmatpush1.bf16.msra.mxu0 %v4396
    %4500 = vmatprep.subr.bf16.mxu0 0
    %4501 = vmatpush1.bf16.msra.mxu0 %v4395
    %4502 = vmatprep.subr.bf16.mxu0 0
    %4503 = vmatpush1.bf16.msra.mxu0 %v4394
    %4504 = vmatprep.subr.bf16.mxu0 0
    %4505 = vmatpush2.bf16.msra.mxu0 0
    %4506 = vmatprep.subr.bf16.mxu0 0
    %4507 = vmatpush2.bf16.msra.mxu0 0
    %4508 = vmatprep.subr.bf16.mxu0 0
    %4509 = vmatpush2.bf16.msra.mxu0 0
    %4510 = vmatprep.subr.bf16.mxu0 0
    %4511 = vmatpush2.bf16.msra.mxu0 0
    %4512 = vmatprep.subr.bf16.mxu0 0
    %4513 = vmatpush2.bf16.msra.mxu0 0
    %4514 = vmatprep.subr.bf16.mxu0 0
    %4515 = vmatpush2.bf16.msra.mxu0 0
    %4516 = vmatprep.subr.bf16.mxu0 0
    %4517 = vmatpush2.bf16.msra.mxu0 0
    %4518 = vmatprep.subr.bf16.mxu0 0
    %4519 = vmatpush2.bf16.msra.mxu0 0
    %4520 = vmatprep.mubr.bf16.mxu0 0
    %4521 = vmatmul.mubr.bf16.gmra.mxu0 %v4406
    %v4522 = vpop.f32.mrf.mxu0
    %v4523 = vadd.f32 %v4483, %v4522
    %v4524 = vpop.f32.mrf.mxu0
    %v4525 = vpop.f32.mrf.mxu0
    %v4526 = vpop.f32.mrf.mxu0
    %4527 = vdwg.mxu0
    %v4528 = vsel %vm1733, %v4523, 0.0
    %v4529 = vrot.slane %v4528, 4
    %v4530 = vadd.f32 %v4528, %v4529
    %v4531 = vrot.slane %v4530, 2
    %v4532 = vadd.f32 %v4530, %v4531
    %v4533 = vrot.slane %v4532, 1
    %v4534 = vadd.f32 %v4532, %v4533
    %v4535 = vrcp.pop 2.0
    %v4536 = vmul.f32 %v4534, %v4535
    %v4537 = vsub.f32 %v4523, %v4536
    %v4538 = vmul.f32 %v4537, %v4537
    %v4539 = vsel %vm1733, %v4538, 0.0
    %v4540 = vrot.slane %v4539, 4
    %v4541 = vadd.f32 %v4539, %v4540
    %v4542 = vrot.slane %v4541, 2
    %v4543 = vadd.f32 %v4541, %v4542
    %v4544 = vrot.slane %v4543, 1
    %v4545 = vadd.f32 %v4543, %v4544
    %v4546 = vmul.f32 %v4545, %v4535
    %v4547 = vadd.f32 %v4546, 1e-05
    %v4548 = vrsqrt.pop %v4547
    %v4549 = vmul.f32 %v4537, %v4548
    %v4550 = vmax.f32 %v4549, 0.0
    %v4551 = vld [vmem:[%s7] sm:$0xff]
    %v4552 = vld [vmem:[%s7 + $0x8] sm:$0xff]
    %v4553 = vld [vmem:[%s7 + $0x10] sm:$0xff]
    %v4554 = vld [vmem:[%s7 + $0x18] sm:$0xff]
    %v4555 = vld [vmem:[%s7 + $0x20] sm:$0xff]
    %v4556 = vld [vmem:[%s7 + $0x28] sm:$0xff]
    %v4557 = vld [vmem:[%s7 + $0x30] sm:$0xff]
    %v4558 = vld [vmem:[%s7 + $0x38] sm:$0xff]
    %v4559 = vld [vmem:[%s7 + $0x40] sm:$0xff]
    %v4560 = vld [vmem:[%s7 + $0x48] sm:$0xff]
    %v4561 = vld [vmem:[%s7 + $0x50] sm:$0xff]
    %v4562 = vld [vmem:[%s7 + $0x58] sm:$0xff]
    %v4563 = vld [vmem:[%s7 + $0x60] sm:$0xff]
    %v4564 = vld [vmem:[%s7 + $0x68] sm:$0xff]
    %v4565 = vld [vmem:[%s7 + $0x70] sm:$0xff]
    %v4566 = vld [vmem:[%s7 + $0x78] sm:$0xff]
    %v4567 = vld [vmem:[%s8] sm:$0x1]
    %v4569 = vlaneseq
    %v4570 = vshrl.u32 %v4569, 7
    %v4571 = vsub.s32 0, %v4570
    %v4572 = vrot.slane %v4567, %v4571
    %4574 = vmatprep.subr.mxu0 0.0
    %4575 = vmatpush1.msra.mxu0 %v4566
    %4576 = vmatprep.subr.mxu0 0.0
    %4577 = vmatpush1.msra.mxu0 %v4565
    %4578 = vmatprep.subr.mxu0 0.0
    %4579 = vmatpush1.msra.mxu0 %v4564
    %4580 = vmatprep.subr.mxu0 0.0
    %4581 = vmatpush1.msra.mxu0 %v4563
    %4582 = vmatprep.subr.mxu0 0.0
    %4583 = vmatpush1.msra.mxu0 %v4562
    %4584 = vmatprep.subr.mxu0 0.0
    %4585 = vmatpush1.msra.mxu0 %v4561
    %4586 = vmatprep.subr.mxu0 0.0
    %4587 = vmatpush1.msra.mxu0 %v4560
    %4588 = vmatprep.subr.mxu0 0.0
    %4589 = vmatpush1.msra.mxu0 %v4559
    %4590 = vmatprep.subr.mxu0 0.0
    %4591 = vmatpush1.msra.mxu0 %v4558
    %4592 = vmatprep.subr.mxu0 0.0
    %4593 = vmatpush1.msra.mxu0 %v4557
    %4594 = vmatprep.subr.mxu0 0.0
    %4595 = vmatpush1.msra.mxu0 %v4556
    %4596 = vmatprep.subr.mxu0 0.0
    %4597 = vmatpush1.msra.mxu0 %v4555
    %4598 = vmatprep.subr.mxu0 0.0
    %4599 = vmatpush1.msra.mxu0 %v4554
    %4600 = vmatprep.subr.mxu0 0.0
    %4601 = vmatpush1.msra.mxu0 %v4553
    %4602 = vmatprep.subr.mxu0 0.0
    %4603 = vmatpush1.msra.mxu0 %v4552
    %4604 = vmatprep.subr.mxu0 0.0
    %4605 = vmatpush1.msra.mxu0 %v4551
    %4606 = vmatprep.subr.mxu0 0.0
    %4607 = vmatpush2.msra.mxu0 0.0
    %4608 = vmatprep.subr.mxu0 0.0
    %4609 = vmatpush2.msra.mxu0 0.0
    %4610 = vmatprep.subr.mxu0 0.0
    %4611 = vmatpush2.msra.mxu0 0.0
    %4612 = vmatprep.subr.mxu0 0.0
    %4613 = vmatpush2.msra.mxu0 0.0
    %4614 = vmatprep.subr.mxu0 0.0
    %4615 = vmatpush2.msra.mxu0 0.0
    %4616 = vmatprep.subr.mxu0 0.0
    %4617 = vmatpush2.msra.mxu0 0.0
    %4618 = vmatprep.subr.mxu0 0.0
    %4619 = vmatpush2.msra.mxu0 0.0
    %4620 = vmatprep.subr.mxu0 0.0
    %4621 = vmatpush2.msra.mxu0 0.0
    %4622 = vmatprep.subr.mxu0 0.0
    %4623 = vmatpush2.msra.mxu0 0.0
    %4624 = vmatprep.subr.mxu0 0.0
    %4625 = vmatpush2.msra.mxu0 0.0
    %4626 = vmatprep.subr.mxu0 0.0
    %4627 = vmatpush2.msra.mxu0 0.0
    %4628 = vmatprep.subr.mxu0 0.0
    %4629 = vmatpush2.msra.mxu0 0.0
    %4630 = vmatprep.subr.mxu0 0.0
    %4631 = vmatpush2.msra.mxu0 0.0
    %4632 = vmatprep.subr.mxu0 0.0
    %4633 = vmatpush2.msra.mxu0 0.0
    %4634 = vmatprep.subr.mxu0 0.0
    %4635 = vmatpush2.msra.mxu0 0.0
    %4636 = vmatprep.subr.mxu0 0.0
    %4637 = vmatpush2.msra.mxu0 0.0
    %4638 = vmatprep.mubr.f32.mxu0 0.0
    %4639 = vmatmul.mubr.f32.gmra.mxu0 %v4550
    %v4640 = vpop.f32.mrf.mxu0
    %v4641 = vadd.f32 %v4572, %v4640
    %v4642 = vpop.f32.mrf.mxu0
    %4643 = vdwg.mxu0
    %vm4644 = vcmask 74752
    %4645 = vst.msk [vmem:[#allocation6] sm:$0x3] %vm4644, %v4641
    // Predicated region
    $region42: #{mytemplate_forward.1} parent=1 // pred_check
      _
    $region43: #{mytemplate_forward.1} parent=1 // pred_check_branch
      %4647 = sbr.rel (0) target = $region45
    $region44: #{mytemplate_forward.1} parent=1 // pred_region
      %s4649 = ssub.s32 32, 32
      %4650 = vsyncadd [#allocation5], %s4649
      %s4652 = sshll.u32 [#allocation6], 4
      %s4653 = int_to_ptr.vmem [resolvable:$true] %s4652
      %4655 = dma.vmem_to_hbm [thread:$0]  %s4653, 32, %s9, [#allocation5]
    $region45: #{mytemplate_forward.1} parent=1 // pred_fallthru
      _
    // Predicated region
    $region46: #{mytemplate_forward.1} parent=1 // pred_check
      _
    $region47: #{mytemplate_forward.1} parent=1 // pred_check_branch
      %4657 = sbr.rel (0) target = $region49
    $region48: #{mytemplate_forward.1} parent=1 // pred_region
      %4658 = dma.done [#allocation5], 32
    $region49: #{mytemplate_forward.1} parent=1 // pred_fallthru
      _
    %4659 = vsyncpa [#allocation4], 1
    %4660 = vsyncpa [#allocation5], 1

</llo_original>
